<compile_context>
chip_gen: v5e
topology: v5e:2x2
jax: 0.10.0
libtpu: 0.0.40
codegen_flags: <defaults>
</compile_context>

<pallas_src>
import functools
import math

import jax
import jax.numpy as jnp
from jax.experimental import pallas as pl
from jax.experimental.pallas import tpu as pltpu

LRELU_SLOPE = 0.1


# ----------------------------------------------------------------------------
# Fused Pallas kernel: the whole AuxiliaryFlow forward for one batch element.
# ----------------------------------------------------------------------------
def _aux_flow_kernel(x_ref, c_ref,
                     start_wb_ref, dil_w_ref, dil_b_ref,
                     rs_w_ref, rs_b_ref, out_w_ref, out_b_ref,
                     end_w_ref, end_b_ref,
                     logs_ref, z_ref,
                     xin_ref,
                     *, n_half, n_layers, dim, t_valid):
    f32 = jnp.float32
    t_pad = x_ref.shape[-1]
    lane = jax.lax.broadcasted_iota(jnp.int32, (1, t_pad), 1)
    valid = lane < t_valid

    c = c_ref[0]                      # (Cc, T_pad)
    x_flow = x_ref[0]                 # (1, T_pad), zero in the padded tail
    logs_all = jnp.zeros((1, t_pad), f32)

    # Conditioning rows of the fused MXU input are block/layer-invariant:
    # write them ONCE per kernel invocation (per batch element).
    xin_ref[2 * dim:, :] = c

    h = None
    out_idx = 0
    for nb in range(2 * n_half):
        padding_left = nb < n_half
        idx_in_half = nb if padding_left else nb - n_half
        if idx_in_half == 0:
            h = None                  # torch passes h=None at the start of each half
        out_h = idx_in_half < n_half - 1

        x_o = x_flow
        # start: Conv1d(1, D, 1) is pointwise in time, so it commutes with the
        # edge-replicated neighbour shift; apply it first, then shift the (D, T) tile.
        swb = start_wb_ref[nb]                              # (D, 2) = [w | b]
        xs = swb[:, 0:1] * x_o + swb[:, 1:2]                # (D, T)
        if padding_left:
            # x[t-1] with edge replication at t=0 (XLU rotate + iota mask)
            x = jnp.where(lane > 0, pltpu.roll(xs, shift=1, axis=1), xs)
        else:
            # x[t+1] with edge replication at t=T-1
            x = jnp.where(lane < t_valid - 1,
                          pltpu.roll(xs, shift=t_pad - 1, axis=1), xs)
        if h is not None:
            x = x + h

        skips = jnp.zeros((dim, t_pad), f32)
        for l in range(n_layers):
            d = 2 ** l
            i = nb * n_layers + l
            # Only the top 2D rows of the scratch change per layer; c rows stay put.
            if padding_left:
                # causal dilated tap: x[t-d], zero for t < d
                x_sh = jnp.where(lane >= d, pltpu.roll(x, shift=d, axis=1), 0.0)
                xin_ref[0:dim, :] = x_sh                    # matches [w0 | w1 | cond]
                xin_ref[dim:2 * dim, :] = x
            else:
                # anti-causal dilated tap: x[t+d], zero for t+d >= T
                x_sh = jnp.where(lane + d < t_valid,
                                 pltpu.roll(x, shift=(t_pad - d) % t_pad, axis=1), 0.0)
                xin_ref[0:dim, :] = x                       # matches [w0 | w1 | cond]
                xin_ref[dim:2 * dim, :] = x_sh
            # fused dilated + conditioning conv: one (2D, 2D+Cc) x (2D+Cc, T) MXU dot
            y = jnp.dot(dil_w_ref[i], xin_ref[...],
                        preferred_element_type=f32) + dil_b_ref[i]
            z = jnp.tanh(y[:dim]) * jax.nn.sigmoid(y[dim:])
            # fused residual + skip 1x1 convs (skip rows pre-scaled by sqrt(1/L) on host)
            rs = jnp.dot(rs_w_ref[i], z, preferred_element_type=f32) + rs_b_ref[i]
            x = x + rs[:dim]
            skips = skips + rs[dim:]

        act = jnp.where(skips >= 0, skips, LRELU_SLOPE * skips)     # leaky_relu(0.1)
        # end head (2, D) always; out head (D, D) only for out_h blocks.
        end_y = jnp.dot(end_w_ref[nb], act, preferred_element_type=f32) + end_b_ref[nb]
        if out_h:
            h = jnp.dot(out_w_ref[out_idx], act,
                        preferred_element_type=f32) + out_b_ref[out_idx]
            out_idx += 1
        else:
            h = None
        mu = end_y[0:1]
        # mask logs before exp so padded lanes never produce inf/NaN in the dead branch
        logs = jnp.where(valid, end_y[1:2], 0.0)
        logs_all = logs_all + logs
        x_flow = jnp.where(valid, x_o * jnp.exp(logs) + mu, 0.0)

    logs_ref[0] = logs_all
    z_ref[0] = x_flow


# ----------------------------------------------------------------------------
# Host-side weight packing (fuses per-layer matmuls / biases, stacks all blocks,
# folds skip_scale into the skip rows).
# ----------------------------------------------------------------------------
def _pack_params(params):
    left, right = params['left'], params['right']
    blocks = list(left) + list(right)
    n_half = len(left)
    L = blocks[0]['dil_w0'].shape[0]
    D = blocks[0]['out_w'].shape[0]
    skip_scale = math.sqrt(1.0 / L)

    start_wb = jnp.stack([jnp.concatenate([p['start_w'], p['start_b']], axis=1)
                          for p in blocks])                                  # (NB, D, 2)

    dil_w, dil_b, rs_w, rs_b = [], [], [], []
    for p in blocks:
        for l in range(L):
            dil_w.append(jnp.concatenate(
                [p['dil_w0'][l], p['dil_w1'][l], p['cond_w'][l]], axis=1))   # (2D, 2D+Cc)
            dil_b.append(p['dil_b'][l] + p['cond_b'][l])                     # (2D, 1)
            # skip_scale folded into the skip rows (leaky_relu input is a plain sum -> exact)
            rs_w.append(jnp.concatenate(
                [p['res_w'][l], p['skip_w'][l] * skip_scale], axis=0))       # (2D, D)
            rs_b.append(jnp.concatenate(
                [p['res_b'][l], p['skip_b'][l] * skip_scale], axis=0))       # (2D, 1)

    out_w, out_b, end_w, end_b = [], [], [], []
    for i, p in enumerate(blocks):
        out_h = (i % n_half) < n_half - 1
        if out_h:
            out_w.append(p['out_w'])                                         # (D, D)
            out_b.append(p['out_b'])                                         # (D, 1)
        end_w.append(p['end_w'])                                             # (2, D)
        end_b.append(p['end_b'])                                             # (2, 1)
    if not out_w:   # n_half == 1: no out_h blocks; keep a dummy slab (never read)
        out_w.append(jnp.zeros((D, D), jnp.float32))
        out_b.append(jnp.zeros((D, 1), jnp.float32))

    return (n_half, L, D, start_wb,
            jnp.stack(dil_w), jnp.stack(dil_b),
            jnp.stack(rs_w), jnp.stack(rs_b),
            jnp.stack(out_w), jnp.stack(out_b),
            jnp.stack(end_w), jnp.stack(end_b))


def auxiliary_flow_pallas(x, c, params):
    B, _, T = x.shape
    Cc = c.shape[1]
    (n_half, L, D, start_wb, dil_w, dil_b, rs_w, rs_b,
     out_w, out_b, end_w, end_b) = _pack_params(params)

    # Lane-dense time axis: pad to a multiple of 128 so stores are unmasked full-lane vst.
    T_pad = max(128, ((T + 127) // 128) * 128)
    if T_pad != T:
        xp = jnp.pad(x, ((0, 0), (0, 0), (0, T_pad - T)))
        cp = jnp.pad(c, ((0, 0), (0, 0), (0, T_pad - T)))
    else:
        xp, cp = x, c

    def batch_spec(shape):
        n = len(shape) - 1
        return pl.BlockSpec((1,) + tuple(shape[1:]), lambda b, n=n: (b,) + (0,) * n)

    def full_spec(shape):
        n = len(shape)
        return pl.BlockSpec(tuple(shape), lambda b, n=n: (0,) * n)

    weights = (start_wb, dil_w, dil_b, rs_w, rs_b, out_w, out_b, end_w, end_b)
    in_specs = [batch_spec(xp.shape), batch_spec(cp.shape)]
    in_specs += [full_spec(w.shape) for w in weights]
    out_specs = (batch_spec((B, 1, T_pad)), batch_spec((B, 1, T_pad)))
    out_shape = (jax.ShapeDtypeStruct((B, 1, T_pad), jnp.float32),
                 jax.ShapeDtypeStruct((B, 1, T_pad), jnp.float32))

    kernel = functools.partial(_aux_flow_kernel, n_half=n_half, n_layers=L,
                               dim=D, t_valid=T)

    logs_all, z = pl.pallas_call(
        kernel,
        grid=(B,),
        in_specs=in_specs,
        out_specs=out_specs,
        out_shape=out_shape,
        scratch_shapes=[pltpu.VMEM((2 * D + Cc, T_pad), jnp.float32)],
        compiler_params=pltpu.CompilerParams(
            dimension_semantics=("parallel",),
            vmem_limit_bytes=64 * 1024 * 1024),
    )(xp, cp, *weights)
    return logs_all[:, :, :T], z[:, :, :T]


# ----------------------------------------------------------------------------
# Pure-JAX reference (same math, no Pallas) used to verify the kernel.
# ----------------------------------------------------------------------------
def _conv1x1_ref(W, b, x):
    return jnp.einsum('oi,bit->bot', W, x) + b[None]


def arflow_block_ref(x, c, h, p, *, padding_left, out_h):
    B, _, T = x.shape
    D = p['out_w'].shape[0]
    L = p['dil_w0'].shape[0]
    x_o = x
    if padding_left:
        x = jnp.concatenate([x[:, :, :1], x[:, :, :-1]], axis=-1)
    else:
        x = jnp.concatenate([x[:, :, 1:], x[:, :, -1:]], axis=-1)
    x = _conv1x1_ref(p['start_w'], p['start_b'], x) + h
    skips = jnp.zeros((B, D, T), jnp.float32)
    for l in range(L):
        d = 2 ** l
        if padding_left:
            x_sh = (jnp.concatenate([jnp.zeros((B, D, d)), x[:, :, :T - d]], axis=-1)
                    if d < T else jnp.zeros_like(x))
            y = (jnp.einsum('oi,bit->bot', p['dil_w0'][l], x_sh)
                 + jnp.einsum('oi,bit->bot', p['dil_w1'][l], x))
        else:
            x_sh = (jnp.concatenate([x[:, :, d:], jnp.zeros((B, D, d))], axis=-1)
                    if d < T else jnp.zeros_like(x))
            y = (jnp.einsum('oi,bit->bot', p['dil_w0'][l], x)
                 + jnp.einsum('oi,bit->bot', p['dil_w1'][l], x_sh))
        y = y + p['dil_b'][l][None]
        y = y + jnp.einsum('oi,bit->bot', p['cond_w'][l], c) + p['cond_b'][l][None]
        a, g = y[:, :D], y[:, D:]
        z = jnp.tanh(a) * jax.nn.sigmoid(g)
        x = x + jnp.einsum('oi,bit->bot', p['res_w'][l], z) + p['res_b'][l][None]
        skips = skips + jnp.einsum('oi,bit->bot', p['skip_w'][l], z) + p['skip_b'][l][None]
    skips = skips * math.sqrt(1.0 / L)
    act = jnp.where(skips >= 0, skips, LRELU_SLOPE * skips)
    h_out = (_conv1x1_ref(p['out_w'], p['out_b'], act) if out_h
             else jnp.zeros((B, D, T), jnp.float32))
    end = _conv1x1_ref(p['end_w'], p['end_b'], act)
    mu, logs = end[:, 0:1], end[:, 1:2]
    return logs, x_o * jnp.exp(logs) + mu, h_out


def auxiliary_flow_ref(x, c, params):
    B, _, T = x.shape
    D = params['left'][0]['out_w'].shape[0]
    n_half = len(params['left'])
    logs_all = jnp.zeros_like(x)
    h = jnp.zeros((B, D, T), jnp.float32)
    for i, p in enumerate(params['left']):
        logs, x, h = arflow_block_ref(x, c, h, p, padding_left=True,
                                      out_h=(i < n_half - 1))
        logs_all = logs_all + logs
    h = jnp.zeros((B, D, T), jnp.float32)
    for i, p in enumerate(params['right']):
        logs, x, h = arflow_block_ref(x, c, h, p, padding_left=False,
                                      out_h=(i < n_half - 1))
        logs_all = logs_all + logs
    return logs_all, x


# ----------------------------------------------------------------------------
# Deterministic synthetic parameter init (shapes follow the torch __init__).
# ----------------------------------------------------------------------------
def init_arflow_params(key, D, L, Cc):
    ks = jax.random.split(key, 15)

    def w(k, shape, scale):
        return jax.random.normal(k, shape, jnp.float32) * scale

    return dict(
        start_w=w(ks[0], (D, 1), 0.5),
        start_b=w(ks[1], (D, 1), 0.1),
        dil_w0=w(ks[2], (L, 2 * D, D), 1.0 / math.sqrt(2 * D)),
        dil_w1=w(ks[3], (L, 2 * D, D), 1.0 / math.sqrt(2 * D)),
        dil_b=w(ks[4], (L, 2 * D, 1), 0.1),
        cond_w=w(ks[5], (L, 2 * D, Cc), 1.0 / math.sqrt(Cc)),
        cond_b=w(ks[6], (L, 2 * D, 1), 0.1),
        res_w=w(ks[7], (L, D, D), 1.0 / math.sqrt(D)),
        res_b=w(ks[8], (L, D, 1), 0.1),
        skip_w=w(ks[9], (L, D, D), 1.0 / math.sqrt(D)),
        skip_b=w(ks[10], (L, D, 1), 0.1),
        out_w=w(ks[11], (D, D), 1.0 / math.sqrt(D)),
        out_b=w(ks[12], (D, 1), 0.1),
        # torch zero-inits the `end` conv; small non-zero values are used here so the
        # affine-flow path (exp(logs)*x + mu) is actually exercised.
        end_w=w(ks[13], (2, D), 0.01),
        end_b=w(ks[14], (2, 1), 0.01),
    )


if __name__ == "__main__":
    B, T = 2, 16            # batch, time
    DIM = 8                 # residual channels ("dim")
    LAYERS = 4              # AuxiliaryFlow(layers=4): 2 left + 2 right blocks, 4 WN layers each
    COND = 8                # condition_channel

    key = jax.random.PRNGKey(0)
    kx, kc, kp = jax.random.split(key, 3)
    x = jax.random.normal(kx, (B, 1, T), jnp.float32)
    c = jax.random.normal(kc, (B, COND, T), jnp.float32)

    n_half = LAYERS // 2
    pkeys = jax.random.split(kp, 2 * n_half)
    params = {
        'left': [init_arflow_params(pkeys[i], DIM, LAYERS, COND) for i in range(n_half)],
        'right': [init_arflow_params(pkeys[n_half + i], DIM, LAYERS, COND)
                  for i in range(n_half)],
    }

    logs_all, z = auxiliary_flow_pallas(x, c, params)
    jax.block_until_ready((logs_all, z))

    logs_ref, z_ref = auxiliary_flow_ref(x, c, params)
    assert logs_all.shape == (B, 1, T) and z.shape == (B, 1, T)
    assert jnp.allclose(logs_all, logs_ref, atol=1e-4, rtol=1e-4), "logs mismatch vs reference"
    assert jnp.allclose(z, z_ref, atol=1e-4, rtol=1e-4), "z mismatch vs reference"
    print("KERNEL_OK")
</pallas_src>

<mosaic_0001>
module attributes {stable_mosaic.version = 11 : i64} {
  func.func @_aux_flow_kernel(%arg0: i32, %arg1: memref<1x1x128xf32, #tpu.memory_space<vmem>>, %arg2: memref<1x8x128xf32, #tpu.memory_space<vmem>>, %arg3: memref<4x8x2xf32, #tpu.memory_space<vmem>>, %arg4: memref<16x16x24xf32, #tpu.memory_space<vmem>>, %arg5: memref<16x16x1xf32, #tpu.memory_space<vmem>>, %arg6: memref<16x16x8xf32, #tpu.memory_space<vmem>>, %arg7: memref<16x16x1xf32, #tpu.memory_space<vmem>>, %arg8: memref<2x8x8xf32, #tpu.memory_space<vmem>>, %arg9: memref<2x8x1xf32, #tpu.memory_space<vmem>>, %arg10: memref<4x2x8xf32, #tpu.memory_space<vmem>>, %arg11: memref<4x2x1xf32, #tpu.memory_space<vmem>>, %arg12: memref<1x1x128xf32, #tpu.memory_space<vmem>>, %arg13: memref<1x1x128xf32, #tpu.memory_space<vmem>>, %arg14: memref<24x128xf32, #tpu.memory_space<vmem>>) attributes {dimension_semantics = [#tpu.dimension_semantics<parallel>], iteration_bounds = array<i64: 2>, scalar_prefetch = 0 : i64, scratch_operands = 1 : i64, tpu.core_type = #tpu.core_type<tc>, window_params = [{transform_indices = @transform_0, window_bounds = array<i64: 1, 1, 128>}, {transform_indices = @transform_1, window_bounds = array<i64: 1, 8, 128>}, {pipeline_mode = #tpu.pipeline_mode<synchronous>, transform_indices = @transform_2, window_bounds = array<i64: 4, 8, 2>}, {pipeline_mode = #tpu.pipeline_mode<synchronous>, transform_indices = @transform_3, window_bounds = array<i64: 16, 16, 24>}, {pipeline_mode = #tpu.pipeline_mode<synchronous>, transform_indices = @transform_4, window_bounds = array<i64: 16, 16, 1>}, {pipeline_mode = #tpu.pipeline_mode<synchronous>, transform_indices = @transform_5, window_bounds = array<i64: 16, 16, 8>}, {pipeline_mode = #tpu.pipeline_mode<synchronous>, transform_indices = @transform_6, window_bounds = array<i64: 16, 16, 1>}, {pipeline_mode = #tpu.pipeline_mode<synchronous>, transform_indices = @transform_7, window_bounds = array<i64: 2, 8, 8>}, {pipeline_mode = #tpu.pipeline_mode<synchronous>, transform_indices = @transform_8, window_bounds = array<i64: 2, 8, 1>}, {pipeline_mode = #tpu.pipeline_mode<synchronous>, transform_indices = @transform_9, window_bounds = array<i64: 4, 2, 8>}, {pipeline_mode = #tpu.pipeline_mode<synchronous>, transform_indices = @transform_10, window_bounds = array<i64: 4, 2, 1>}, {transform_indices = @transform_11, window_bounds = array<i64: 1, 1, 128>}, {transform_indices = @transform_12, window_bounds = array<i64: 1, 1, 128>}]} {
    %0 = tpu.iota {dimensions = array<i32: 1>} : vector<1x128xi32>
    %c16_i32 = arith.constant 16 : i32
    %1 = vector.broadcast %c16_i32 : i32 to vector<1x128xi32>
    %2 = arith.cmpi slt, %0, %1 : vector<1x128xi32>
    %c0 = arith.constant 0 : index
    %c0_0 = arith.constant 0 : index
    %c0_1 = arith.constant 0 : index
    %3 = vector.load %arg2[%c0, %c0_0, %c0_1] : memref<1x8x128xf32, #tpu.memory_space<vmem>>, vector<1x8x128xf32>
    %4 = vector.shape_cast %3 : vector<1x8x128xf32> to vector<8x128xf32>
    %c0_2 = arith.constant 0 : index
    %c0_3 = arith.constant 0 : index
    %c0_4 = arith.constant 0 : index
    %5 = vector.load %arg1[%c0_2, %c0_3, %c0_4] : memref<1x1x128xf32, #tpu.memory_space<vmem>>, vector<1x1x128xf32>
    %6 = vector.shape_cast %5 : vector<1x1x128xf32> to vector<1x128xf32>
    %cst = arith.constant 0.000000e+00 : f32
    %7 = vector.broadcast %cst : f32 to vector<1x128xf32>
    %c16 = arith.constant 16 : index
    %c0_5 = arith.constant 0 : index
    %8 = vector.load %arg14[%c16, %c0_5] : memref<24x128xf32, #tpu.memory_space<vmem>>, vector<8x128xf32>
    tpu.vector_store %arg14[%c16, %c0_5], %4 {strides = array<i32>} : memref<24x128xf32, #tpu.memory_space<vmem>>, vector<8x128xf32>,
    %c0_6 = arith.constant 0 : index
    %c0_7 = arith.constant 0 : index
    %c0_8 = arith.constant 0 : index
    %9 = vector.load %arg3[%c0_6, %c0_7, %c0_8] : memref<4x8x2xf32, #tpu.memory_space<vmem>>, vector<1x8x2xf32>
    %10 = vector.shape_cast %9 : vector<1x8x2xf32> to vector<8x2xf32>
    %11 = vector.extract_strided_slice %10 {offsets = [0, 0], sizes = [8, 1], strides = [1, 1]} : vector<8x2xf32> to vector<8x1xf32>
    %12 = vector.broadcast %11 : vector<8x1xf32> to vector<8x128xf32>
    %13 = vector.broadcast %6 : vector<1x128xf32> to vector<8x128xf32>
    %14 = arith.mulf %12, %13 : vector<8x128xf32>
    %15 = vector.extract_strided_slice %10 {offsets = [0, 1], sizes = [8, 1], strides = [1, 1]} : vector<8x2xf32> to vector<8x1xf32>
    %16 = vector.broadcast %15 : vector<8x1xf32> to vector<8x128xf32>
    %17 = arith.addf %14, %16 : vector<8x128xf32>
    %c0_i32 = arith.constant 0 : i32
    %18 = vector.broadcast %c0_i32 : i32 to vector<1x128xi32>
    %19 = arith.cmpi sgt, %0, %18 : vector<1x128xi32>
    %c1_i32 = arith.constant 1 : i32
    %20 = tpu.dynamic_rotate %17 by %c1_i32 dim 1 : vector<8x128xf32>, i32 -> vector<8x128xf32>
    %21 = vector.shape_cast %19 : vector<1x128xi1> to vector<1x128xi1>
    %22 = vector.broadcast %21 : vector<1x128xi1> to vector<8x128xi1>
    %23 = arith.select %22, %20, %17 : vector<8x128xi1>, vector<8x128xf32>
    %cst_9 = arith.constant 0.000000e+00 : f32
    %24 = vector.broadcast %cst_9 : f32 to vector<8x128xf32>
    %c1_i32_10 = arith.constant 1 : i32
    %25 = vector.broadcast %c1_i32_10 : i32 to vector<1x128xi32>
    %26 = arith.cmpi sge, %0, %25 : vector<1x128xi32>
    %c1_i32_11 = arith.constant 1 : i32
    %27 = tpu.dynamic_rotate %23 by %c1_i32_11 dim 1 : vector<8x128xf32>, i32 -> vector<8x128xf32>
    %cst_12 = arith.constant 0.000000e+00 : f32
    %28 = vector.shape_cast %26 : vector<1x128xi1> to vector<1x128xi1>
    %29 = vector.broadcast %28 : vector<1x128xi1> to vector<8x128xi1>
    %30 = vector.broadcast %cst_12 : f32 to vector<8x128xf32>
    %31 = arith.select %29, %27, %30 : vector<8x128xi1>, vector<8x128xf32>
    %c0_13 = arith.constant 0 : index
    %c0_14 = arith.constant 0 : index
    %32 = vector.load %arg14[%c0_13, %c0_14] : memref<24x128xf32, #tpu.memory_space<vmem>>, vector<8x128xf32>
    tpu.vector_store %arg14[%c0_13, %c0_14], %31 {strides = array<i32>} : memref<24x128xf32, #tpu.memory_space<vmem>>, vector<8x128xf32>,
    %c8 = arith.constant 8 : index
    %c0_15 = arith.constant 0 : index
    %33 = vector.load %arg14[%c8, %c0_15] : memref<24x128xf32, #tpu.memory_space<vmem>>, vector<8x128xf32>
    tpu.vector_store %arg14[%c8, %c0_15], %23 {strides = array<i32>} : memref<24x128xf32, #tpu.memory_space<vmem>>, vector<8x128xf32>,
    %c0_16 = arith.constant 0 : index
    %c0_17 = arith.constant 0 : index
    %c0_18 = arith.constant 0 : index
    %34 = vector.load %arg4[%c0_16, %c0_17, %c0_18] : memref<16x16x24xf32, #tpu.memory_space<vmem>>, vector<1x16x24xf32>
    %35 = vector.shape_cast %34 : vector<1x16x24xf32> to vector<16x24xf32>
    %c0_19 = arith.constant 0 : index
    %c0_20 = arith.constant 0 : index
    %36 = vector.load %arg14[%c0_19, %c0_20] : memref<24x128xf32, #tpu.memory_space<vmem>>, vector<24x128xf32>
    %cst_21 = arith.constant dense<0.000000e+00> : vector<16x128xf32>
    %37 = tpu.matmul %35, %36, %cst_21 {dimension_numbers = #tpu.dot_dimension_numbers<[1], [0], [0], [1], [0, 0, 1, 1], [], []>} : vector<16x24xf32>, vector<24x128xf32>, vector<16x128xf32> -> vector<16x128xf32>
    %c0_22 = arith.constant 0 : index
    %c0_23 = arith.constant 0 : index
    %c0_24 = arith.constant 0 : index
    %38 = vector.load %arg5[%c0_22, %c0_23, %c0_24] : memref<16x16x1xf32, #tpu.memory_space<vmem>>, vector<1x16x1xf32>
    %39 = vector.shape_cast %38 : vector<1x16x1xf32> to vector<16x1xf32>
    %40 = vector.broadcast %39 : vector<16x1xf32> to vector<16x128xf32>
    %41 = arith.addf %37, %40 : vector<16x128xf32>
    %42 = vector.extract_strided_slice %41 {offsets = [0, 0], sizes = [8, 128], strides = [1, 1]} : vector<16x128xf32> to vector<8x128xf32>
    %43 = math.tanh %42 : vector<8x128xf32>
    %44 = vector.extract_strided_slice %41 {offsets = [8, 0], sizes = [8, 128], strides = [1, 1]} : vector<16x128xf32> to vector<8x128xf32>
    %45 = arith.negf %44 : vector<8x128xf32>
    %46 = math.exp %45 : vector<8x128xf32>
    %cst_25 = arith.constant 1.000000e+00 : f32
    %47 = vector.broadcast %cst_25 : f32 to vector<8x128xf32>
    %48 = arith.addf %47, %46 : vector<8x128xf32>
    %49 = arith.divf %47, %48 : vector<8x128xf32>
    %50 = arith.mulf %43, %49 : vector<8x128xf32>
    %c0_26 = arith.constant 0 : index
    %c0_27 = arith.constant 0 : index
    %c0_28 = arith.constant 0 : index
    %51 = vector.load %arg6[%c0_26, %c0_27, %c0_28] : memref<16x16x8xf32, #tpu.memory_space<vmem>>, vector<1x16x8xf32>
    %52 = vector.shape_cast %51 : vector<1x16x8xf32> to vector<16x8xf32>
    %cst_29 = arith.constant dense<0.000000e+00> : vector<16x128xf32>
    %53 = tpu.matmul %52, %50, %cst_29 {dimension_numbers = #tpu.dot_dimension_numbers<[1], [0], [0], [1], [0, 0, 1, 1], [], []>} : vector<16x8xf32>, vector<8x128xf32>, vector<16x128xf32> -> vector<16x128xf32>
    %c0_30 = arith.constant 0 : index
    %c0_31 = arith.constant 0 : index
    %c0_32 = arith.constant 0 : index
    %54 = vector.load %arg7[%c0_30, %c0_31, %c0_32] : memref<16x16x1xf32, #tpu.memory_space<vmem>>, vector<1x16x1xf32>
    %55 = vector.shape_cast %54 : vector<1x16x1xf32> to vector<16x1xf32>
    %56 = vector.broadcast %55 : vector<16x1xf32> to vector<16x128xf32>
    %57 = arith.addf %53, %56 : vector<16x128xf32>
    %58 = vector.extract_strided_slice %57 {offsets = [0, 0], sizes = [8, 128], strides = [1, 1]} : vector<16x128xf32> to vector<8x128xf32>
    %59 = arith.addf %23, %58 : vector<8x128xf32>
    %60 = vector.extract_strided_slice %57 {offsets = [8, 0], sizes = [8, 128], strides = [1, 1]} : vector<16x128xf32> to vector<8x128xf32>
    %61 = arith.addf %24, %60 : vector<8x128xf32>
    %c2_i32 = arith.constant 2 : i32
    %62 = vector.broadcast %c2_i32 : i32 to vector<1x128xi32>
    %63 = arith.cmpi sge, %0, %62 : vector<1x128xi32>
    %c2_i32_33 = arith.constant 2 : i32
    %64 = tpu.dynamic_rotate %59 by %c2_i32_33 dim 1 : vector<8x128xf32>, i32 -> vector<8x128xf32>
    %cst_34 = arith.constant 0.000000e+00 : f32
    %65 = vector.shape_cast %63 : vector<1x128xi1> to vector<1x128xi1>
    %66 = vector.broadcast %65 : vector<1x128xi1> to vector<8x128xi1>
    %67 = vector.broadcast %cst_34 : f32 to vector<8x128xf32>
    %68 = arith.select %66, %64, %67 : vector<8x128xi1>, vector<8x128xf32>
    %c0_35 = arith.constant 0 : index
    %c0_36 = arith.constant 0 : index
    %69 = vector.load %arg14[%c0_35, %c0_36] : memref<24x128xf32, #tpu.memory_space<vmem>>, vector<8x128xf32>
    tpu.vector_store %arg14[%c0_35, %c0_36], %68 {strides = array<i32>} : memref<24x128xf32, #tpu.memory_space<vmem>>, vector<8x128xf32>,
    %c8_37 = arith.constant 8 : index
    %c0_38 = arith.constant 0 : index
    %70 = vector.load %arg14[%c8_37, %c0_38] : memref<24x128xf32, #tpu.memory_space<vmem>>, vector<8x128xf32>
    tpu.vector_store %arg14[%c8_37, %c0_38], %59 {strides = array<i32>} : memref<24x128xf32, #tpu.memory_space<vmem>>, vector<8x128xf32>,
    %c1 = arith.constant 1 : index
    %c0_39 = arith.constant 0 : index
    %c0_40 = arith.constant 0 : index
    %71 = vector.load %arg4[%c1, %c0_39, %c0_40] : memref<16x16x24xf32, #tpu.memory_space<vmem>>, vector<1x16x24xf32>
    %72 = vector.shape_cast %71 : vector<1x16x24xf32> to vector<16x24xf32>
    %c0_41 = arith.constant 0 : index
    %c0_42 = arith.constant 0 : index
    %73 = vector.load %arg14[%c0_41, %c0_42] : memref<24x128xf32, #tpu.memory_space<vmem>>, vector<24x128xf32>
    %cst_43 = arith.constant dense<0.000000e+00> : vector<16x128xf32>
    %74 = tpu.matmul %72, %73, %cst_43 {dimension_numbers = #tpu.dot_dimension_numbers<[1], [0], [0], [1], [0, 0, 1, 1], [], []>} : vector<16x24xf32>, vector<24x128xf32>, vector<16x128xf32> -> vector<16x128xf32>
    %c1_44 = arith.constant 1 : index
    %c0_45 = arith.constant 0 : index
    %c0_46 = arith.constant 0 : index
    %75 = vector.load %arg5[%c1_44, %c0_45, %c0_46] : memref<16x16x1xf32, #tpu.memory_space<vmem>>, vector<1x16x1xf32>
    %76 = vector.shape_cast %75 : vector<1x16x1xf32> to vector<16x1xf32>
    %77 = vector.broadcast %76 : vector<16x1xf32> to vector<16x128xf32>
    %78 = arith.addf %74, %77 : vector<16x128xf32>
    %79 = vector.extract_strided_slice %78 {offsets = [0, 0], sizes = [8, 128], strides = [1, 1]} : vector<16x128xf32> to vector<8x128xf32>
    %80 = math.tanh %79 : vector<8x128xf32>
    %81 = vector.extract_strided_slice %78 {offsets = [8, 0], sizes = [8, 128], strides = [1, 1]} : vector<16x128xf32> to vector<8x128xf32>
    %82 = arith.negf %81 : vector<8x128xf32>
    %83 = math.exp %82 : vector<8x128xf32>
    %cst_47 = arith.constant 1.000000e+00 : f32
    %84 = vector.broadcast %cst_47 : f32 to vector<8x128xf32>
    %85 = arith.addf %84, %83 : vector<8x128xf32>
    %86 = arith.divf %84, %85 : vector<8x128xf32>
    %87 = arith.mulf %80, %86 : vector<8x128xf32>
    %c1_48 = arith.constant 1 : index
    %c0_49 = arith.constant 0 : index
    %c0_50 = arith.constant 0 : index
    %88 = vector.load %arg6[%c1_48, %c0_49, %c0_50] : memref<16x16x8xf32, #tpu.memory_space<vmem>>, vector<1x16x8xf32>
    %89 = vector.shape_cast %88 : vector<1x16x8xf32> to vector<16x8xf32>
    %cst_51 = arith.constant dense<0.000000e+00> : vector<16x128xf32>
    %90 = tpu.matmul %89, %87, %cst_51 {dimension_numbers = #tpu.dot_dimension_numbers<[1], [0], [0], [1], [0, 0, 1, 1], [], []>} : vector<16x8xf32>, vector<8x128xf32>, vector<16x128xf32> -> vector<16x128xf32>
    %c1_52 = arith.constant 1 : index
    %c0_53 = arith.constant 0 : index
    %c0_54 = arith.constant 0 : index
    %91 = vector.load %arg7[%c1_52, %c0_53, %c0_54] : memref<16x16x1xf32, #tpu.memory_space<vmem>>, vector<1x16x1xf32>
    %92 = vector.shape_cast %91 : vector<1x16x1xf32> to vector<16x1xf32>
    %93 = vector.broadcast %92 : vector<16x1xf32> to vector<16x128xf32>
    %94 = arith.addf %90, %93 : vector<16x128xf32>
    %95 = vector.extract_strided_slice %94 {offsets = [0, 0], sizes = [8, 128], strides = [1, 1]} : vector<16x128xf32> to vector<8x128xf32>
    %96 = arith.addf %59, %95 : vector<8x128xf32>
    %97 = vector.extract_strided_slice %94 {offsets = [8, 0], sizes = [8, 128], strides = [1, 1]} : vector<16x128xf32> to vector<8x128xf32>
    %98 = arith.addf %61, %97 : vector<8x128xf32>
    %c4_i32 = arith.constant 4 : i32
    %99 = vector.broadcast %c4_i32 : i32 to vector<1x128xi32>
    %100 = arith.cmpi sge, %0, %99 : vector<1x128xi32>
    %c4_i32_55 = arith.constant 4 : i32
    %101 = tpu.dynamic_rotate %96 by %c4_i32_55 dim 1 : vector<8x128xf32>, i32 -> vector<8x128xf32>
    %cst_56 = arith.constant 0.000000e+00 : f32
    %102 = vector.shape_cast %100 : vector<1x128xi1> to vector<1x128xi1>
    %103 = vector.broadcast %102 : vector<1x128xi1> to vector<8x128xi1>
    %104 = vector.broadcast %cst_56 : f32 to vector<8x128xf32>
    %105 = arith.select %103, %101, %104 : vector<8x128xi1>, vector<8x128xf32>
    %c0_57 = arith.constant 0 : index
    %c0_58 = arith.constant 0 : index
    %106 = vector.load %arg14[%c0_57, %c0_58] : memref<24x128xf32, #tpu.memory_space<vmem>>, vector<8x128xf32>
    tpu.vector_store %arg14[%c0_57, %c0_58], %105 {strides = array<i32>} : memref<24x128xf32, #tpu.memory_space<vmem>>, vector<8x128xf32>,
    %c8_59 = arith.constant 8 : index
    %c0_60 = arith.constant 0 : index
    %107 = vector.load %arg14[%c8_59, %c0_60] : memref<24x128xf32, #tpu.memory_space<vmem>>, vector<8x128xf32>
    tpu.vector_store %arg14[%c8_59, %c0_60], %96 {strides = array<i32>} : memref<24x128xf32, #tpu.memory_space<vmem>>, vector<8x128xf32>,
    %c2 = arith.constant 2 : index
    %c0_61 = arith.constant 0 : index
    %c0_62 = arith.constant 0 : index
    %108 = vector.load %arg4[%c2, %c0_61, %c0_62] : memref<16x16x24xf32, #tpu.memory_space<vmem>>, vector<1x16x24xf32>
    %109 = vector.shape_cast %108 : vector<1x16x24xf32> to vector<16x24xf32>
    %c0_63 = arith.constant 0 : index
    %c0_64 = arith.constant 0 : index
    %110 = vector.load %arg14[%c0_63, %c0_64] : memref<24x128xf32, #tpu.memory_space<vmem>>, vector<24x128xf32>
    %cst_65 = arith.constant dense<0.000000e+00> : vector<16x128xf32>
    %111 = tpu.matmul %109, %110, %cst_65 {dimension_numbers = #tpu.dot_dimension_numbers<[1], [0], [0], [1], [0, 0, 1, 1], [], []>} : vector<16x24xf32>, vector<24x128xf32>, vector<16x128xf32> -> vector<16x128xf32>
    %c2_66 = arith.constant 2 : index
    %c0_67 = arith.constant 0 : index
    %c0_68 = arith.constant 0 : index
    %112 = vector.load %arg5[%c2_66, %c0_67, %c0_68] : memref<16x16x1xf32, #tpu.memory_space<vmem>>, vector<1x16x1xf32>
    %113 = vector.shape_cast %112 : vector<1x16x1xf32> to vector<16x1xf32>
    %114 = vector.broadcast %113 : vector<16x1xf32> to vector<16x128xf32>
    %115 = arith.addf %111, %114 : vector<16x128xf32>
    %116 = vector.extract_strided_slice %115 {offsets = [0, 0], sizes = [8, 128], strides = [1, 1]} : vector<16x128xf32> to vector<8x128xf32>
    %117 = math.tanh %116 : vector<8x128xf32>
    %118 = vector.extract_strided_slice %115 {offsets = [8, 0], sizes = [8, 128], strides = [1, 1]} : vector<16x128xf32> to vector<8x128xf32>
    %119 = arith.negf %118 : vector<8x128xf32>
    %120 = math.exp %119 : vector<8x128xf32>
    %cst_69 = arith.constant 1.000000e+00 : f32
    %121 = vector.broadcast %cst_69 : f32 to vector<8x128xf32>
    %122 = arith.addf %121, %120 : vector<8x128xf32>
    %123 = arith.divf %121, %122 : vector<8x128xf32>
    %124 = arith.mulf %117, %123 : vector<8x128xf32>
    %c2_70 = arith.constant 2 : index
    %c0_71 = arith.constant 0 : index
    %c0_72 = arith.constant 0 : index
    %125 = vector.load %arg6[%c2_70, %c0_71, %c0_72] : memref<16x16x8xf32, #tpu.memory_space<vmem>>, vector<1x16x8xf32>
    %126 = vector.shape_cast %125 : vector<1x16x8xf32> to vector<16x8xf32>
    %cst_73 = arith.constant dense<0.000000e+00> : vector<16x128xf32>
    %127 = tpu.matmul %126, %124, %cst_73 {dimension_numbers = #tpu.dot_dimension_numbers<[1], [0], [0], [1], [0, 0, 1, 1], [], []>} : vector<16x8xf32>, vector<8x128xf32>, vector<16x128xf32> -> vector<16x128xf32>
    %c2_74 = arith.constant 2 : index
    %c0_75 = arith.constant 0 : index
    %c0_76 = arith.constant 0 : index
    %128 = vector.load %arg7[%c2_74, %c0_75, %c0_76] : memref<16x16x1xf32, #tpu.memory_space<vmem>>, vector<1x16x1xf32>
    %129 = vector.shape_cast %128 : vector<1x16x1xf32> to vector<16x1xf32>
    %130 = vector.broadcast %129 : vector<16x1xf32> to vector<16x128xf32>
    %131 = arith.addf %127, %130 : vector<16x128xf32>
    %132 = vector.extract_strided_slice %131 {offsets = [0, 0], sizes = [8, 128], strides = [1, 1]} : vector<16x128xf32> to vector<8x128xf32>
    %133 = arith.addf %96, %132 : vector<8x128xf32>
    %134 = vector.extract_strided_slice %131 {offsets = [8, 0], sizes = [8, 128], strides = [1, 1]} : vector<16x128xf32> to vector<8x128xf32>
    %135 = arith.addf %98, %134 : vector<8x128xf32>
    %c8_i32 = arith.constant 8 : i32
    %136 = vector.broadcast %c8_i32 : i32 to vector<1x128xi32>
    %137 = arith.cmpi sge, %0, %136 : vector<1x128xi32>
    %c8_i32_77 = arith.constant 8 : i32
    %138 = tpu.dynamic_rotate %133 by %c8_i32_77 dim 1 : vector<8x128xf32>, i32 -> vector<8x128xf32>
    %cst_78 = arith.constant 0.000000e+00 : f32
    %139 = vector.shape_cast %137 : vector<1x128xi1> to vector<1x128xi1>
    %140 = vector.broadcast %139 : vector<1x128xi1> to vector<8x128xi1>
    %141 = vector.broadcast %cst_78 : f32 to vector<8x128xf32>
    %142 = arith.select %140, %138, %141 : vector<8x128xi1>, vector<8x128xf32>
    %c0_79 = arith.constant 0 : index
    %c0_80 = arith.constant 0 : index
    %143 = vector.load %arg14[%c0_79, %c0_80] : memref<24x128xf32, #tpu.memory_space<vmem>>, vector<8x128xf32>
    tpu.vector_store %arg14[%c0_79, %c0_80], %142 {strides = array<i32>} : memref<24x128xf32, #tpu.memory_space<vmem>>, vector<8x128xf32>,
    %c8_81 = arith.constant 8 : index
    %c0_82 = arith.constant 0 : index
    %144 = vector.load %arg14[%c8_81, %c0_82] : memref<24x128xf32, #tpu.memory_space<vmem>>, vector<8x128xf32>
    tpu.vector_store %arg14[%c8_81, %c0_82], %133 {strides = array<i32>} : memref<24x128xf32, #tpu.memory_space<vmem>>, vector<8x128xf32>,
    %c3 = arith.constant 3 : index
    %c0_83 = arith.constant 0 : index
    %c0_84 = arith.constant 0 : index
    %145 = vector.load %arg4[%c3, %c0_83, %c0_84] : memref<16x16x24xf32, #tpu.memory_space<vmem>>, vector<1x16x24xf32>
    %146 = vector.shape_cast %145 : vector<1x16x24xf32> to vector<16x24xf32>
    %c0_85 = arith.constant 0 : index
    %c0_86 = arith.constant 0 : index
    %147 = vector.load %arg14[%c0_85, %c0_86] : memref<24x128xf32, #tpu.memory_space<vmem>>, vector<24x128xf32>
    %cst_87 = arith.constant dense<0.000000e+00> : vector<16x128xf32>
    %148 = tpu.matmul %146, %147, %cst_87 {dimension_numbers = #tpu.dot_dimension_numbers<[1], [0], [0], [1], [0, 0, 1, 1], [], []>} : vector<16x24xf32>, vector<24x128xf32>, vector<16x128xf32> -> vector<16x128xf32>
    %c3_88 = arith.constant 3 : index
    %c0_89 = arith.constant 0 : index
    %c0_90 = arith.constant 0 : index
    %149 = vector.load %arg5[%c3_88, %c0_89, %c0_90] : memref<16x16x1xf32, #tpu.memory_space<vmem>>, vector<1x16x1xf32>
    %150 = vector.shape_cast %149 : vector<1x16x1xf32> to vector<16x1xf32>
    %151 = vector.broadcast %150 : vector<16x1xf32> to vector<16x128xf32>
    %152 = arith.addf %148, %151 : vector<16x128xf32>
    %153 = vector.extract_strided_slice %152 {offsets = [0, 0], sizes = [8, 128], strides = [1, 1]} : vector<16x128xf32> to vector<8x128xf32>
    %154 = math.tanh %153 : vector<8x128xf32>
    %155 = vector.extract_strided_slice %152 {offsets = [8, 0], sizes = [8, 128], strides = [1, 1]} : vector<16x128xf32> to vector<8x128xf32>
    %156 = arith.negf %155 : vector<8x128xf32>
    %157 = math.exp %156 : vector<8x128xf32>
    %cst_91 = arith.constant 1.000000e+00 : f32
    %158 = vector.broadcast %cst_91 : f32 to vector<8x128xf32>
    %159 = arith.addf %158, %157 : vector<8x128xf32>
    %160 = arith.divf %158, %159 : vector<8x128xf32>
    %161 = arith.mulf %154, %160 : vector<8x128xf32>
    %c3_92 = arith.constant 3 : index
    %c0_93 = arith.constant 0 : index
    %c0_94 = arith.constant 0 : index
    %162 = vector.load %arg6[%c3_92, %c0_93, %c0_94] : memref<16x16x8xf32, #tpu.memory_space<vmem>>, vector<1x16x8xf32>
    %163 = vector.shape_cast %162 : vector<1x16x8xf32> to vector<16x8xf32>
    %cst_95 = arith.constant dense<0.000000e+00> : vector<16x128xf32>
    %164 = tpu.matmul %163, %161, %cst_95 {dimension_numbers = #tpu.dot_dimension_numbers<[1], [0], [0], [1], [0, 0, 1, 1], [], []>} : vector<16x8xf32>, vector<8x128xf32>, vector<16x128xf32> -> vector<16x128xf32>
    %c3_96 = arith.constant 3 : index
    %c0_97 = arith.constant 0 : index
    %c0_98 = arith.constant 0 : index
    %165 = vector.load %arg7[%c3_96, %c0_97, %c0_98] : memref<16x16x1xf32, #tpu.memory_space<vmem>>, vector<1x16x1xf32>
    %166 = vector.shape_cast %165 : vector<1x16x1xf32> to vector<16x1xf32>
    %167 = vector.broadcast %166 : vector<16x1xf32> to vector<16x128xf32>
    %168 = arith.addf %164, %167 : vector<16x128xf32>
    %169 = vector.extract_strided_slice %168 {offsets = [8, 0], sizes = [8, 128], strides = [1, 1]} : vector<16x128xf32> to vector<8x128xf32>
    %170 = arith.addf %135, %169 : vector<8x128xf32>
    %cst_99 = arith.constant 0.000000e+00 : f32
    %171 = vector.broadcast %cst_99 : f32 to vector<8x128xf32>
    %172 = arith.cmpf oge, %170, %171 : vector<8x128xf32>
    %cst_100 = arith.constant 1.000000e-01 : f32
    %173 = vector.broadcast %cst_100 : f32 to vector<8x128xf32>
    %174 = arith.mulf %173, %170 : vector<8x128xf32>
    %175 = arith.select %172, %170, %174 : vector<8x128xi1>, vector<8x128xf32>
    %c0_101 = arith.constant 0 : index
    %c0_102 = arith.constant 0 : index
    %c0_103 = arith.constant 0 : index
    %176 = vector.load %arg10[%c0_101, %c0_102, %c0_103] : memref<4x2x8xf32, #tpu.memory_space<vmem>>, vector<1x2x8xf32>
    %177 = vector.shape_cast %176 : vector<1x2x8xf32> to vector<2x8xf32>
    %cst_104 = arith.constant dense<0.000000e+00> : vector<2x128xf32>
    %178 = tpu.matmul %177, %175, %cst_104 {dimension_numbers = #tpu.dot_dimension_numbers<[1], [0], [0], [1], [0, 0, 1, 1], [], []>} : vector<2x8xf32>, vector<8x128xf32>, vector<2x128xf32> -> vector<2x128xf32>
    %c0_105 = arith.constant 0 : index
    %c0_106 = arith.constant 0 : index
    %c0_107 = arith.constant 0 : index
    %179 = vector.load %arg11[%c0_105, %c0_106, %c0_107] : memref<4x2x1xf32, #tpu.memory_space<vmem>>, vector<1x2x1xf32>
    %180 = vector.shape_cast %179 : vector<1x2x1xf32> to vector<2x1xf32>
    %181 = vector.broadcast %180 : vector<2x1xf32> to vector<2x128xf32>
    %182 = arith.addf %178, %181 : vector<2x128xf32>
    %c0_108 = arith.constant 0 : index
    %c0_109 = arith.constant 0 : index
    %c0_110 = arith.constant 0 : index
    %183 = vector.load %arg8[%c0_108, %c0_109, %c0_110] : memref<2x8x8xf32, #tpu.memory_space<vmem>>, vector<1x8x8xf32>
    %184 = vector.shape_cast %183 : vector<1x8x8xf32> to vector<8x8xf32>
    %cst_111 = arith.constant dense<0.000000e+00> : vector<8x128xf32>
    %185 = tpu.matmul %184, %175, %cst_111 {dimension_numbers = #tpu.dot_dimension_numbers<[1], [0], [0], [1], [0, 0, 1, 1], [], []>} : vector<8x8xf32>, vector<8x128xf32>, vector<8x128xf32> -> vector<8x128xf32>
    %c0_112 = arith.constant 0 : index
    %c0_113 = arith.constant 0 : index
    %c0_114 = arith.constant 0 : index
    %186 = vector.load %arg9[%c0_112, %c0_113, %c0_114] : memref<2x8x1xf32, #tpu.memory_space<vmem>>, vector<1x8x1xf32>
    %187 = vector.shape_cast %186 : vector<1x8x1xf32> to vector<8x1xf32>
    %188 = vector.broadcast %187 : vector<8x1xf32> to vector<8x128xf32>
    %189 = arith.addf %185, %188 : vector<8x128xf32>
    %190 = vector.extract_strided_slice %182 {offsets = [0, 0], sizes = [1, 128], strides = [1, 1]} : vector<2x128xf32> to vector<1x128xf32>
    %191 = vector.extract_strided_slice %182 {offsets = [1, 0], sizes = [1, 128], strides = [1, 1]} : vector<2x128xf32> to vector<1x128xf32>
    %cst_115 = arith.constant 0.000000e+00 : f32
    %192 = vector.broadcast %cst_115 : f32 to vector<1x128xf32>
    %193 = arith.select %2, %191, %192 : vector<1x128xi1>, vector<1x128xf32>
    %194 = arith.addf %7, %193 : vector<1x128xf32>
    %195 = math.exp %193 : vector<1x128xf32>
    %196 = arith.mulf %6, %195 : vector<1x128xf32>
    %197 = arith.addf %196, %190 : vector<1x128xf32>
    %cst_116 = arith.constant 0.000000e+00 : f32
    %198 = vector.broadcast %cst_116 : f32 to vector<1x128xf32>
    %199 = arith.select %2, %197, %198 : vector<1x128xi1>, vector<1x128xf32>
    %c1_117 = arith.constant 1 : index
    %c0_118 = arith.constant 0 : index
    %c0_119 = arith.constant 0 : index
    %200 = vector.load %arg3[%c1_117, %c0_118, %c0_119] : memref<4x8x2xf32, #tpu.memory_space<vmem>>, vector<1x8x2xf32>
    %201 = vector.shape_cast %200 : vector<1x8x2xf32> to vector<8x2xf32>
    %202 = vector.extract_strided_slice %201 {offsets = [0, 0], sizes = [8, 1], strides = [1, 1]} : vector<8x2xf32> to vector<8x1xf32>
    %203 = vector.broadcast %202 : vector<8x1xf32> to vector<8x128xf32>
    %204 = vector.broadcast %199 : vector<1x128xf32> to vector<8x128xf32>
    %205 = arith.mulf %203, %204 : vector<8x128xf32>
    %206 = vector.extract_strided_slice %201 {offsets = [0, 1], sizes = [8, 1], strides = [1, 1]} : vector<8x2xf32> to vector<8x1xf32>
    %207 = vector.broadcast %206 : vector<8x1xf32> to vector<8x128xf32>
    %208 = arith.addf %205, %207 : vector<8x128xf32>
    %c0_i32_120 = arith.constant 0 : i32
    %209 = vector.broadcast %c0_i32_120 : i32 to vector<1x128xi32>
    %210 = arith.cmpi sgt, %0, %209 : vector<1x128xi32>
    %c1_i32_121 = arith.constant 1 : i32
    %211 = tpu.dynamic_rotate %208 by %c1_i32_121 dim 1 : vector<8x128xf32>, i32 -> vector<8x128xf32>
    %212 = vector.shape_cast %210 : vector<1x128xi1> to vector<1x128xi1>
    %213 = vector.broadcast %212 : vector<1x128xi1> to vector<8x128xi1>
    %214 = arith.select %213, %211, %208 : vector<8x128xi1>, vector<8x128xf32>
    %215 = arith.addf %214, %189 : vector<8x128xf32>
    %cst_122 = arith.constant 0.000000e+00 : f32
    %216 = vector.broadcast %cst_122 : f32 to vector<8x128xf32>
    %c1_i32_123 = arith.constant 1 : i32
    %217 = vector.broadcast %c1_i32_123 : i32 to vector<1x128xi32>
    %218 = arith.cmpi sge, %0, %217 : vector<1x128xi32>
    %c1_i32_124 = arith.constant 1 : i32
    %219 = tpu.dynamic_rotate %215 by %c1_i32_124 dim 1 : vector<8x128xf32>, i32 -> vector<8x128xf32>
    %cst_125 = arith.constant 0.000000e+00 : f32
    %220 = vector.shape_cast %218 : vector<1x128xi1> to vector<1x128xi1>
    %221 = vector.broadcast %220 : vector<1x128xi1> to vector<8x128xi1>
    %222 = vector.broadcast %cst_125 : f32 to vector<8x128xf32>
    %223 = arith.select %221, %219, %222 : vector<8x128xi1>, vector<8x128xf32>
    %c0_126 = arith.constant 0 : index
    %c0_127 = arith.constant 0 : index
    %224 = vector.load %arg14[%c0_126, %c0_127] : memref<24x128xf32, #tpu.memory_space<vmem>>, vector<8x128xf32>
    tpu.vector_store %arg14[%c0_126, %c0_127], %223 {strides = array<i32>} : memref<24x128xf32, #tpu.memory_space<vmem>>, vector<8x128xf32>,
    %c8_128 = arith.constant 8 : index
    %c0_129 = arith.constant 0 : index
    %225 = vector.load %arg14[%c8_128, %c0_129] : memref<24x128xf32, #tpu.memory_space<vmem>>, vector<8x128xf32>
    tpu.vector_store %arg14[%c8_128, %c0_129], %215 {strides = array<i32>} : memref<24x128xf32, #tpu.memory_space<vmem>>, vector<8x128xf32>,
    %c4 = arith.constant 4 : index
    %c0_130 = arith.constant 0 : index
    %c0_131 = arith.constant 0 : index
    %226 = vector.load %arg4[%c4, %c0_130, %c0_131] : memref<16x16x24xf32, #tpu.memory_space<vmem>>, vector<1x16x24xf32>
    %227 = vector.shape_cast %226 : vector<1x16x24xf32> to vector<16x24xf32>
    %c0_132 = arith.constant 0 : index
    %c0_133 = arith.constant 0 : index
    %228 = vector.load %arg14[%c0_132, %c0_133] : memref<24x128xf32, #tpu.memory_space<vmem>>, vector<24x128xf32>
    %cst_134 = arith.constant dense<0.000000e+00> : vector<16x128xf32>
    %229 = tpu.matmul %227, %228, %cst_134 {dimension_numbers = #tpu.dot_dimension_numbers<[1], [0], [0], [1], [0, 0, 1, 1], [], []>} : vector<16x24xf32>, vector<24x128xf32>, vector<16x128xf32> -> vector<16x128xf32>
    %c4_135 = arith.constant 4 : index
    %c0_136 = arith.constant 0 : index
    %c0_137 = arith.constant 0 : index
    %230 = vector.load %arg5[%c4_135, %c0_136, %c0_137] : memref<16x16x1xf32, #tpu.memory_space<vmem>>, vector<1x16x1xf32>
    %231 = vector.shape_cast %230 : vector<1x16x1xf32> to vector<16x1xf32>
    %232 = vector.broadcast %231 : vector<16x1xf32> to vector<16x128xf32>
    %233 = arith.addf %229, %232 : vector<16x128xf32>
    %234 = vector.extract_strided_slice %233 {offsets = [0, 0], sizes = [8, 128], strides = [1, 1]} : vector<16x128xf32> to vector<8x128xf32>
    %235 = math.tanh %234 : vector<8x128xf32>
    %236 = vector.extract_strided_slice %233 {offsets = [8, 0], sizes = [8, 128], strides = [1, 1]} : vector<16x128xf32> to vector<8x128xf32>
    %237 = arith.negf %236 : vector<8x128xf32>
    %238 = math.exp %237 : vector<8x128xf32>
    %cst_138 = arith.constant 1.000000e+00 : f32
    %239 = vector.broadcast %cst_138 : f32 to vector<8x128xf32>
    %240 = arith.addf %239, %238 : vector<8x128xf32>
    %241 = arith.divf %239, %240 : vector<8x128xf32>
    %242 = arith.mulf %235, %241 : vector<8x128xf32>
    %c4_139 = arith.constant 4 : index
    %c0_140 = arith.constant 0 : index
    %c0_141 = arith.constant 0 : index
    %243 = vector.load %arg6[%c4_139, %c0_140, %c0_141] : memref<16x16x8xf32, #tpu.memory_space<vmem>>, vector<1x16x8xf32>
    %244 = vector.shape_cast %243 : vector<1x16x8xf32> to vector<16x8xf32>
    %cst_142 = arith.constant dense<0.000000e+00> : vector<16x128xf32>
    %245 = tpu.matmul %244, %242, %cst_142 {dimension_numbers = #tpu.dot_dimension_numbers<[1], [0], [0], [1], [0, 0, 1, 1], [], []>} : vector<16x8xf32>, vector<8x128xf32>, vector<16x128xf32> -> vector<16x128xf32>
    %c4_143 = arith.constant 4 : index
    %c0_144 = arith.constant 0 : index
    %c0_145 = arith.constant 0 : index
    %246 = vector.load %arg7[%c4_143, %c0_144, %c0_145] : memref<16x16x1xf32, #tpu.memory_space<vmem>>, vector<1x16x1xf32>
    %247 = vector.shape_cast %246 : vector<1x16x1xf32> to vector<16x1xf32>
    %248 = vector.broadcast %247 : vector<16x1xf32> to vector<16x128xf32>
    %249 = arith.addf %245, %248 : vector<16x128xf32>
    %250 = vector.extract_strided_slice %249 {offsets = [0, 0], sizes = [8, 128], strides = [1, 1]} : vector<16x128xf32> to vector<8x128xf32>
    %251 = arith.addf %215, %250 : vector<8x128xf32>
    %252 = vector.extract_strided_slice %249 {offsets = [8, 0], sizes = [8, 128], strides = [1, 1]} : vector<16x128xf32> to vector<8x128xf32>
    %253 = arith.addf %216, %252 : vector<8x128xf32>
    %c2_i32_146 = arith.constant 2 : i32
    %254 = vector.broadcast %c2_i32_146 : i32 to vector<1x128xi32>
    %255 = arith.cmpi sge, %0, %254 : vector<1x128xi32>
    %c2_i32_147 = arith.constant 2 : i32
    %256 = tpu.dynamic_rotate %251 by %c2_i32_147 dim 1 : vector<8x128xf32>, i32 -> vector<8x128xf32>
    %cst_148 = arith.constant 0.000000e+00 : f32
    %257 = vector.shape_cast %255 : vector<1x128xi1> to vector<1x128xi1>
    %258 = vector.broadcast %257 : vector<1x128xi1> to vector<8x128xi1>
    %259 = vector.broadcast %cst_148 : f32 to vector<8x128xf32>
    %260 = arith.select %258, %256, %259 : vector<8x128xi1>, vector<8x128xf32>
    %c0_149 = arith.constant 0 : index
    %c0_150 = arith.constant 0 : index
    %261 = vector.load %arg14[%c0_149, %c0_150] : memref<24x128xf32, #tpu.memory_space<vmem>>, vector<8x128xf32>
    tpu.vector_store %arg14[%c0_149, %c0_150], %260 {strides = array<i32>} : memref<24x128xf32, #tpu.memory_space<vmem>>, vector<8x128xf32>,
    %c8_151 = arith.constant 8 : index
    %c0_152 = arith.constant 0 : index
    %262 = vector.load %arg14[%c8_151, %c0_152] : memref<24x128xf32, #tpu.memory_space<vmem>>, vector<8x128xf32>
    tpu.vector_store %arg14[%c8_151, %c0_152], %251 {strides = array<i32>} : memref<24x128xf32, #tpu.memory_space<vmem>>, vector<8x128xf32>,
    %c5 = arith.constant 5 : index
    %c0_153 = arith.constant 0 : index
    %c0_154 = arith.constant 0 : index
    %263 = vector.load %arg4[%c5, %c0_153, %c0_154] : memref<16x16x24xf32, #tpu.memory_space<vmem>>, vector<1x16x24xf32>
    %264 = vector.shape_cast %263 : vector<1x16x24xf32> to vector<16x24xf32>
    %c0_155 = arith.constant 0 : index
    %c0_156 = arith.constant 0 : index
    %265 = vector.load %arg14[%c0_155, %c0_156] : memref<24x128xf32, #tpu.memory_space<vmem>>, vector<24x128xf32>
    %cst_157 = arith.constant dense<0.000000e+00> : vector<16x128xf32>
    %266 = tpu.matmul %264, %265, %cst_157 {dimension_numbers = #tpu.dot_dimension_numbers<[1], [0], [0], [1], [0, 0, 1, 1], [], []>} : vector<16x24xf32>, vector<24x128xf32>, vector<16x128xf32> -> vector<16x128xf32>
    %c5_158 = arith.constant 5 : index
    %c0_159 = arith.constant 0 : index
    %c0_160 = arith.constant 0 : index
    %267 = vector.load %arg5[%c5_158, %c0_159, %c0_160] : memref<16x16x1xf32, #tpu.memory_space<vmem>>, vector<1x16x1xf32>
    %268 = vector.shape_cast %267 : vector<1x16x1xf32> to vector<16x1xf32>
    %269 = vector.broadcast %268 : vector<16x1xf32> to vector<16x128xf32>
    %270 = arith.addf %266, %269 : vector<16x128xf32>
    %271 = vector.extract_strided_slice %270 {offsets = [0, 0], sizes = [8, 128], strides = [1, 1]} : vector<16x128xf32> to vector<8x128xf32>
    %272 = math.tanh %271 : vector<8x128xf32>
    %273 = vector.extract_strided_slice %270 {offsets = [8, 0], sizes = [8, 128], strides = [1, 1]} : vector<16x128xf32> to vector<8x128xf32>
    %274 = arith.negf %273 : vector<8x128xf32>
    %275 = math.exp %274 : vector<8x128xf32>
    %cst_161 = arith.constant 1.000000e+00 : f32
    %276 = vector.broadcast %cst_161 : f32 to vector<8x128xf32>
    %277 = arith.addf %276, %275 : vector<8x128xf32>
    %278 = arith.divf %276, %277 : vector<8x128xf32>
    %279 = arith.mulf %272, %278 : vector<8x128xf32>
    %c5_162 = arith.constant 5 : index
    %c0_163 = arith.constant 0 : index
    %c0_164 = arith.constant 0 : index
    %280 = vector.load %arg6[%c5_162, %c0_163, %c0_164] : memref<16x16x8xf32, #tpu.memory_space<vmem>>, vector<1x16x8xf32>
    %281 = vector.shape_cast %280 : vector<1x16x8xf32> to vector<16x8xf32>
    %cst_165 = arith.constant dense<0.000000e+00> : vector<16x128xf32>
    %282 = tpu.matmul %281, %279, %cst_165 {dimension_numbers = #tpu.dot_dimension_numbers<[1], [0], [0], [1], [0, 0, 1, 1], [], []>} : vector<16x8xf32>, vector<8x128xf32>, vector<16x128xf32> -> vector<16x128xf32>
    %c5_166 = arith.constant 5 : index
    %c0_167 = arith.constant 0 : index
    %c0_168 = arith.constant 0 : index
    %283 = vector.load %arg7[%c5_166, %c0_167, %c0_168] : memref<16x16x1xf32, #tpu.memory_space<vmem>>, vector<1x16x1xf32>
    %284 = vector.shape_cast %283 : vector<1x16x1xf32> to vector<16x1xf32>
    %285 = vector.broadcast %284 : vector<16x1xf32> to vector<16x128xf32>
    %286 = arith.addf %282, %285 : vector<16x128xf32>
    %287 = vector.extract_strided_slice %286 {offsets = [0, 0], sizes = [8, 128], strides = [1, 1]} : vector<16x128xf32> to vector<8x128xf32>
    %288 = arith.addf %251, %287 : vector<8x128xf32>
    %289 = vector.extract_strided_slice %286 {offsets = [8, 0], sizes = [8, 128], strides = [1, 1]} : vector<16x128xf32> to vector<8x128xf32>
    %290 = arith.addf %253, %289 : vector<8x128xf32>
    %c4_i32_169 = arith.constant 4 : i32
    %291 = vector.broadcast %c4_i32_169 : i32 to vector<1x128xi32>
    %292 = arith.cmpi sge, %0, %291 : vector<1x128xi32>
    %c4_i32_170 = arith.constant 4 : i32
    %293 = tpu.dynamic_rotate %288 by %c4_i32_170 dim 1 : vector<8x128xf32>, i32 -> vector<8x128xf32>
    %cst_171 = arith.constant 0.000000e+00 : f32
    %294 = vector.shape_cast %292 : vector<1x128xi1> to vector<1x128xi1>
    %295 = vector.broadcast %294 : vector<1x128xi1> to vector<8x128xi1>
    %296 = vector.broadcast %cst_171 : f32 to vector<8x128xf32>
    %297 = arith.select %295, %293, %296 : vector<8x128xi1>, vector<8x128xf32>
    %c0_172 = arith.constant 0 : index
    %c0_173 = arith.constant 0 : index
    %298 = vector.load %arg14[%c0_172, %c0_173] : memref<24x128xf32, #tpu.memory_space<vmem>>, vector<8x128xf32>
    tpu.vector_store %arg14[%c0_172, %c0_173], %297 {strides = array<i32>} : memref<24x128xf32, #tpu.memory_space<vmem>>, vector<8x128xf32>,
    %c8_174 = arith.constant 8 : index
    %c0_175 = arith.constant 0 : index
    %299 = vector.load %arg14[%c8_174, %c0_175] : memref<24x128xf32, #tpu.memory_space<vmem>>, vector<8x128xf32>
    tpu.vector_store %arg14[%c8_174, %c0_175], %288 {strides = array<i32>} : memref<24x128xf32, #tpu.memory_space<vmem>>, vector<8x128xf32>,
    %c6 = arith.constant 6 : index
    %c0_176 = arith.constant 0 : index
    %c0_177 = arith.constant 0 : index
    %300 = vector.load %arg4[%c6, %c0_176, %c0_177] : memref<16x16x24xf32, #tpu.memory_space<vmem>>, vector<1x16x24xf32>
    %301 = vector.shape_cast %300 : vector<1x16x24xf32> to vector<16x24xf32>
    %c0_178 = arith.constant 0 : index
    %c0_179 = arith.constant 0 : index
    %302 = vector.load %arg14[%c0_178, %c0_179] : memref<24x128xf32, #tpu.memory_space<vmem>>, vector<24x128xf32>
    %cst_180 = arith.constant dense<0.000000e+00> : vector<16x128xf32>
    %303 = tpu.matmul %301, %302, %cst_180 {dimension_numbers = #tpu.dot_dimension_numbers<[1], [0], [0], [1], [0, 0, 1, 1], [], []>} : vector<16x24xf32>, vector<24x128xf32>, vector<16x128xf32> -> vector<16x128xf32>
    %c6_181 = arith.constant 6 : index
    %c0_182 = arith.constant 0 : index
    %c0_183 = arith.constant 0 : index
    %304 = vector.load %arg5[%c6_181, %c0_182, %c0_183] : memref<16x16x1xf32, #tpu.memory_space<vmem>>, vector<1x16x1xf32>
    %305 = vector.shape_cast %304 : vector<1x16x1xf32> to vector<16x1xf32>
    %306 = vector.broadcast %305 : vector<16x1xf32> to vector<16x128xf32>
    %307 = arith.addf %303, %306 : vector<16x128xf32>
    %308 = vector.extract_strided_slice %307 {offsets = [0, 0], sizes = [8, 128], strides = [1, 1]} : vector<16x128xf32> to vector<8x128xf32>
    %309 = math.tanh %308 : vector<8x128xf32>
    %310 = vector.extract_strided_slice %307 {offsets = [8, 0], sizes = [8, 128], strides = [1, 1]} : vector<16x128xf32> to vector<8x128xf32>
    %311 = arith.negf %310 : vector<8x128xf32>
    %312 = math.exp %311 : vector<8x128xf32>
    %cst_184 = arith.constant 1.000000e+00 : f32
    %313 = vector.broadcast %cst_184 : f32 to vector<8x128xf32>
    %314 = arith.addf %313, %312 : vector<8x128xf32>
    %315 = arith.divf %313, %314 : vector<8x128xf32>
    %316 = arith.mulf %309, %315 : vector<8x128xf32>
    %c6_185 = arith.constant 6 : index
    %c0_186 = arith.constant 0 : index
    %c0_187 = arith.constant 0 : index
    %317 = vector.load %arg6[%c6_185, %c0_186, %c0_187] : memref<16x16x8xf32, #tpu.memory_space<vmem>>, vector<1x16x8xf32>
    %318 = vector.shape_cast %317 : vector<1x16x8xf32> to vector<16x8xf32>
    %cst_188 = arith.constant dense<0.000000e+00> : vector<16x128xf32>
    %319 = tpu.matmul %318, %316, %cst_188 {dimension_numbers = #tpu.dot_dimension_numbers<[1], [0], [0], [1], [0, 0, 1, 1], [], []>} : vector<16x8xf32>, vector<8x128xf32>, vector<16x128xf32> -> vector<16x128xf32>
    %c6_189 = arith.constant 6 : index
    %c0_190 = arith.constant 0 : index
    %c0_191 = arith.constant 0 : index
    %320 = vector.load %arg7[%c6_189, %c0_190, %c0_191] : memref<16x16x1xf32, #tpu.memory_space<vmem>>, vector<1x16x1xf32>
    %321 = vector.shape_cast %320 : vector<1x16x1xf32> to vector<16x1xf32>
    %322 = vector.broadcast %321 : vector<16x1xf32> to vector<16x128xf32>
    %323 = arith.addf %319, %322 : vector<16x128xf32>
    %324 = vector.extract_strided_slice %323 {offsets = [0, 0], sizes = [8, 128], strides = [1, 1]} : vector<16x128xf32> to vector<8x128xf32>
    %325 = arith.addf %288, %324 : vector<8x128xf32>
    %326 = vector.extract_strided_slice %323 {offsets = [8, 0], sizes = [8, 128], strides = [1, 1]} : vector<16x128xf32> to vector<8x128xf32>
    %327 = arith.addf %290, %326 : vector<8x128xf32>
    %c8_i32_192 = arith.constant 8 : i32
    %328 = vector.broadcast %c8_i32_192 : i32 to vector<1x128xi32>
    %329 = arith.cmpi sge, %0, %328 : vector<1x128xi32>
    %c8_i32_193 = arith.constant 8 : i32
    %330 = tpu.dynamic_rotate %325 by %c8_i32_193 dim 1 : vector<8x128xf32>, i32 -> vector<8x128xf32>
    %cst_194 = arith.constant 0.000000e+00 : f32
    %331 = vector.shape_cast %329 : vector<1x128xi1> to vector<1x128xi1>
    %332 = vector.broadcast %331 : vector<1x128xi1> to vector<8x128xi1>
    %333 = vector.broadcast %cst_194 : f32 to vector<8x128xf32>
    %334 = arith.select %332, %330, %333 : vector<8x128xi1>, vector<8x128xf32>
    %c0_195 = arith.constant 0 : index
    %c0_196 = arith.constant 0 : index
    %335 = vector.load %arg14[%c0_195, %c0_196] : memref<24x128xf32, #tpu.memory_space<vmem>>, vector<8x128xf32>
    tpu.vector_store %arg14[%c0_195, %c0_196], %334 {strides = array<i32>} : memref<24x128xf32, #tpu.memory_space<vmem>>, vector<8x128xf32>,
    %c8_197 = arith.constant 8 : index
    %c0_198 = arith.constant 0 : index
    %336 = vector.load %arg14[%c8_197, %c0_198] : memref<24x128xf32, #tpu.memory_space<vmem>>, vector<8x128xf32>
    tpu.vector_store %arg14[%c8_197, %c0_198], %325 {strides = array<i32>} : memref<24x128xf32, #tpu.memory_space<vmem>>, vector<8x128xf32>,
    %c7 = arith.constant 7 : index
    %c0_199 = arith.constant 0 : index
    %c0_200 = arith.constant 0 : index
    %337 = vector.load %arg4[%c7, %c0_199, %c0_200] : memref<16x16x24xf32, #tpu.memory_space<vmem>>, vector<1x16x24xf32>
    %338 = vector.shape_cast %337 : vector<1x16x24xf32> to vector<16x24xf32>
    %c0_201 = arith.constant 0 : index
    %c0_202 = arith.constant 0 : index
    %339 = vector.load %arg14[%c0_201, %c0_202] : memref<24x128xf32, #tpu.memory_space<vmem>>, vector<24x128xf32>
    %cst_203 = arith.constant dense<0.000000e+00> : vector<16x128xf32>
    %340 = tpu.matmul %338, %339, %cst_203 {dimension_numbers = #tpu.dot_dimension_numbers<[1], [0], [0], [1], [0, 0, 1, 1], [], []>} : vector<16x24xf32>, vector<24x128xf32>, vector<16x128xf32> -> vector<16x128xf32>
    %c7_204 = arith.constant 7 : index
    %c0_205 = arith.constant 0 : index
    %c0_206 = arith.constant 0 : index
    %341 = vector.load %arg5[%c7_204, %c0_205, %c0_206] : memref<16x16x1xf32, #tpu.memory_space<vmem>>, vector<1x16x1xf32>
    %342 = vector.shape_cast %341 : vector<1x16x1xf32> to vector<16x1xf32>
    %343 = vector.broadcast %342 : vector<16x1xf32> to vector<16x128xf32>
    %344 = arith.addf %340, %343 : vector<16x128xf32>
    %345 = vector.extract_strided_slice %344 {offsets = [0, 0], sizes = [8, 128], strides = [1, 1]} : vector<16x128xf32> to vector<8x128xf32>
    %346 = math.tanh %345 : vector<8x128xf32>
    %347 = vector.extract_strided_slice %344 {offsets = [8, 0], sizes = [8, 128], strides = [1, 1]} : vector<16x128xf32> to vector<8x128xf32>
    %348 = arith.negf %347 : vector<8x128xf32>
    %349 = math.exp %348 : vector<8x128xf32>
    %cst_207 = arith.constant 1.000000e+00 : f32
    %350 = vector.broadcast %cst_207 : f32 to vector<8x128xf32>
    %351 = arith.addf %350, %349 : vector<8x128xf32>
    %352 = arith.divf %350, %351 : vector<8x128xf32>
    %353 = arith.mulf %346, %352 : vector<8x128xf32>
    %c7_208 = arith.constant 7 : index
    %c0_209 = arith.constant 0 : index
    %c0_210 = arith.constant 0 : index
    %354 = vector.load %arg6[%c7_208, %c0_209, %c0_210] : memref<16x16x8xf32, #tpu.memory_space<vmem>>, vector<1x16x8xf32>
    %355 = vector.shape_cast %354 : vector<1x16x8xf32> to vector<16x8xf32>
    %cst_211 = arith.constant dense<0.000000e+00> : vector<16x128xf32>
    %356 = tpu.matmul %355, %353, %cst_211 {dimension_numbers = #tpu.dot_dimension_numbers<[1], [0], [0], [1], [0, 0, 1, 1], [], []>} : vector<16x8xf32>, vector<8x128xf32>, vector<16x128xf32> -> vector<16x128xf32>
    %c7_212 = arith.constant 7 : index
    %c0_213 = arith.constant 0 : index
    %c0_214 = arith.constant 0 : index
    %357 = vector.load %arg7[%c7_212, %c0_213, %c0_214] : memref<16x16x1xf32, #tpu.memory_space<vmem>>, vector<1x16x1xf32>
    %358 = vector.shape_cast %357 : vector<1x16x1xf32> to vector<16x1xf32>
    %359 = vector.broadcast %358 : vector<16x1xf32> to vector<16x128xf32>
    %360 = arith.addf %356, %359 : vector<16x128xf32>
    %361 = vector.extract_strided_slice %360 {offsets = [8, 0], sizes = [8, 128], strides = [1, 1]} : vector<16x128xf32> to vector<8x128xf32>
    %362 = arith.addf %327, %361 : vector<8x128xf32>
    %cst_215 = arith.constant 0.000000e+00 : f32
    %363 = vector.broadcast %cst_215 : f32 to vector<8x128xf32>
    %364 = arith.cmpf oge, %362, %363 : vector<8x128xf32>
    %cst_216 = arith.constant 1.000000e-01 : f32
    %365 = vector.broadcast %cst_216 : f32 to vector<8x128xf32>
    %366 = arith.mulf %365, %362 : vector<8x128xf32>
    %367 = arith.select %364, %362, %366 : vector<8x128xi1>, vector<8x128xf32>
    %c1_217 = arith.constant 1 : index
    %c0_218 = arith.constant 0 : index
    %c0_219 = arith.constant 0 : index
    %368 = vector.load %arg10[%c1_217, %c0_218, %c0_219] : memref<4x2x8xf32, #tpu.memory_space<vmem>>, vector<1x2x8xf32>
    %369 = vector.shape_cast %368 : vector<1x2x8xf32> to vector<2x8xf32>
    %cst_220 = arith.constant dense<0.000000e+00> : vector<2x128xf32>
    %370 = tpu.matmul %369, %367, %cst_220 {dimension_numbers = #tpu.dot_dimension_numbers<[1], [0], [0], [1], [0, 0, 1, 1], [], []>} : vector<2x8xf32>, vector<8x128xf32>, vector<2x128xf32> -> vector<2x128xf32>
    %c1_221 = arith.constant 1 : index
    %c0_222 = arith.constant 0 : index
    %c0_223 = arith.constant 0 : index
    %371 = vector.load %arg11[%c1_221, %c0_222, %c0_223] : memref<4x2x1xf32, #tpu.memory_space<vmem>>, vector<1x2x1xf32>
    %372 = vector.shape_cast %371 : vector<1x2x1xf32> to vector<2x1xf32>
    %373 = vector.broadcast %372 : vector<2x1xf32> to vector<2x128xf32>
    %374 = arith.addf %370, %373 : vector<2x128xf32>
    %375 = vector.extract_strided_slice %374 {offsets = [0, 0], sizes = [1, 128], strides = [1, 1]} : vector<2x128xf32> to vector<1x128xf32>
    %376 = vector.extract_strided_slice %374 {offsets = [1, 0], sizes = [1, 128], strides = [1, 1]} : vector<2x128xf32> to vector<1x128xf32>
    %cst_224 = arith.constant 0.000000e+00 : f32
    %377 = vector.broadcast %cst_224 : f32 to vector<1x128xf32>
    %378 = arith.select %2, %376, %377 : vector<1x128xi1>, vector<1x128xf32>
    %379 = arith.addf %194, %378 : vector<1x128xf32>
    %380 = math.exp %378 : vector<1x128xf32>
    %381 = arith.mulf %199, %380 : vector<1x128xf32>
    %382 = arith.addf %381, %375 : vector<1x128xf32>
    %cst_225 = arith.constant 0.000000e+00 : f32
    %383 = vector.broadcast %cst_225 : f32 to vector<1x128xf32>
    %384 = arith.select %2, %382, %383 : vector<1x128xi1>, vector<1x128xf32>
    %c2_226 = arith.constant 2 : index
    %c0_227 = arith.constant 0 : index
    %c0_228 = arith.constant 0 : index
    %385 = vector.load %arg3[%c2_226, %c0_227, %c0_228] : memref<4x8x2xf32, #tpu.memory_space<vmem>>, vector<1x8x2xf32>
    %386 = vector.shape_cast %385 : vector<1x8x2xf32> to vector<8x2xf32>
    %387 = vector.extract_strided_slice %386 {offsets = [0, 0], sizes = [8, 1], strides = [1, 1]} : vector<8x2xf32> to vector<8x1xf32>
    %388 = vector.broadcast %387 : vector<8x1xf32> to vector<8x128xf32>
    %389 = vector.broadcast %384 : vector<1x128xf32> to vector<8x128xf32>
    %390 = arith.mulf %388, %389 : vector<8x128xf32>
    %391 = vector.extract_strided_slice %386 {offsets = [0, 1], sizes = [8, 1], strides = [1, 1]} : vector<8x2xf32> to vector<8x1xf32>
    %392 = vector.broadcast %391 : vector<8x1xf32> to vector<8x128xf32>
    %393 = arith.addf %390, %392 : vector<8x128xf32>
    %c15_i32 = arith.constant 15 : i32
    %394 = vector.broadcast %c15_i32 : i32 to vector<1x128xi32>
    %395 = arith.cmpi slt, %0, %394 : vector<1x128xi32>
    %c127_i32 = arith.constant 127 : i32
    %396 = tpu.dynamic_rotate %393 by %c127_i32 dim 1 : vector<8x128xf32>, i32 -> vector<8x128xf32>
    %397 = vector.shape_cast %395 : vector<1x128xi1> to vector<1x128xi1>
    %398 = vector.broadcast %397 : vector<1x128xi1> to vector<8x128xi1>
    %399 = arith.select %398, %396, %393 : vector<8x128xi1>, vector<8x128xf32>
    %cst_229 = arith.constant 0.000000e+00 : f32
    %400 = vector.broadcast %cst_229 : f32 to vector<8x128xf32>
    %c1_i32_230 = arith.constant 1 : i32
    %401 = vector.broadcast %c1_i32_230 : i32 to vector<1x128xi32>
    %402 = arith.addi %0, %401 : vector<1x128xi32>
    %c16_i32_231 = arith.constant 16 : i32
    %403 = vector.broadcast %c16_i32_231 : i32 to vector<1x128xi32>
    %404 = arith.cmpi slt, %402, %403 : vector<1x128xi32>
    %c127_i32_232 = arith.constant 127 : i32
    %405 = tpu.dynamic_rotate %399 by %c127_i32_232 dim 1 : vector<8x128xf32>, i32 -> vector<8x128xf32>
    %cst_233 = arith.constant 0.000000e+00 : f32
    %406 = vector.shape_cast %404 : vector<1x128xi1> to vector<1x128xi1>
    %407 = vector.broadcast %406 : vector<1x128xi1> to vector<8x128xi1>
    %408 = vector.broadcast %cst_233 : f32 to vector<8x128xf32>
    %409 = arith.select %407, %405, %408 : vector<8x128xi1>, vector<8x128xf32>
    %c0_234 = arith.constant 0 : index
    %c0_235 = arith.constant 0 : index
    %410 = vector.load %arg14[%c0_234, %c0_235] : memref<24x128xf32, #tpu.memory_space<vmem>>, vector<8x128xf32>
    tpu.vector_store %arg14[%c0_234, %c0_235], %399 {strides = array<i32>} : memref<24x128xf32, #tpu.memory_space<vmem>>, vector<8x128xf32>,
    %c8_236 = arith.constant 8 : index
    %c0_237 = arith.constant 0 : index
    %411 = vector.load %arg14[%c8_236, %c0_237] : memref<24x128xf32, #tpu.memory_space<vmem>>, vector<8x128xf32>
    tpu.vector_store %arg14[%c8_236, %c0_237], %409 {strides = array<i32>} : memref<24x128xf32, #tpu.memory_space<vmem>>, vector<8x128xf32>,
    %c8_238 = arith.constant 8 : index
    %c0_239 = arith.constant 0 : index
    %c0_240 = arith.constant 0 : index
    %412 = vector.load %arg4[%c8_238, %c0_239, %c0_240] : memref<16x16x24xf32, #tpu.memory_space<vmem>>, vector<1x16x24xf32>
    %413 = vector.shape_cast %412 : vector<1x16x24xf32> to vector<16x24xf32>
    %c0_241 = arith.constant 0 : index
    %c0_242 = arith.constant 0 : index
    %414 = vector.load %arg14[%c0_241, %c0_242] : memref<24x128xf32, #tpu.memory_space<vmem>>, vector<24x128xf32>
    %cst_243 = arith.constant dense<0.000000e+00> : vector<16x128xf32>
    %415 = tpu.matmul %413, %414, %cst_243 {dimension_numbers = #tpu.dot_dimension_numbers<[1], [0], [0], [1], [0, 0, 1, 1], [], []>} : vector<16x24xf32>, vector<24x128xf32>, vector<16x128xf32> -> vector<16x128xf32>
    %c8_244 = arith.constant 8 : index
    %c0_245 = arith.constant 0 : index
    %c0_246 = arith.constant 0 : index
    %416 = vector.load %arg5[%c8_244, %c0_245, %c0_246] : memref<16x16x1xf32, #tpu.memory_space<vmem>>, vector<1x16x1xf32>
    %417 = vector.shape_cast %416 : vector<1x16x1xf32> to vector<16x1xf32>
    %418 = vector.broadcast %417 : vector<16x1xf32> to vector<16x128xf32>
    %419 = arith.addf %415, %418 : vector<16x128xf32>
    %420 = vector.extract_strided_slice %419 {offsets = [0, 0], sizes = [8, 128], strides = [1, 1]} : vector<16x128xf32> to vector<8x128xf32>
    %421 = math.tanh %420 : vector<8x128xf32>
    %422 = vector.extract_strided_slice %419 {offsets = [8, 0], sizes = [8, 128], strides = [1, 1]} : vector<16x128xf32> to vector<8x128xf32>
    %423 = arith.negf %422 : vector<8x128xf32>
    %424 = math.exp %423 : vector<8x128xf32>
    %cst_247 = arith.constant 1.000000e+00 : f32
    %425 = vector.broadcast %cst_247 : f32 to vector<8x128xf32>
    %426 = arith.addf %425, %424 : vector<8x128xf32>
    %427 = arith.divf %425, %426 : vector<8x128xf32>
    %428 = arith.mulf %421, %427 : vector<8x128xf32>
    %c8_248 = arith.constant 8 : index
    %c0_249 = arith.constant 0 : index
    %c0_250 = arith.constant 0 : index
    %429 = vector.load %arg6[%c8_248, %c0_249, %c0_250] : memref<16x16x8xf32, #tpu.memory_space<vmem>>, vector<1x16x8xf32>
    %430 = vector.shape_cast %429 : vector<1x16x8xf32> to vector<16x8xf32>
    %cst_251 = arith.constant dense<0.000000e+00> : vector<16x128xf32>
    %431 = tpu.matmul %430, %428, %cst_251 {dimension_numbers = #tpu.dot_dimension_numbers<[1], [0], [0], [1], [0, 0, 1, 1], [], []>} : vector<16x8xf32>, vector<8x128xf32>, vector<16x128xf32> -> vector<16x128xf32>
    %c8_252 = arith.constant 8 : index
    %c0_253 = arith.constant 0 : index
    %c0_254 = arith.constant 0 : index
    %432 = vector.load %arg7[%c8_252, %c0_253, %c0_254] : memref<16x16x1xf32, #tpu.memory_space<vmem>>, vector<1x16x1xf32>
    %433 = vector.shape_cast %432 : vector<1x16x1xf32> to vector<16x1xf32>
    %434 = vector.broadcast %433 : vector<16x1xf32> to vector<16x128xf32>
    %435 = arith.addf %431, %434 : vector<16x128xf32>
    %436 = vector.extract_strided_slice %435 {offsets = [0, 0], sizes = [8, 128], strides = [1, 1]} : vector<16x128xf32> to vector<8x128xf32>
    %437 = arith.addf %399, %436 : vector<8x128xf32>
    %438 = vector.extract_strided_slice %435 {offsets = [8, 0], sizes = [8, 128], strides = [1, 1]} : vector<16x128xf32> to vector<8x128xf32>
    %439 = arith.addf %400, %438 : vector<8x128xf32>
    %c2_i32_255 = arith.constant 2 : i32
    %440 = vector.broadcast %c2_i32_255 : i32 to vector<1x128xi32>
    %441 = arith.addi %0, %440 : vector<1x128xi32>
    %c16_i32_256 = arith.constant 16 : i32
    %442 = vector.broadcast %c16_i32_256 : i32 to vector<1x128xi32>
    %443 = arith.cmpi slt, %441, %442 : vector<1x128xi32>
    %c126_i32 = arith.constant 126 : i32
    %444 = tpu.dynamic_rotate %437 by %c126_i32 dim 1 : vector<8x128xf32>, i32 -> vector<8x128xf32>
    %cst_257 = arith.constant 0.000000e+00 : f32
    %445 = vector.shape_cast %443 : vector<1x128xi1> to vector<1x128xi1>
    %446 = vector.broadcast %445 : vector<1x128xi1> to vector<8x128xi1>
    %447 = vector.broadcast %cst_257 : f32 to vector<8x128xf32>
    %448 = arith.select %446, %444, %447 : vector<8x128xi1>, vector<8x128xf32>
    %c0_258 = arith.constant 0 : index
    %c0_259 = arith.constant 0 : index
    %449 = vector.load %arg14[%c0_258, %c0_259] : memref<24x128xf32, #tpu.memory_space<vmem>>, vector<8x128xf32>
    tpu.vector_store %arg14[%c0_258, %c0_259], %437 {strides = array<i32>} : memref<24x128xf32, #tpu.memory_space<vmem>>, vector<8x128xf32>,
    %c8_260 = arith.constant 8 : index
    %c0_261 = arith.constant 0 : index
    %450 = vector.load %arg14[%c8_260, %c0_261] : memref<24x128xf32, #tpu.memory_space<vmem>>, vector<8x128xf32>
    tpu.vector_store %arg14[%c8_260, %c0_261], %448 {strides = array<i32>} : memref<24x128xf32, #tpu.memory_space<vmem>>, vector<8x128xf32>,
    %c9 = arith.constant 9 : index
    %c0_262 = arith.constant 0 : index
    %c0_263 = arith.constant 0 : index
    %451 = vector.load %arg4[%c9, %c0_262, %c0_263] : memref<16x16x24xf32, #tpu.memory_space<vmem>>, vector<1x16x24xf32>
    %452 = vector.shape_cast %451 : vector<1x16x24xf32> to vector<16x24xf32>
    %c0_264 = arith.constant 0 : index
    %c0_265 = arith.constant 0 : index
    %453 = vector.load %arg14[%c0_264, %c0_265] : memref<24x128xf32, #tpu.memory_space<vmem>>, vector<24x128xf32>
    %cst_266 = arith.constant dense<0.000000e+00> : vector<16x128xf32>
    %454 = tpu.matmul %452, %453, %cst_266 {dimension_numbers = #tpu.dot_dimension_numbers<[1], [0], [0], [1], [0, 0, 1, 1], [], []>} : vector<16x24xf32>, vector<24x128xf32>, vector<16x128xf32> -> vector<16x128xf32>
    %c9_267 = arith.constant 9 : index
    %c0_268 = arith.constant 0 : index
    %c0_269 = arith.constant 0 : index
    %455 = vector.load %arg5[%c9_267, %c0_268, %c0_269] : memref<16x16x1xf32, #tpu.memory_space<vmem>>, vector<1x16x1xf32>
    %456 = vector.shape_cast %455 : vector<1x16x1xf32> to vector<16x1xf32>
    %457 = vector.broadcast %456 : vector<16x1xf32> to vector<16x128xf32>
    %458 = arith.addf %454, %457 : vector<16x128xf32>
    %459 = vector.extract_strided_slice %458 {offsets = [0, 0], sizes = [8, 128], strides = [1, 1]} : vector<16x128xf32> to vector<8x128xf32>
    %460 = math.tanh %459 : vector<8x128xf32>
    %461 = vector.extract_strided_slice %458 {offsets = [8, 0], sizes = [8, 128], strides = [1, 1]} : vector<16x128xf32> to vector<8x128xf32>
    %462 = arith.negf %461 : vector<8x128xf32>
    %463 = math.exp %462 : vector<8x128xf32>
    %cst_270 = arith.constant 1.000000e+00 : f32
    %464 = vector.broadcast %cst_270 : f32 to vector<8x128xf32>
    %465 = arith.addf %464, %463 : vector<8x128xf32>
    %466 = arith.divf %464, %465 : vector<8x128xf32>
    %467 = arith.mulf %460, %466 : vector<8x128xf32>
    %c9_271 = arith.constant 9 : index
    %c0_272 = arith.constant 0 : index
    %c0_273 = arith.constant 0 : index
    %468 = vector.load %arg6[%c9_271, %c0_272, %c0_273] : memref<16x16x8xf32, #tpu.memory_space<vmem>>, vector<1x16x8xf32>
    %469 = vector.shape_cast %468 : vector<1x16x8xf32> to vector<16x8xf32>
    %cst_274 = arith.constant dense<0.000000e+00> : vector<16x128xf32>
    %470 = tpu.matmul %469, %467, %cst_274 {dimension_numbers = #tpu.dot_dimension_numbers<[1], [0], [0], [1], [0, 0, 1, 1], [], []>} : vector<16x8xf32>, vector<8x128xf32>, vector<16x128xf32> -> vector<16x128xf32>
    %c9_275 = arith.constant 9 : index
    %c0_276 = arith.constant 0 : index
    %c0_277 = arith.constant 0 : index
    %471 = vector.load %arg7[%c9_275, %c0_276, %c0_277] : memref<16x16x1xf32, #tpu.memory_space<vmem>>, vector<1x16x1xf32>
    %472 = vector.shape_cast %471 : vector<1x16x1xf32> to vector<16x1xf32>
    %473 = vector.broadcast %472 : vector<16x1xf32> to vector<16x128xf32>
    %474 = arith.addf %470, %473 : vector<16x128xf32>
    %475 = vector.extract_strided_slice %474 {offsets = [0, 0], sizes = [8, 128], strides = [1, 1]} : vector<16x128xf32> to vector<8x128xf32>
    %476 = arith.addf %437, %475 : vector<8x128xf32>
    %477 = vector.extract_strided_slice %474 {offsets = [8, 0], sizes = [8, 128], strides = [1, 1]} : vector<16x128xf32> to vector<8x128xf32>
    %478 = arith.addf %439, %477 : vector<8x128xf32>
    %c4_i32_278 = arith.constant 4 : i32
    %479 = vector.broadcast %c4_i32_278 : i32 to vector<1x128xi32>
    %480 = arith.addi %0, %479 : vector<1x128xi32>
    %c16_i32_279 = arith.constant 16 : i32
    %481 = vector.broadcast %c16_i32_279 : i32 to vector<1x128xi32>
    %482 = arith.cmpi slt, %480, %481 : vector<1x128xi32>
    %c124_i32 = arith.constant 124 : i32
    %483 = tpu.dynamic_rotate %476 by %c124_i32 dim 1 : vector<8x128xf32>, i32 -> vector<8x128xf32>
    %cst_280 = arith.constant 0.000000e+00 : f32
    %484 = vector.shape_cast %482 : vector<1x128xi1> to vector<1x128xi1>
    %485 = vector.broadcast %484 : vector<1x128xi1> to vector<8x128xi1>
    %486 = vector.broadcast %cst_280 : f32 to vector<8x128xf32>
    %487 = arith.select %485, %483, %486 : vector<8x128xi1>, vector<8x128xf32>
    %c0_281 = arith.constant 0 : index
    %c0_282 = arith.constant 0 : index
    %488 = vector.load %arg14[%c0_281, %c0_282] : memref<24x128xf32, #tpu.memory_space<vmem>>, vector<8x128xf32>
    tpu.vector_store %arg14[%c0_281, %c0_282], %476 {strides = array<i32>} : memref<24x128xf32, #tpu.memory_space<vmem>>, vector<8x128xf32>,
    %c8_283 = arith.constant 8 : index
    %c0_284 = arith.constant 0 : index
    %489 = vector.load %arg14[%c8_283, %c0_284] : memref<24x128xf32, #tpu.memory_space<vmem>>, vector<8x128xf32>
    tpu.vector_store %arg14[%c8_283, %c0_284], %487 {strides = array<i32>} : memref<24x128xf32, #tpu.memory_space<vmem>>, vector<8x128xf32>,
    %c10 = arith.constant 10 : index
    %c0_285 = arith.constant 0 : index
    %c0_286 = arith.constant 0 : index
    %490 = vector.load %arg4[%c10, %c0_285, %c0_286] : memref<16x16x24xf32, #tpu.memory_space<vmem>>, vector<1x16x24xf32>
    %491 = vector.shape_cast %490 : vector<1x16x24xf32> to vector<16x24xf32>
    %c0_287 = arith.constant 0 : index
    %c0_288 = arith.constant 0 : index
    %492 = vector.load %arg14[%c0_287, %c0_288] : memref<24x128xf32, #tpu.memory_space<vmem>>, vector<24x128xf32>
    %cst_289 = arith.constant dense<0.000000e+00> : vector<16x128xf32>
    %493 = tpu.matmul %491, %492, %cst_289 {dimension_numbers = #tpu.dot_dimension_numbers<[1], [0], [0], [1], [0, 0, 1, 1], [], []>} : vector<16x24xf32>, vector<24x128xf32>, vector<16x128xf32> -> vector<16x128xf32>
    %c10_290 = arith.constant 10 : index
    %c0_291 = arith.constant 0 : index
    %c0_292 = arith.constant 0 : index
    %494 = vector.load %arg5[%c10_290, %c0_291, %c0_292] : memref<16x16x1xf32, #tpu.memory_space<vmem>>, vector<1x16x1xf32>
    %495 = vector.shape_cast %494 : vector<1x16x1xf32> to vector<16x1xf32>
    %496 = vector.broadcast %495 : vector<16x1xf32> to vector<16x128xf32>
    %497 = arith.addf %493, %496 : vector<16x128xf32>
    %498 = vector.extract_strided_slice %497 {offsets = [0, 0], sizes = [8, 128], strides = [1, 1]} : vector<16x128xf32> to vector<8x128xf32>
    %499 = math.tanh %498 : vector<8x128xf32>
    %500 = vector.extract_strided_slice %497 {offsets = [8, 0], sizes = [8, 128], strides = [1, 1]} : vector<16x128xf32> to vector<8x128xf32>
    %501 = arith.negf %500 : vector<8x128xf32>
    %502 = math.exp %501 : vector<8x128xf32>
    %cst_293 = arith.constant 1.000000e+00 : f32
    %503 = vector.broadcast %cst_293 : f32 to vector<8x128xf32>
    %504 = arith.addf %503, %502 : vector<8x128xf32>
    %505 = arith.divf %503, %504 : vector<8x128xf32>
    %506 = arith.mulf %499, %505 : vector<8x128xf32>
    %c10_294 = arith.constant 10 : index
    %c0_295 = arith.constant 0 : index
    %c0_296 = arith.constant 0 : index
    %507 = vector.load %arg6[%c10_294, %c0_295, %c0_296] : memref<16x16x8xf32, #tpu.memory_space<vmem>>, vector<1x16x8xf32>
    %508 = vector.shape_cast %507 : vector<1x16x8xf32> to vector<16x8xf32>
    %cst_297 = arith.constant dense<0.000000e+00> : vector<16x128xf32>
    %509 = tpu.matmul %508, %506, %cst_297 {dimension_numbers = #tpu.dot_dimension_numbers<[1], [0], [0], [1], [0, 0, 1, 1], [], []>} : vector<16x8xf32>, vector<8x128xf32>, vector<16x128xf32> -> vector<16x128xf32>
    %c10_298 = arith.constant 10 : index
    %c0_299 = arith.constant 0 : index
    %c0_300 = arith.constant 0 : index
    %510 = vector.load %arg7[%c10_298, %c0_299, %c0_300] : memref<16x16x1xf32, #tpu.memory_space<vmem>>, vector<1x16x1xf32>
    %511 = vector.shape_cast %510 : vector<1x16x1xf32> to vector<16x1xf32>
    %512 = vector.broadcast %511 : vector<16x1xf32> to vector<16x128xf32>
    %513 = arith.addf %509, %512 : vector<16x128xf32>
    %514 = vector.extract_strided_slice %513 {offsets = [0, 0], sizes = [8, 128], strides = [1, 1]} : vector<16x128xf32> to vector<8x128xf32>
    %515 = arith.addf %476, %514 : vector<8x128xf32>
    %516 = vector.extract_strided_slice %513 {offsets = [8, 0], sizes = [8, 128], strides = [1, 1]} : vector<16x128xf32> to vector<8x128xf32>
    %517 = arith.addf %478, %516 : vector<8x128xf32>
    %c8_i32_301 = arith.constant 8 : i32
    %518 = vector.broadcast %c8_i32_301 : i32 to vector<1x128xi32>
    %519 = arith.addi %0, %518 : vector<1x128xi32>
    %c16_i32_302 = arith.constant 16 : i32
    %520 = vector.broadcast %c16_i32_302 : i32 to vector<1x128xi32>
    %521 = arith.cmpi slt, %519, %520 : vector<1x128xi32>
    %c120_i32 = arith.constant 120 : i32
    %522 = tpu.dynamic_rotate %515 by %c120_i32 dim 1 : vector<8x128xf32>, i32 -> vector<8x128xf32>
    %cst_303 = arith.constant 0.000000e+00 : f32
    %523 = vector.shape_cast %521 : vector<1x128xi1> to vector<1x128xi1>
    %524 = vector.broadcast %523 : vector<1x128xi1> to vector<8x128xi1>
    %525 = vector.broadcast %cst_303 : f32 to vector<8x128xf32>
    %526 = arith.select %524, %522, %525 : vector<8x128xi1>, vector<8x128xf32>
    %c0_304 = arith.constant 0 : index
    %c0_305 = arith.constant 0 : index
    %527 = vector.load %arg14[%c0_304, %c0_305] : memref<24x128xf32, #tpu.memory_space<vmem>>, vector<8x128xf32>
    tpu.vector_store %arg14[%c0_304, %c0_305], %515 {strides = array<i32>} : memref<24x128xf32, #tpu.memory_space<vmem>>, vector<8x128xf32>,
    %c8_306 = arith.constant 8 : index
    %c0_307 = arith.constant 0 : index
    %528 = vector.load %arg14[%c8_306, %c0_307] : memref<24x128xf32, #tpu.memory_space<vmem>>, vector<8x128xf32>
    tpu.vector_store %arg14[%c8_306, %c0_307], %526 {strides = array<i32>} : memref<24x128xf32, #tpu.memory_space<vmem>>, vector<8x128xf32>,
    %c11 = arith.constant 11 : index
    %c0_308 = arith.constant 0 : index
    %c0_309 = arith.constant 0 : index
    %529 = vector.load %arg4[%c11, %c0_308, %c0_309] : memref<16x16x24xf32, #tpu.memory_space<vmem>>, vector<1x16x24xf32>
    %530 = vector.shape_cast %529 : vector<1x16x24xf32> to vector<16x24xf32>
    %c0_310 = arith.constant 0 : index
    %c0_311 = arith.constant 0 : index
    %531 = vector.load %arg14[%c0_310, %c0_311] : memref<24x128xf32, #tpu.memory_space<vmem>>, vector<24x128xf32>
    %cst_312 = arith.constant dense<0.000000e+00> : vector<16x128xf32>
    %532 = tpu.matmul %530, %531, %cst_312 {dimension_numbers = #tpu.dot_dimension_numbers<[1], [0], [0], [1], [0, 0, 1, 1], [], []>} : vector<16x24xf32>, vector<24x128xf32>, vector<16x128xf32> -> vector<16x128xf32>
    %c11_313 = arith.constant 11 : index
    %c0_314 = arith.constant 0 : index
    %c0_315 = arith.constant 0 : index
    %533 = vector.load %arg5[%c11_313, %c0_314, %c0_315] : memref<16x16x1xf32, #tpu.memory_space<vmem>>, vector<1x16x1xf32>
    %534 = vector.shape_cast %533 : vector<1x16x1xf32> to vector<16x1xf32>
    %535 = vector.broadcast %534 : vector<16x1xf32> to vector<16x128xf32>
    %536 = arith.addf %532, %535 : vector<16x128xf32>
    %537 = vector.extract_strided_slice %536 {offsets = [0, 0], sizes = [8, 128], strides = [1, 1]} : vector<16x128xf32> to vector<8x128xf32>
    %538 = math.tanh %537 : vector<8x128xf32>
    %539 = vector.extract_strided_slice %536 {offsets = [8, 0], sizes = [8, 128], strides = [1, 1]} : vector<16x128xf32> to vector<8x128xf32>
    %540 = arith.negf %539 : vector<8x128xf32>
    %541 = math.exp %540 : vector<8x128xf32>
    %cst_316 = arith.constant 1.000000e+00 : f32
    %542 = vector.broadcast %cst_316 : f32 to vector<8x128xf32>
    %543 = arith.addf %542, %541 : vector<8x128xf32>
    %544 = arith.divf %542, %543 : vector<8x128xf32>
    %545 = arith.mulf %538, %544 : vector<8x128xf32>
    %c11_317 = arith.constant 11 : index
    %c0_318 = arith.constant 0 : index
    %c0_319 = arith.constant 0 : index
    %546 = vector.load %arg6[%c11_317, %c0_318, %c0_319] : memref<16x16x8xf32, #tpu.memory_space<vmem>>, vector<1x16x8xf32>
    %547 = vector.shape_cast %546 : vector<1x16x8xf32> to vector<16x8xf32>
    %cst_320 = arith.constant dense<0.000000e+00> : vector<16x128xf32>
    %548 = tpu.matmul %547, %545, %cst_320 {dimension_numbers = #tpu.dot_dimension_numbers<[1], [0], [0], [1], [0, 0, 1, 1], [], []>} : vector<16x8xf32>, vector<8x128xf32>, vector<16x128xf32> -> vector<16x128xf32>
    %c11_321 = arith.constant 11 : index
    %c0_322 = arith.constant 0 : index
    %c0_323 = arith.constant 0 : index
    %549 = vector.load %arg7[%c11_321, %c0_322, %c0_323] : memref<16x16x1xf32, #tpu.memory_space<vmem>>, vector<1x16x1xf32>
    %550 = vector.shape_cast %549 : vector<1x16x1xf32> to vector<16x1xf32>
    %551 = vector.broadcast %550 : vector<16x1xf32> to vector<16x128xf32>
    %552 = arith.addf %548, %551 : vector<16x128xf32>
    %553 = vector.extract_strided_slice %552 {offsets = [8, 0], sizes = [8, 128], strides = [1, 1]} : vector<16x128xf32> to vector<8x128xf32>
    %554 = arith.addf %517, %553 : vector<8x128xf32>
    %cst_324 = arith.constant 0.000000e+00 : f32
    %555 = vector.broadcast %cst_324 : f32 to vector<8x128xf32>
    %556 = arith.cmpf oge, %554, %555 : vector<8x128xf32>
    %cst_325 = arith.constant 1.000000e-01 : f32
    %557 = vector.broadcast %cst_325 : f32 to vector<8x128xf32>
    %558 = arith.mulf %557, %554 : vector<8x128xf32>
    %559 = arith.select %556, %554, %558 : vector<8x128xi1>, vector<8x128xf32>
    %c2_326 = arith.constant 2 : index
    %c0_327 = arith.constant 0 : index
    %c0_328 = arith.constant 0 : index
    %560 = vector.load %arg10[%c2_326, %c0_327, %c0_328] : memref<4x2x8xf32, #tpu.memory_space<vmem>>, vector<1x2x8xf32>
    %561 = vector.shape_cast %560 : vector<1x2x8xf32> to vector<2x8xf32>
    %cst_329 = arith.constant dense<0.000000e+00> : vector<2x128xf32>
    %562 = tpu.matmul %561, %559, %cst_329 {dimension_numbers = #tpu.dot_dimension_numbers<[1], [0], [0], [1], [0, 0, 1, 1], [], []>} : vector<2x8xf32>, vector<8x128xf32>, vector<2x128xf32> -> vector<2x128xf32>
    %c2_330 = arith.constant 2 : index
    %c0_331 = arith.constant 0 : index
    %c0_332 = arith.constant 0 : index
    %563 = vector.load %arg11[%c2_330, %c0_331, %c0_332] : memref<4x2x1xf32, #tpu.memory_space<vmem>>, vector<1x2x1xf32>
    %564 = vector.shape_cast %563 : vector<1x2x1xf32> to vector<2x1xf32>
    %565 = vector.broadcast %564 : vector<2x1xf32> to vector<2x128xf32>
    %566 = arith.addf %562, %565 : vector<2x128xf32>
    %c1_333 = arith.constant 1 : index
    %c0_334 = arith.constant 0 : index
    %c0_335 = arith.constant 0 : index
    %567 = vector.load %arg8[%c1_333, %c0_334, %c0_335] : memref<2x8x8xf32, #tpu.memory_space<vmem>>, vector<1x8x8xf32>
    %568 = vector.shape_cast %567 : vector<1x8x8xf32> to vector<8x8xf32>
    %cst_336 = arith.constant dense<0.000000e+00> : vector<8x128xf32>
    %569 = tpu.matmul %568, %559, %cst_336 {dimension_numbers = #tpu.dot_dimension_numbers<[1], [0], [0], [1], [0, 0, 1, 1], [], []>} : vector<8x8xf32>, vector<8x128xf32>, vector<8x128xf32> -> vector<8x128xf32>
    %c1_337 = arith.constant 1 : index
    %c0_338 = arith.constant 0 : index
    %c0_339 = arith.constant 0 : index
    %570 = vector.load %arg9[%c1_337, %c0_338, %c0_339] : memref<2x8x1xf32, #tpu.memory_space<vmem>>, vector<1x8x1xf32>
    %571 = vector.shape_cast %570 : vector<1x8x1xf32> to vector<8x1xf32>
    %572 = vector.broadcast %571 : vector<8x1xf32> to vector<8x128xf32>
    %573 = arith.addf %569, %572 : vector<8x128xf32>
    %574 = vector.extract_strided_slice %566 {offsets = [0, 0], sizes = [1, 128], strides = [1, 1]} : vector<2x128xf32> to vector<1x128xf32>
    %575 = vector.extract_strided_slice %566 {offsets = [1, 0], sizes = [1, 128], strides = [1, 1]} : vector<2x128xf32> to vector<1x128xf32>
    %cst_340 = arith.constant 0.000000e+00 : f32
    %576 = vector.broadcast %cst_340 : f32 to vector<1x128xf32>
    %577 = arith.select %2, %575, %576 : vector<1x128xi1>, vector<1x128xf32>
    %578 = arith.addf %379, %577 : vector<1x128xf32>
    %579 = math.exp %577 : vector<1x128xf32>
    %580 = arith.mulf %384, %579 : vector<1x128xf32>
    %581 = arith.addf %580, %574 : vector<1x128xf32>
    %cst_341 = arith.constant 0.000000e+00 : f32
    %582 = vector.broadcast %cst_341 : f32 to vector<1x128xf32>
    %583 = arith.select %2, %581, %582 : vector<1x128xi1>, vector<1x128xf32>
    %c3_342 = arith.constant 3 : index
    %c0_343 = arith.constant 0 : index
    %c0_344 = arith.constant 0 : index
    %584 = vector.load %arg3[%c3_342, %c0_343, %c0_344] : memref<4x8x2xf32, #tpu.memory_space<vmem>>, vector<1x8x2xf32>
    %585 = vector.shape_cast %584 : vector<1x8x2xf32> to vector<8x2xf32>
    %586 = vector.extract_strided_slice %585 {offsets = [0, 0], sizes = [8, 1], strides = [1, 1]} : vector<8x2xf32> to vector<8x1xf32>
    %587 = vector.broadcast %586 : vector<8x1xf32> to vector<8x128xf32>
    %588 = vector.broadcast %583 : vector<1x128xf32> to vector<8x128xf32>
    %589 = arith.mulf %587, %588 : vector<8x128xf32>
    %590 = vector.extract_strided_slice %585 {offsets = [0, 1], sizes = [8, 1], strides = [1, 1]} : vector<8x2xf32> to vector<8x1xf32>
    %591 = vector.broadcast %590 : vector<8x1xf32> to vector<8x128xf32>
    %592 = arith.addf %589, %591 : vector<8x128xf32>
    %c15_i32_345 = arith.constant 15 : i32
    %593 = vector.broadcast %c15_i32_345 : i32 to vector<1x128xi32>
    %594 = arith.cmpi slt, %0, %593 : vector<1x128xi32>
    %c127_i32_346 = arith.constant 127 : i32
    %595 = tpu.dynamic_rotate %592 by %c127_i32_346 dim 1 : vector<8x128xf32>, i32 -> vector<8x128xf32>
    %596 = vector.shape_cast %594 : vector<1x128xi1> to vector<1x128xi1>
    %597 = vector.broadcast %596 : vector<1x128xi1> to vector<8x128xi1>
    %598 = arith.select %597, %595, %592 : vector<8x128xi1>, vector<8x128xf32>
    %599 = arith.addf %598, %573 : vector<8x128xf32>
    %cst_347 = arith.constant 0.000000e+00 : f32
    %600 = vector.broadcast %cst_347 : f32 to vector<8x128xf32>
    %c1_i32_348 = arith.constant 1 : i32
    %601 = vector.broadcast %c1_i32_348 : i32 to vector<1x128xi32>
    %602 = arith.addi %0, %601 : vector<1x128xi32>
    %c16_i32_349 = arith.constant 16 : i32
    %603 = vector.broadcast %c16_i32_349 : i32 to vector<1x128xi32>
    %604 = arith.cmpi slt, %602, %603 : vector<1x128xi32>
    %c127_i32_350 = arith.constant 127 : i32
    %605 = tpu.dynamic_rotate %599 by %c127_i32_350 dim 1 : vector<8x128xf32>, i32 -> vector<8x128xf32>
    %cst_351 = arith.constant 0.000000e+00 : f32
    %606 = vector.shape_cast %604 : vector<1x128xi1> to vector<1x128xi1>
    %607 = vector.broadcast %606 : vector<1x128xi1> to vector<8x128xi1>
    %608 = vector.broadcast %cst_351 : f32 to vector<8x128xf32>
    %609 = arith.select %607, %605, %608 : vector<8x128xi1>, vector<8x128xf32>
    %c0_352 = arith.constant 0 : index
    %c0_353 = arith.constant 0 : index
    %610 = vector.load %arg14[%c0_352, %c0_353] : memref<24x128xf32, #tpu.memory_space<vmem>>, vector<8x128xf32>
    tpu.vector_store %arg14[%c0_352, %c0_353], %599 {strides = array<i32>} : memref<24x128xf32, #tpu.memory_space<vmem>>, vector<8x128xf32>,
    %c8_354 = arith.constant 8 : index
    %c0_355 = arith.constant 0 : index
    %611 = vector.load %arg14[%c8_354, %c0_355] : memref<24x128xf32, #tpu.memory_space<vmem>>, vector<8x128xf32>
    tpu.vector_store %arg14[%c8_354, %c0_355], %609 {strides = array<i32>} : memref<24x128xf32, #tpu.memory_space<vmem>>, vector<8x128xf32>,
    %c12 = arith.constant 12 : index
    %c0_356 = arith.constant 0 : index
    %c0_357 = arith.constant 0 : index
    %612 = vector.load %arg4[%c12, %c0_356, %c0_357] : memref<16x16x24xf32, #tpu.memory_space<vmem>>, vector<1x16x24xf32>
    %613 = vector.shape_cast %612 : vector<1x16x24xf32> to vector<16x24xf32>
    %c0_358 = arith.constant 0 : index
    %c0_359 = arith.constant 0 : index
    %614 = vector.load %arg14[%c0_358, %c0_359] : memref<24x128xf32, #tpu.memory_space<vmem>>, vector<24x128xf32>
    %cst_360 = arith.constant dense<0.000000e+00> : vector<16x128xf32>
    %615 = tpu.matmul %613, %614, %cst_360 {dimension_numbers = #tpu.dot_dimension_numbers<[1], [0], [0], [1], [0, 0, 1, 1], [], []>} : vector<16x24xf32>, vector<24x128xf32>, vector<16x128xf32> -> vector<16x128xf32>
    %c12_361 = arith.constant 12 : index
    %c0_362 = arith.constant 0 : index
    %c0_363 = arith.constant 0 : index
    %616 = vector.load %arg5[%c12_361, %c0_362, %c0_363] : memref<16x16x1xf32, #tpu.memory_space<vmem>>, vector<1x16x1xf32>
    %617 = vector.shape_cast %616 : vector<1x16x1xf32> to vector<16x1xf32>
    %618 = vector.broadcast %617 : vector<16x1xf32> to vector<16x128xf32>
    %619 = arith.addf %615, %618 : vector<16x128xf32>
    %620 = vector.extract_strided_slice %619 {offsets = [0, 0], sizes = [8, 128], strides = [1, 1]} : vector<16x128xf32> to vector<8x128xf32>
    %621 = math.tanh %620 : vector<8x128xf32>
    %622 = vector.extract_strided_slice %619 {offsets = [8, 0], sizes = [8, 128], strides = [1, 1]} : vector<16x128xf32> to vector<8x128xf32>
    %623 = arith.negf %622 : vector<8x128xf32>
    %624 = math.exp %623 : vector<8x128xf32>
    %cst_364 = arith.constant 1.000000e+00 : f32
    %625 = vector.broadcast %cst_364 : f32 to vector<8x128xf32>
    %626 = arith.addf %625, %624 : vector<8x128xf32>
    %627 = arith.divf %625, %626 : vector<8x128xf32>
    %628 = arith.mulf %621, %627 : vector<8x128xf32>
    %c12_365 = arith.constant 12 : index
    %c0_366 = arith.constant 0 : index
    %c0_367 = arith.constant 0 : index
    %629 = vector.load %arg6[%c12_365, %c0_366, %c0_367] : memref<16x16x8xf32, #tpu.memory_space<vmem>>, vector<1x16x8xf32>
    %630 = vector.shape_cast %629 : vector<1x16x8xf32> to vector<16x8xf32>
    %cst_368 = arith.constant dense<0.000000e+00> : vector<16x128xf32>
    %631 = tpu.matmul %630, %628, %cst_368 {dimension_numbers = #tpu.dot_dimension_numbers<[1], [0], [0], [1], [0, 0, 1, 1], [], []>} : vector<16x8xf32>, vector<8x128xf32>, vector<16x128xf32> -> vector<16x128xf32>
    %c12_369 = arith.constant 12 : index
    %c0_370 = arith.constant 0 : index
    %c0_371 = arith.constant 0 : index
    %632 = vector.load %arg7[%c12_369, %c0_370, %c0_371] : memref<16x16x1xf32, #tpu.memory_space<vmem>>, vector<1x16x1xf32>
    %633 = vector.shape_cast %632 : vector<1x16x1xf32> to vector<16x1xf32>
    %634 = vector.broadcast %633 : vector<16x1xf32> to vector<16x128xf32>
    %635 = arith.addf %631, %634 : vector<16x128xf32>
    %636 = vector.extract_strided_slice %635 {offsets = [0, 0], sizes = [8, 128], strides = [1, 1]} : vector<16x128xf32> to vector<8x128xf32>
    %637 = arith.addf %599, %636 : vector<8x128xf32>
    %638 = vector.extract_strided_slice %635 {offsets = [8, 0], sizes = [8, 128], strides = [1, 1]} : vector<16x128xf32> to vector<8x128xf32>
    %639 = arith.addf %600, %638 : vector<8x128xf32>
    %c2_i32_372 = arith.constant 2 : i32
    %640 = vector.broadcast %c2_i32_372 : i32 to vector<1x128xi32>
    %641 = arith.addi %0, %640 : vector<1x128xi32>
    %c16_i32_373 = arith.constant 16 : i32
    %642 = vector.broadcast %c16_i32_373 : i32 to vector<1x128xi32>
    %643 = arith.cmpi slt, %641, %642 : vector<1x128xi32>
    %c126_i32_374 = arith.constant 126 : i32
    %644 = tpu.dynamic_rotate %637 by %c126_i32_374 dim 1 : vector<8x128xf32>, i32 -> vector<8x128xf32>
    %cst_375 = arith.constant 0.000000e+00 : f32
    %645 = vector.shape_cast %643 : vector<1x128xi1> to vector<1x128xi1>
    %646 = vector.broadcast %645 : vector<1x128xi1> to vector<8x128xi1>
    %647 = vector.broadcast %cst_375 : f32 to vector<8x128xf32>
    %648 = arith.select %646, %644, %647 : vector<8x128xi1>, vector<8x128xf32>
    %c0_376 = arith.constant 0 : index
    %c0_377 = arith.constant 0 : index
    %649 = vector.load %arg14[%c0_376, %c0_377] : memref<24x128xf32, #tpu.memory_space<vmem>>, vector<8x128xf32>
    tpu.vector_store %arg14[%c0_376, %c0_377], %637 {strides = array<i32>} : memref<24x128xf32, #tpu.memory_space<vmem>>, vector<8x128xf32>,
    %c8_378 = arith.constant 8 : index
    %c0_379 = arith.constant 0 : index
    %650 = vector.load %arg14[%c8_378, %c0_379] : memref<24x128xf32, #tpu.memory_space<vmem>>, vector<8x128xf32>
    tpu.vector_store %arg14[%c8_378, %c0_379], %648 {strides = array<i32>} : memref<24x128xf32, #tpu.memory_space<vmem>>, vector<8x128xf32>,
    %c13 = arith.constant 13 : index
    %c0_380 = arith.constant 0 : index
    %c0_381 = arith.constant 0 : index
    %651 = vector.load %arg4[%c13, %c0_380, %c0_381] : memref<16x16x24xf32, #tpu.memory_space<vmem>>, vector<1x16x24xf32>
    %652 = vector.shape_cast %651 : vector<1x16x24xf32> to vector<16x24xf32>
    %c0_382 = arith.constant 0 : index
    %c0_383 = arith.constant 0 : index
    %653 = vector.load %arg14[%c0_382, %c0_383] : memref<24x128xf32, #tpu.memory_space<vmem>>, vector<24x128xf32>
    %cst_384 = arith.constant dense<0.000000e+00> : vector<16x128xf32>
    %654 = tpu.matmul %652, %653, %cst_384 {dimension_numbers = #tpu.dot_dimension_numbers<[1], [0], [0], [1], [0, 0, 1, 1], [], []>} : vector<16x24xf32>, vector<24x128xf32>, vector<16x128xf32> -> vector<16x128xf32>
    %c13_385 = arith.constant 13 : index
    %c0_386 = arith.constant 0 : index
    %c0_387 = arith.constant 0 : index
    %655 = vector.load %arg5[%c13_385, %c0_386, %c0_387] : memref<16x16x1xf32, #tpu.memory_space<vmem>>, vector<1x16x1xf32>
    %656 = vector.shape_cast %655 : vector<1x16x1xf32> to vector<16x1xf32>
    %657 = vector.broadcast %656 : vector<16x1xf32> to vector<16x128xf32>
    %658 = arith.addf %654, %657 : vector<16x128xf32>
    %659 = vector.extract_strided_slice %658 {offsets = [0, 0], sizes = [8, 128], strides = [1, 1]} : vector<16x128xf32> to vector<8x128xf32>
    %660 = math.tanh %659 : vector<8x128xf32>
    %661 = vector.extract_strided_slice %658 {offsets = [8, 0], sizes = [8, 128], strides = [1, 1]} : vector<16x128xf32> to vector<8x128xf32>
    %662 = arith.negf %661 : vector<8x128xf32>
    %663 = math.exp %662 : vector<8x128xf32>
    %cst_388 = arith.constant 1.000000e+00 : f32
    %664 = vector.broadcast %cst_388 : f32 to vector<8x128xf32>
    %665 = arith.addf %664, %663 : vector<8x128xf32>
    %666 = arith.divf %664, %665 : vector<8x128xf32>
    %667 = arith.mulf %660, %666 : vector<8x128xf32>
    %c13_389 = arith.constant 13 : index
    %c0_390 = arith.constant 0 : index
    %c0_391 = arith.constant 0 : index
    %668 = vector.load %arg6[%c13_389, %c0_390, %c0_391] : memref<16x16x8xf32, #tpu.memory_space<vmem>>, vector<1x16x8xf32>
    %669 = vector.shape_cast %668 : vector<1x16x8xf32> to vector<16x8xf32>
    %cst_392 = arith.constant dense<0.000000e+00> : vector<16x128xf32>
    %670 = tpu.matmul %669, %667, %cst_392 {dimension_numbers = #tpu.dot_dimension_numbers<[1], [0], [0], [1], [0, 0, 1, 1], [], []>} : vector<16x8xf32>, vector<8x128xf32>, vector<16x128xf32> -> vector<16x128xf32>
    %c13_393 = arith.constant 13 : index
    %c0_394 = arith.constant 0 : index
    %c0_395 = arith.constant 0 : index
    %671 = vector.load %arg7[%c13_393, %c0_394, %c0_395] : memref<16x16x1xf32, #tpu.memory_space<vmem>>, vector<1x16x1xf32>
    %672 = vector.shape_cast %671 : vector<1x16x1xf32> to vector<16x1xf32>
    %673 = vector.broadcast %672 : vector<16x1xf32> to vector<16x128xf32>
    %674 = arith.addf %670, %673 : vector<16x128xf32>
    %675 = vector.extract_strided_slice %674 {offsets = [0, 0], sizes = [8, 128], strides = [1, 1]} : vector<16x128xf32> to vector<8x128xf32>
    %676 = arith.addf %637, %675 : vector<8x128xf32>
    %677 = vector.extract_strided_slice %674 {offsets = [8, 0], sizes = [8, 128], strides = [1, 1]} : vector<16x128xf32> to vector<8x128xf32>
    %678 = arith.addf %639, %677 : vector<8x128xf32>
    %c4_i32_396 = arith.constant 4 : i32
    %679 = vector.broadcast %c4_i32_396 : i32 to vector<1x128xi32>
    %680 = arith.addi %0, %679 : vector<1x128xi32>
    %c16_i32_397 = arith.constant 16 : i32
    %681 = vector.broadcast %c16_i32_397 : i32 to vector<1x128xi32>
    %682 = arith.cmpi slt, %680, %681 : vector<1x128xi32>
    %c124_i32_398 = arith.constant 124 : i32
    %683 = tpu.dynamic_rotate %676 by %c124_i32_398 dim 1 : vector<8x128xf32>, i32 -> vector<8x128xf32>
    %cst_399 = arith.constant 0.000000e+00 : f32
    %684 = vector.shape_cast %682 : vector<1x128xi1> to vector<1x128xi1>
    %685 = vector.broadcast %684 : vector<1x128xi1> to vector<8x128xi1>
    %686 = vector.broadcast %cst_399 : f32 to vector<8x128xf32>
    %687 = arith.select %685, %683, %686 : vector<8x128xi1>, vector<8x128xf32>
    %c0_400 = arith.constant 0 : index
    %c0_401 = arith.constant 0 : index
    %688 = vector.load %arg14[%c0_400, %c0_401] : memref<24x128xf32, #tpu.memory_space<vmem>>, vector<8x128xf32>
    tpu.vector_store %arg14[%c0_400, %c0_401], %676 {strides = array<i32>} : memref<24x128xf32, #tpu.memory_space<vmem>>, vector<8x128xf32>,
    %c8_402 = arith.constant 8 : index
    %c0_403 = arith.constant 0 : index
    %689 = vector.load %arg14[%c8_402, %c0_403] : memref<24x128xf32, #tpu.memory_space<vmem>>, vector<8x128xf32>
    tpu.vector_store %arg14[%c8_402, %c0_403], %687 {strides = array<i32>} : memref<24x128xf32, #tpu.memory_space<vmem>>, vector<8x128xf32>,
    %c14 = arith.constant 14 : index
    %c0_404 = arith.constant 0 : index
    %c0_405 = arith.constant 0 : index
    %690 = vector.load %arg4[%c14, %c0_404, %c0_405] : memref<16x16x24xf32, #tpu.memory_space<vmem>>, vector<1x16x24xf32>
    %691 = vector.shape_cast %690 : vector<1x16x24xf32> to vector<16x24xf32>
    %c0_406 = arith.constant 0 : index
    %c0_407 = arith.constant 0 : index
    %692 = vector.load %arg14[%c0_406, %c0_407] : memref<24x128xf32, #tpu.memory_space<vmem>>, vector<24x128xf32>
    %cst_408 = arith.constant dense<0.000000e+00> : vector<16x128xf32>
    %693 = tpu.matmul %691, %692, %cst_408 {dimension_numbers = #tpu.dot_dimension_numbers<[1], [0], [0], [1], [0, 0, 1, 1], [], []>} : vector<16x24xf32>, vector<24x128xf32>, vector<16x128xf32> -> vector<16x128xf32>
    %c14_409 = arith.constant 14 : index
    %c0_410 = arith.constant 0 : index
    %c0_411 = arith.constant 0 : index
    %694 = vector.load %arg5[%c14_409, %c0_410, %c0_411] : memref<16x16x1xf32, #tpu.memory_space<vmem>>, vector<1x16x1xf32>
    %695 = vector.shape_cast %694 : vector<1x16x1xf32> to vector<16x1xf32>
    %696 = vector.broadcast %695 : vector<16x1xf32> to vector<16x128xf32>
    %697 = arith.addf %693, %696 : vector<16x128xf32>
    %698 = vector.extract_strided_slice %697 {offsets = [0, 0], sizes = [8, 128], strides = [1, 1]} : vector<16x128xf32> to vector<8x128xf32>
    %699 = math.tanh %698 : vector<8x128xf32>
    %700 = vector.extract_strided_slice %697 {offsets = [8, 0], sizes = [8, 128], strides = [1, 1]} : vector<16x128xf32> to vector<8x128xf32>
    %701 = arith.negf %700 : vector<8x128xf32>
    %702 = math.exp %701 : vector<8x128xf32>
    %cst_412 = arith.constant 1.000000e+00 : f32
    %703 = vector.broadcast %cst_412 : f32 to vector<8x128xf32>
    %704 = arith.addf %703, %702 : vector<8x128xf32>
    %705 = arith.divf %703, %704 : vector<8x128xf32>
    %706 = arith.mulf %699, %705 : vector<8x128xf32>
    %c14_413 = arith.constant 14 : index
    %c0_414 = arith.constant 0 : index
    %c0_415 = arith.constant 0 : index
    %707 = vector.load %arg6[%c14_413, %c0_414, %c0_415] : memref<16x16x8xf32, #tpu.memory_space<vmem>>, vector<1x16x8xf32>
    %708 = vector.shape_cast %707 : vector<1x16x8xf32> to vector<16x8xf32>
    %cst_416 = arith.constant dense<0.000000e+00> : vector<16x128xf32>
    %709 = tpu.matmul %708, %706, %cst_416 {dimension_numbers = #tpu.dot_dimension_numbers<[1], [0], [0], [1], [0, 0, 1, 1], [], []>} : vector<16x8xf32>, vector<8x128xf32>, vector<16x128xf32> -> vector<16x128xf32>
    %c14_417 = arith.constant 14 : index
    %c0_418 = arith.constant 0 : index
    %c0_419 = arith.constant 0 : index
    %710 = vector.load %arg7[%c14_417, %c0_418, %c0_419] : memref<16x16x1xf32, #tpu.memory_space<vmem>>, vector<1x16x1xf32>
    %711 = vector.shape_cast %710 : vector<1x16x1xf32> to vector<16x1xf32>
    %712 = vector.broadcast %711 : vector<16x1xf32> to vector<16x128xf32>
    %713 = arith.addf %709, %712 : vector<16x128xf32>
    %714 = vector.extract_strided_slice %713 {offsets = [0, 0], sizes = [8, 128], strides = [1, 1]} : vector<16x128xf32> to vector<8x128xf32>
    %715 = arith.addf %676, %714 : vector<8x128xf32>
    %716 = vector.extract_strided_slice %713 {offsets = [8, 0], sizes = [8, 128], strides = [1, 1]} : vector<16x128xf32> to vector<8x128xf32>
    %717 = arith.addf %678, %716 : vector<8x128xf32>
    %c8_i32_420 = arith.constant 8 : i32
    %718 = vector.broadcast %c8_i32_420 : i32 to vector<1x128xi32>
    %719 = arith.addi %0, %718 : vector<1x128xi32>
    %c16_i32_421 = arith.constant 16 : i32
    %720 = vector.broadcast %c16_i32_421 : i32 to vector<1x128xi32>
    %721 = arith.cmpi slt, %719, %720 : vector<1x128xi32>
    %c120_i32_422 = arith.constant 120 : i32
    %722 = tpu.dynamic_rotate %715 by %c120_i32_422 dim 1 : vector<8x128xf32>, i32 -> vector<8x128xf32>
    %cst_423 = arith.constant 0.000000e+00 : f32
    %723 = vector.shape_cast %721 : vector<1x128xi1> to vector<1x128xi1>
    %724 = vector.broadcast %723 : vector<1x128xi1> to vector<8x128xi1>
    %725 = vector.broadcast %cst_423 : f32 to vector<8x128xf32>
    %726 = arith.select %724, %722, %725 : vector<8x128xi1>, vector<8x128xf32>
    %c0_424 = arith.constant 0 : index
    %c0_425 = arith.constant 0 : index
    %727 = vector.load %arg14[%c0_424, %c0_425] : memref<24x128xf32, #tpu.memory_space<vmem>>, vector<8x128xf32>
    tpu.vector_store %arg14[%c0_424, %c0_425], %715 {strides = array<i32>} : memref<24x128xf32, #tpu.memory_space<vmem>>, vector<8x128xf32>,
    %c8_426 = arith.constant 8 : index
    %c0_427 = arith.constant 0 : index
    %728 = vector.load %arg14[%c8_426, %c0_427] : memref<24x128xf32, #tpu.memory_space<vmem>>, vector<8x128xf32>
    tpu.vector_store %arg14[%c8_426, %c0_427], %726 {strides = array<i32>} : memref<24x128xf32, #tpu.memory_space<vmem>>, vector<8x128xf32>,
    %c15 = arith.constant 15 : index
    %c0_428 = arith.constant 0 : index
    %c0_429 = arith.constant 0 : index
    %729 = vector.load %arg4[%c15, %c0_428, %c0_429] : memref<16x16x24xf32, #tpu.memory_space<vmem>>, vector<1x16x24xf32>
    %730 = vector.shape_cast %729 : vector<1x16x24xf32> to vector<16x24xf32>
    %c0_430 = arith.constant 0 : index
    %c0_431 = arith.constant 0 : index
    %731 = vector.load %arg14[%c0_430, %c0_431] : memref<24x128xf32, #tpu.memory_space<vmem>>, vector<24x128xf32>
    %cst_432 = arith.constant dense<0.000000e+00> : vector<16x128xf32>
    %732 = tpu.matmul %730, %731, %cst_432 {dimension_numbers = #tpu.dot_dimension_numbers<[1], [0], [0], [1], [0, 0, 1, 1], [], []>} : vector<16x24xf32>, vector<24x128xf32>, vector<16x128xf32> -> vector<16x128xf32>
    %c15_433 = arith.constant 15 : index
    %c0_434 = arith.constant 0 : index
    %c0_435 = arith.constant 0 : index
    %733 = vector.load %arg5[%c15_433, %c0_434, %c0_435] : memref<16x16x1xf32, #tpu.memory_space<vmem>>, vector<1x16x1xf32>
    %734 = vector.shape_cast %733 : vector<1x16x1xf32> to vector<16x1xf32>
    %735 = vector.broadcast %734 : vector<16x1xf32> to vector<16x128xf32>
    %736 = arith.addf %732, %735 : vector<16x128xf32>
    %737 = vector.extract_strided_slice %736 {offsets = [0, 0], sizes = [8, 128], strides = [1, 1]} : vector<16x128xf32> to vector<8x128xf32>
    %738 = math.tanh %737 : vector<8x128xf32>
    %739 = vector.extract_strided_slice %736 {offsets = [8, 0], sizes = [8, 128], strides = [1, 1]} : vector<16x128xf32> to vector<8x128xf32>
    %740 = arith.negf %739 : vector<8x128xf32>
    %741 = math.exp %740 : vector<8x128xf32>
    %cst_436 = arith.constant 1.000000e+00 : f32
    %742 = vector.broadcast %cst_436 : f32 to vector<8x128xf32>
    %743 = arith.addf %742, %741 : vector<8x128xf32>
    %744 = arith.divf %742, %743 : vector<8x128xf32>
    %745 = arith.mulf %738, %744 : vector<8x128xf32>
    %c15_437 = arith.constant 15 : index
    %c0_438 = arith.constant 0 : index
    %c0_439 = arith.constant 0 : index
    %746 = vector.load %arg6[%c15_437, %c0_438, %c0_439] : memref<16x16x8xf32, #tpu.memory_space<vmem>>, vector<1x16x8xf32>
    %747 = vector.shape_cast %746 : vector<1x16x8xf32> to vector<16x8xf32>
    %cst_440 = arith.constant dense<0.000000e+00> : vector<16x128xf32>
    %748 = tpu.matmul %747, %745, %cst_440 {dimension_numbers = #tpu.dot_dimension_numbers<[1], [0], [0], [1], [0, 0, 1, 1], [], []>} : vector<16x8xf32>, vector<8x128xf32>, vector<16x128xf32> -> vector<16x128xf32>
    %c15_441 = arith.constant 15 : index
    %c0_442 = arith.constant 0 : index
    %c0_443 = arith.constant 0 : index
    %749 = vector.load %arg7[%c15_441, %c0_442, %c0_443] : memref<16x16x1xf32, #tpu.memory_space<vmem>>, vector<1x16x1xf32>
    %750 = vector.shape_cast %749 : vector<1x16x1xf32> to vector<16x1xf32>
    %751 = vector.broadcast %750 : vector<16x1xf32> to vector<16x128xf32>
    %752 = arith.addf %748, %751 : vector<16x128xf32>
    %753 = vector.extract_strided_slice %752 {offsets = [8, 0], sizes = [8, 128], strides = [1, 1]} : vector<16x128xf32> to vector<8x128xf32>
    %754 = arith.addf %717, %753 : vector<8x128xf32>
    %cst_444 = arith.constant 0.000000e+00 : f32
    %755 = vector.broadcast %cst_444 : f32 to vector<8x128xf32>
    %756 = arith.cmpf oge, %754, %755 : vector<8x128xf32>
    %cst_445 = arith.constant 1.000000e-01 : f32
    %757 = vector.broadcast %cst_445 : f32 to vector<8x128xf32>
    %758 = arith.mulf %757, %754 : vector<8x128xf32>
    %759 = arith.select %756, %754, %758 : vector<8x128xi1>, vector<8x128xf32>
    %c3_446 = arith.constant 3 : index
    %c0_447 = arith.constant 0 : index
    %c0_448 = arith.constant 0 : index
    %760 = vector.load %arg10[%c3_446, %c0_447, %c0_448] : memref<4x2x8xf32, #tpu.memory_space<vmem>>, vector<1x2x8xf32>
    %761 = vector.shape_cast %760 : vector<1x2x8xf32> to vector<2x8xf32>
    %cst_449 = arith.constant dense<0.000000e+00> : vector<2x128xf32>
    %762 = tpu.matmul %761, %759, %cst_449 {dimension_numbers = #tpu.dot_dimension_numbers<[1], [0], [0], [1], [0, 0, 1, 1], [], []>} : vector<2x8xf32>, vector<8x128xf32>, vector<2x128xf32> -> vector<2x128xf32>
    %c3_450 = arith.constant 3 : index
    %c0_451 = arith.constant 0 : index
    %c0_452 = arith.constant 0 : index
    %763 = vector.load %arg11[%c3_450, %c0_451, %c0_452] : memref<4x2x1xf32, #tpu.memory_space<vmem>>, vector<1x2x1xf32>
    %764 = vector.shape_cast %763 : vector<1x2x1xf32> to vector<2x1xf32>
    %765 = vector.broadcast %764 : vector<2x1xf32> to vector<2x128xf32>
    %766 = arith.addf %762, %765 : vector<2x128xf32>
    %767 = vector.extract_strided_slice %766 {offsets = [0, 0], sizes = [1, 128], strides = [1, 1]} : vector<2x128xf32> to vector<1x128xf32>
    %768 = vector.extract_strided_slice %766 {offsets = [1, 0], sizes = [1, 128], strides = [1, 1]} : vector<2x128xf32> to vector<1x128xf32>
    %cst_453 = arith.constant 0.000000e+00 : f32
    %769 = vector.broadcast %cst_453 : f32 to vector<1x128xf32>
    %770 = arith.select %2, %768, %769 : vector<1x128xi1>, vector<1x128xf32>
    %771 = arith.addf %578, %770 : vector<1x128xf32>
    %772 = math.exp %770 : vector<1x128xf32>
    %773 = arith.mulf %583, %772 : vector<1x128xf32>
    %774 = arith.addf %773, %767 : vector<1x128xf32>
    %cst_454 = arith.constant 0.000000e+00 : f32
    %775 = vector.broadcast %cst_454 : f32 to vector<1x128xf32>
    %776 = arith.select %2, %774, %775 : vector<1x128xi1>, vector<1x128xf32>
    %c0_455 = arith.constant 0 : index
    %c0_456 = arith.constant 0 : index
    %c0_457 = arith.constant 0 : index
    %777 = vector.load %arg12[%c0_455, %c0_456, %c0_457] : memref<1x1x128xf32, #tpu.memory_space<vmem>>, vector<1x1x128xf32>
    %778 = vector.shape_cast %777 : vector<1x1x128xf32> to vector<1x128xf32>
    %779 = vector.shape_cast %771 : vector<1x128xf32> to vector<1x1x128xf32>
    tpu.vector_store %arg12[%c0_455, %c0_456, %c0_457], %779 {strides = array<i32>} : memref<1x1x128xf32, #tpu.memory_space<vmem>>, vector<1x1x128xf32>,
    %c0_458 = arith.constant 0 : index
    %c0_459 = arith.constant 0 : index
    %c0_460 = arith.constant 0 : index
    %780 = vector.load %arg13[%c0_458, %c0_459, %c0_460] : memref<1x1x128xf32, #tpu.memory_space<vmem>>, vector<1x1x128xf32>
    %781 = vector.shape_cast %780 : vector<1x1x128xf32> to vector<1x128xf32>
    %782 = vector.shape_cast %776 : vector<1x128xf32> to vector<1x1x128xf32>
    tpu.vector_store %arg13[%c0_458, %c0_459, %c0_460], %782 {strides = array<i32>} : memref<1x1x128xf32, #tpu.memory_space<vmem>>, vector<1x1x128xf32>,
    return
  }
  func.func @transform_0(%arg0: i32) -> (i32, i32, i32) {
    %c0_i32 = arith.constant 0 : i32
    %c0_i32_0 = arith.constant 0 : i32
    %c0_i32_1 = arith.constant 0 : i32
    return %arg0, %c0_i32, %c0_i32_0 : i32, i32, i32
  }
  func.func @transform_1(%arg0: i32) -> (i32, i32, i32) {
    %c0_i32 = arith.constant 0 : i32
    %c0_i32_0 = arith.constant 0 : i32
    %c0_i32_1 = arith.constant 0 : i32
    return %arg0, %c0_i32, %c0_i32_0 : i32, i32, i32
  }
  func.func @transform_2(%arg0: i32) -> (i32, i32, i32) {
    %c0_i32 = arith.constant 0 : i32
    %c0_i32_0 = arith.constant 0 : i32
    %c0_i32_1 = arith.constant 0 : i32
    %c0_i32_2 = arith.constant 0 : i32
    return %c0_i32, %c0_i32_0, %c0_i32_1 : i32, i32, i32
  }
  func.func @transform_3(%arg0: i32) -> (i32, i32, i32) {
    %c0_i32 = arith.constant 0 : i32
    %c0_i32_0 = arith.constant 0 : i32
    %c0_i32_1 = arith.constant 0 : i32
    %c0_i32_2 = arith.constant 0 : i32
    return %c0_i32, %c0_i32_0, %c0_i32_1 : i32, i32, i32
  }
  func.func @transform_4(%arg0: i32) -> (i32, i32, i32) {
    %c0_i32 = arith.constant 0 : i32
    %c0_i32_0 = arith.constant 0 : i32
    %c0_i32_1 = arith.constant 0 : i32
    %c0_i32_2 = arith.constant 0 : i32
    return %c0_i32, %c0_i32_0, %c0_i32_1 : i32, i32, i32
  }
  func.func @transform_5(%arg0: i32) -> (i32, i32, i32) {
    %c0_i32 = arith.constant 0 : i32
    %c0_i32_0 = arith.constant 0 : i32
    %c0_i32_1 = arith.constant 0 : i32
    %c0_i32_2 = arith.constant 0 : i32
    return %c0_i32, %c0_i32_0, %c0_i32_1 : i32, i32, i32
  }
  func.func @transform_6(%arg0: i32) -> (i32, i32, i32) {
    %c0_i32 = arith.constant 0 : i32
    %c0_i32_0 = arith.constant 0 : i32
    %c0_i32_1 = arith.constant 0 : i32
    %c0_i32_2 = arith.constant 0 : i32
    return %c0_i32, %c0_i32_0, %c0_i32_1 : i32, i32, i32
  }
  func.func @transform_7(%arg0: i32) -> (i32, i32, i32) {
    %c0_i32 = arith.constant 0 : i32
    %c0_i32_0 = arith.constant 0 : i32
    %c0_i32_1 = arith.constant 0 : i32
    %c0_i32_2 = arith.constant 0 : i32
    return %c0_i32, %c0_i32_0, %c0_i32_1 : i32, i32, i32
  }
  func.func @transform_8(%arg0: i32) -> (i32, i32, i32) {
    %c0_i32 = arith.constant 0 : i32
    %c0_i32_0 = arith.constant 0 : i32
    %c0_i32_1 = arith.constant 0 : i32
    %c0_i32_2 = arith.constant 0 : i32
    return %c0_i32, %c0_i32_0, %c0_i32_1 : i32, i32, i32
  }
  func.func @transform_9(%arg0: i32) -> (i32, i32, i32) {
    %c0_i32 = arith.constant 0 : i32
    %c0_i32_0 = arith.constant 0 : i32
    %c0_i32_1 = arith.constant 0 : i32
    %c0_i32_2 = arith.constant 0 : i32
    return %c0_i32, %c0_i32_0, %c0_i32_1 : i32, i32, i32
  }
  func.func @transform_10(%arg0: i32) -> (i32, i32, i32) {
    %c0_i32 = arith.constant 0 : i32
    %c0_i32_0 = arith.constant 0 : i32
    %c0_i32_1 = arith.constant 0 : i32
    %c0_i32_2 = arith.constant 0 : i32
    return %c0_i32, %c0_i32_0, %c0_i32_1 : i32, i32, i32
  }
  func.func @transform_11(%arg0: i32) -> (i32, i32, i32) {
    %c0_i32 = arith.constant 0 : i32
    %c0_i32_0 = arith.constant 0 : i32
    %c0_i32_1 = arith.constant 0 : i32
    return %arg0, %c0_i32, %c0_i32_0 : i32, i32, i32
  }
  func.func @transform_12(%arg0: i32) -> (i32, i32, i32) {
    %c0_i32 = arith.constant 0 : i32
    %c0_i32_0 = arith.constant 0 : i32
    %c0_i32_1 = arith.constant 0 : i32
    return %arg0, %c0_i32, %c0_i32_0 : i32, i32, i32
  }
}

</mosaic_0001>

<llo_original>
// kernel: tpu_custom_call.1
$region0: #{tpu_custom_call.1}
  #allocation0 [shape = 'u32[]', space=smem, size = 0x4, offset = 0x4, fixed_abs, tag = 'smem constant byte address 0x4 - core index']
  #allocation1 [shape = 'u32[72,128]{1,0:T(1,128)}', space=vmem, size = 0x9000, scoped, tag = 'internal scratch']
  #allocation2 [shape = 'f32[24,128]{1,0:T(8,128)}', space=vmem, size = 0x3000, scoped, tag = 'scratch operand']
  %s0 = inlined_call_operand.vmem [shape: f32[2,1,128], index: 0, kind: input, shape index: {}]
  %s1 = inlined_call_operand.vmem [shape: f32[2,8,128], index: 1, kind: input, shape index: {}]
  %s2 = inlined_call_operand.vmem [shape: f32[4,8,2], index: 2, kind: input, shape index: {}]
  %s3 = inlined_call_operand.vmem [shape: f32[16,16,24], index: 3, kind: input, shape index: {}]
  %s4 = inlined_call_operand.vmem [shape: f32[16,16,1], index: 4, kind: input, shape index: {}]
  %s5 = inlined_call_operand.vmem [shape: f32[16,16,8], index: 5, kind: input, shape index: {}]
  %s6 = inlined_call_operand.vmem [shape: f32[16,16,1], index: 6, kind: input, shape index: {}]
  %s7 = inlined_call_operand.vmem [shape: f32[2,8,8], index: 7, kind: input, shape index: {}]
  %s8 = inlined_call_operand.vmem [shape: f32[2,8,1], index: 8, kind: input, shape index: {}]
  %s9 = inlined_call_operand.vmem [shape: f32[4,2,8], index: 9, kind: input, shape index: {}]
  %s10 = inlined_call_operand.vmem [shape: f32[4,2,1], index: 10, kind: input, shape index: {}]
  %s11 = inlined_call_operand.hbm [shape: f32[2,1,128], index: 11, kind: output, shape index: {0}]
  %s12 = inlined_call_operand.hbm [shape: f32[2,1,128], index: 12, kind: output, shape index: {1}]
  %13 = xla_tuple %s11, %s12
  %s14 = sld [smem:[#allocation0]]
  $region85: #{tpu_custom_call.1} parent=0
    _
  %s16 = ssub.s32 1, %s14
  %s17 = scalar_select 0, %s16, %s14
  $region1: #{tpu_custom_call.1} parent=0
    #allocation3 [shape = 'u8[1024]{0}', space=vmem, size = 0x400, scoped, tag = 'output window, operand 0']
    #allocation4 [shape = 's32[2]{0}', space=sflag, size = 0x8, scoped, tag = 'scoped memory for tpu_custom_call.1']
    #allocation5 [shape = 'u8[1024]{0}', space=vmem, size = 0x400, scoped, tag = 'output window, operand 1']
    #allocation6 [shape = 's32[2]{0}', space=sflag, size = 0x8, scoped, tag = 'scoped memory for tpu_custom_call.1']
    %18 = vsyncpa [#allocation4], 0
    %s19 = scalar_lea.sflag [#allocation4], 1
    %20 = vsyncpa %s19, 0
    %21 = vsyncpa [#allocation6], 0
    %s22 = scalar_lea.sflag [#allocation6], 1
    %23 = vsyncpa %s22, 0
    loop: start=0, step=1, limit=4
    $region2: #{tpu_custom_call.1} parent=1 // loop_pre_header
      _
    $region3: #{tpu_custom_call.1} parent=1 // loop_header
      %s25 = sphi 0, %s29
      %p26 = scmp.ge.s32.totalorder %s25, 4
      %s35 = sphi 0, %s37
      %s38 = sphi 0, %s35
      %s39 = sphi 0, %s38
      %s55 = sphi 0, %s39
      %s61 = sphi 0, %s63
      %s64 = sphi 0, %s61
      %s65 = sphi 0, %s64
      %s81 = sphi 0, %s65
      %s85 = sphi 0, %s85
      %s87 = sphi 0, %s85
      %s88 = sphi 0, %s87
      %s102 = sphi 0, %s88
      %s106 = sphi 0, %s106
      %s108 = sphi 0, %s106
      %s109 = sphi 0, %s108
      %s123 = sphi 0, %s109
      %s127 = sphi 0, %s127
      %s129 = sphi 0, %s127
      %s130 = sphi 0, %s129
      %s144 = sphi 0, %s130
      %s148 = sphi 0, %s148
      %s150 = sphi 0, %s148
      %s151 = sphi 0, %s150
      %s165 = sphi 0, %s151
      %s169 = sphi 0, %s169
      %s171 = sphi 0, %s169
      %s172 = sphi 0, %s171
      %s186 = sphi 0, %s172
      %s190 = sphi 0, %s190
      %s192 = sphi 0, %s190
      %s193 = sphi 0, %s192
      %s207 = sphi 0, %s193
      %s211 = sphi 0, %s211
      %s213 = sphi 0, %s211
      %s214 = sphi 0, %s213
      %s228 = sphi 0, %s214
      %s232 = sphi 0, %s232
      %s234 = sphi 0, %s232
      %s235 = sphi 0, %s234
      %s249 = sphi 0, %s235
      %s253 = sphi 0, %s253
      %s255 = sphi 0, %s253
      %s256 = sphi 0, %s255
      %s270 = sphi 0, %s256
      %s276 = sphi 0, %s278
      %s279 = sphi 0, %s276
      %s280 = sphi 0, %s279
      %s296 = sphi 0, %s280
      %s302 = sphi 0, %s304
      %s305 = sphi 0, %s302
      %s306 = sphi 0, %s305
      %s322 = sphi 0, %s306
    $region4: #{tpu_custom_call.1} parent=1 // loop_header_branch
      %28 = sbr.rel (%p26) target = $region8
    $region5: #{tpu_custom_call.1} parent=1 // loop_body
      %s30 = ssub.s32 %s25, 1
      %s31 = ssub.s32 %s25, 2
      %s32 = sadd.s32 %s25, 1
      %s33 = ssub.s32 %s25, %s32
      %p34 = scmp.eq.s32.totalorder %s33, 0
      %s36 = sadd.s32 %s35, 1
      %s37 = scalar_select %p34, %s35, %s36
      %p40 = pneg %p34
      %p41 = scmp.eq.s32.totalorder %s25, 1
      %p42 = por %p40, %p41
      %p43 = scmp.ne.s32.totalorder %s35, %s38
      %p44 = scmp.eq.s32.totalorder %s25, 0
      %p45 = por %p43, %p44
      %p46 = scmp.ne.s32.totalorder %s35, %s38
      %p47 = scmp.eq.s32.totalorder %s30, 1
      %p48 = por %p46, %p47
      %p49 = scmp.ne.s32.totalorder %s38, %s39
      %p50 = scmp.eq.s32.totalorder %s30, 0
      %p51 = por %p49, %p50
      %p52 = scmp.ne.s32.totalorder %s38, %s39
      %p53 = scmp.eq.s32.totalorder %s31, 1
      %p54 = por %p52, %p53
      %p56 = scmp.ne.s32.totalorder %s39, %s55
      %p57 = scmp.eq.s32.totalorder %s31, 0
      %p58 = por %p56, %p57
      %s59 = ssub.s32 %s25, %s32
      %p60 = scmp.eq.s32.totalorder %s59, 0
      %s62 = sadd.s32 %s61, 1
      %s63 = scalar_select %p60, %s61, %s62
      %p66 = pneg %p60
      %p67 = scmp.eq.s32.totalorder %s25, 1
      %p68 = por %p66, %p67
      %p69 = scmp.ne.s32.totalorder %s61, %s64
      %p70 = scmp.eq.s32.totalorder %s25, 0
      %p71 = por %p69, %p70
      %p72 = scmp.ne.s32.totalorder %s61, %s64
      %p73 = scmp.eq.s32.totalorder %s30, 1
      %p74 = por %p72, %p73
      %p75 = scmp.ne.s32.totalorder %s64, %s65
      %p76 = scmp.eq.s32.totalorder %s30, 0
      %p77 = por %p75, %p76
      %p78 = scmp.ne.s32.totalorder %s64, %s65
      %p79 = scmp.eq.s32.totalorder %s31, 1
      %p80 = por %p78, %p79
      %p82 = scmp.ne.s32.totalorder %s65, %s81
      %p83 = scmp.eq.s32.totalorder %s31, 0
      %p84 = por %p82, %p83
      %s86 = sadd.s32 %s85, 1
      %p89 = scmp.eq.s32.totalorder %s25, 1
      %p90 = scmp.ne.s32.totalorder %s85, %s87
      %p91 = scmp.eq.s32.totalorder %s25, 0
      %p92 = por %p90, %p91
      %p93 = scmp.ne.s32.totalorder %s85, %s87
      %p94 = scmp.eq.s32.totalorder %s30, 1
      %p95 = por %p93, %p94
      %p96 = scmp.ne.s32.totalorder %s87, %s88
      %p97 = scmp.eq.s32.totalorder %s30, 0
      %p98 = por %p96, %p97
      %p99 = scmp.ne.s32.totalorder %s87, %s88
      %p100 = scmp.eq.s32.totalorder %s31, 1
      %p101 = por %p99, %p100
      %p103 = scmp.ne.s32.totalorder %s88, %s102
      %p104 = scmp.eq.s32.totalorder %s31, 0
      %p105 = por %p103, %p104
      %s107 = sadd.s32 %s106, 1
      %p110 = scmp.eq.s32.totalorder %s25, 1
      %p111 = scmp.ne.s32.totalorder %s106, %s108
      %p112 = scmp.eq.s32.totalorder %s25, 0
      %p113 = por %p111, %p112
      %p114 = scmp.ne.s32.totalorder %s106, %s108
      %p115 = scmp.eq.s32.totalorder %s30, 1
      %p116 = por %p114, %p115
      %p117 = scmp.ne.s32.totalorder %s108, %s109
      %p118 = scmp.eq.s32.totalorder %s30, 0
      %p119 = por %p117, %p118
      %p120 = scmp.ne.s32.totalorder %s108, %s109
      %p121 = scmp.eq.s32.totalorder %s31, 1
      %p122 = por %p120, %p121
      %p124 = scmp.ne.s32.totalorder %s109, %s123
      %p125 = scmp.eq.s32.totalorder %s31, 0
      %p126 = por %p124, %p125
      %s128 = sadd.s32 %s127, 1
      %p131 = scmp.eq.s32.totalorder %s25, 1
      %p132 = scmp.ne.s32.totalorder %s127, %s129
      %p133 = scmp.eq.s32.totalorder %s25, 0
      %p134 = por %p132, %p133
      %p135 = scmp.ne.s32.totalorder %s127, %s129
      %p136 = scmp.eq.s32.totalorder %s30, 1
      %p137 = por %p135, %p136
      %p138 = scmp.ne.s32.totalorder %s129, %s130
      %p139 = scmp.eq.s32.totalorder %s30, 0
      %p140 = por %p138, %p139
      %p141 = scmp.ne.s32.totalorder %s129, %s130
      %p142 = scmp.eq.s32.totalorder %s31, 1
      %p143 = por %p141, %p142
      %p145 = scmp.ne.s32.totalorder %s130, %s144
      %p146 = scmp.eq.s32.totalorder %s31, 0
      %p147 = por %p145, %p146
      %s149 = sadd.s32 %s148, 1
      %p152 = scmp.eq.s32.totalorder %s25, 1
      %p153 = scmp.ne.s32.totalorder %s148, %s150
      %p154 = scmp.eq.s32.totalorder %s25, 0
      %p155 = por %p153, %p154
      %p156 = scmp.ne.s32.totalorder %s148, %s150
      %p157 = scmp.eq.s32.totalorder %s30, 1
      %p158 = por %p156, %p157
      %p159 = scmp.ne.s32.totalorder %s150, %s151
      %p160 = scmp.eq.s32.totalorder %s30, 0
      %p161 = por %p159, %p160
      %p162 = scmp.ne.s32.totalorder %s150, %s151
      %p163 = scmp.eq.s32.totalorder %s31, 1
      %p164 = por %p162, %p163
      %p166 = scmp.ne.s32.totalorder %s151, %s165
      %p167 = scmp.eq.s32.totalorder %s31, 0
      %p168 = por %p166, %p167
      %s170 = sadd.s32 %s169, 1
      %p173 = scmp.eq.s32.totalorder %s25, 1
      %p174 = scmp.ne.s32.totalorder %s169, %s171
      %p175 = scmp.eq.s32.totalorder %s25, 0
      %p176 = por %p174, %p175
      %p177 = scmp.ne.s32.totalorder %s169, %s171
      %p178 = scmp.eq.s32.totalorder %s30, 1
      %p179 = por %p177, %p178
      %p180 = scmp.ne.s32.totalorder %s171, %s172
      %p181 = scmp.eq.s32.totalorder %s30, 0
      %p182 = por %p180, %p181
      %p183 = scmp.ne.s32.totalorder %s171, %s172
      %p184 = scmp.eq.s32.totalorder %s31, 1
      %p185 = por %p183, %p184
      %p187 = scmp.ne.s32.totalorder %s172, %s186
      %p188 = scmp.eq.s32.totalorder %s31, 0
      %p189 = por %p187, %p188
      %s191 = sadd.s32 %s190, 1
      %p194 = scmp.eq.s32.totalorder %s25, 1
      %p195 = scmp.ne.s32.totalorder %s190, %s192
      %p196 = scmp.eq.s32.totalorder %s25, 0
      %p197 = por %p195, %p196
      %p198 = scmp.ne.s32.totalorder %s190, %s192
      %p199 = scmp.eq.s32.totalorder %s30, 1
      %p200 = por %p198, %p199
      %p201 = scmp.ne.s32.totalorder %s192, %s193
      %p202 = scmp.eq.s32.totalorder %s30, 0
      %p203 = por %p201, %p202
      %p204 = scmp.ne.s32.totalorder %s192, %s193
      %p205 = scmp.eq.s32.totalorder %s31, 1
      %p206 = por %p204, %p205
      %p208 = scmp.ne.s32.totalorder %s193, %s207
      %p209 = scmp.eq.s32.totalorder %s31, 0
      %p210 = por %p208, %p209
      %s212 = sadd.s32 %s211, 1
      %p215 = scmp.eq.s32.totalorder %s25, 1
      %p216 = scmp.ne.s32.totalorder %s211, %s213
      %p217 = scmp.eq.s32.totalorder %s25, 0
      %p218 = por %p216, %p217
      %p219 = scmp.ne.s32.totalorder %s211, %s213
      %p220 = scmp.eq.s32.totalorder %s30, 1
      %p221 = por %p219, %p220
      %p222 = scmp.ne.s32.totalorder %s213, %s214
      %p223 = scmp.eq.s32.totalorder %s30, 0
      %p224 = por %p222, %p223
      %p225 = scmp.ne.s32.totalorder %s213, %s214
      %p226 = scmp.eq.s32.totalorder %s31, 1
      %p227 = por %p225, %p226
      %p229 = scmp.ne.s32.totalorder %s214, %s228
      %p230 = scmp.eq.s32.totalorder %s31, 0
      %p231 = por %p229, %p230
      %s233 = sadd.s32 %s232, 1
      %p236 = scmp.eq.s32.totalorder %s25, 1
      %p237 = scmp.ne.s32.totalorder %s232, %s234
      %p238 = scmp.eq.s32.totalorder %s25, 0
      %p239 = por %p237, %p238
      %p240 = scmp.ne.s32.totalorder %s232, %s234
      %p241 = scmp.eq.s32.totalorder %s30, 1
      %p242 = por %p240, %p241
      %p243 = scmp.ne.s32.totalorder %s234, %s235
      %p244 = scmp.eq.s32.totalorder %s30, 0
      %p245 = por %p243, %p244
      %p246 = scmp.ne.s32.totalorder %s234, %s235
      %p247 = scmp.eq.s32.totalorder %s31, 1
      %p248 = por %p246, %p247
      %p250 = scmp.ne.s32.totalorder %s235, %s249
      %p251 = scmp.eq.s32.totalorder %s31, 0
      %p252 = por %p250, %p251
      %s254 = sadd.s32 %s253, 1
      %p257 = scmp.eq.s32.totalorder %s25, 1
      %p258 = scmp.ne.s32.totalorder %s253, %s255
      %p259 = scmp.eq.s32.totalorder %s25, 0
      %p260 = por %p258, %p259
      %p261 = scmp.ne.s32.totalorder %s253, %s255
      %p262 = scmp.eq.s32.totalorder %s30, 1
      %p263 = por %p261, %p262
      %p264 = scmp.ne.s32.totalorder %s255, %s256
      %p265 = scmp.eq.s32.totalorder %s30, 0
      %p266 = por %p264, %p265
      %p267 = scmp.ne.s32.totalorder %s255, %s256
      %p268 = scmp.eq.s32.totalorder %s31, 1
      %p269 = por %p267, %p268
      %p271 = scmp.ne.s32.totalorder %s256, %s270
      %p272 = scmp.eq.s32.totalorder %s31, 0
      %p273 = por %p271, %p272
      %s274 = ssub.s32 %s25, %s32
      %p275 = scmp.eq.s32.totalorder %s274, 0
      %s277 = sadd.s32 %s276, 1
      %s278 = scalar_select %p275, %s276, %s277
      %p281 = pneg %p275
      %p282 = scmp.eq.s32.totalorder %s25, 1
      %p283 = por %p281, %p282
      %p284 = scmp.ne.s32.totalorder %s276, %s279
      %p285 = scmp.eq.s32.totalorder %s25, 0
      %p286 = por %p284, %p285
      %p287 = scmp.ne.s32.totalorder %s276, %s279
      %p288 = scmp.eq.s32.totalorder %s30, 1
      %p289 = por %p287, %p288
      %p290 = scmp.ne.s32.totalorder %s279, %s280
      %p291 = scmp.eq.s32.totalorder %s30, 0
      %p292 = por %p290, %p291
      %p293 = scmp.ne.s32.totalorder %s279, %s280
      %p294 = scmp.eq.s32.totalorder %s31, 1
      %p295 = por %p293, %p294
      %p297 = scmp.ne.s32.totalorder %s280, %s296
      %p298 = scmp.eq.s32.totalorder %s31, 0
      %p299 = por %p297, %p298
      %s300 = ssub.s32 %s25, %s32
      %p301 = scmp.eq.s32.totalorder %s300, 0
      %s303 = sadd.s32 %s302, 1
      %s304 = scalar_select %p301, %s302, %s303
      %p307 = pneg %p301
      %p308 = scmp.eq.s32.totalorder %s25, 1
      %p309 = por %p307, %p308
      %p310 = scmp.ne.s32.totalorder %s302, %s305
      %p311 = scmp.eq.s32.totalorder %s25, 0
      %p312 = por %p310, %p311
      %p313 = scmp.ne.s32.totalorder %s302, %s305
      %p314 = scmp.eq.s32.totalorder %s30, 1
      %p315 = por %p313, %p314
      %p316 = scmp.ne.s32.totalorder %s305, %s306
      %p317 = scmp.eq.s32.totalorder %s30, 0
      %p318 = por %p316, %p317
      %p319 = scmp.ne.s32.totalorder %s305, %s306
      %p320 = scmp.eq.s32.totalorder %s31, 1
      %p321 = por %p319, %p320
      %p323 = scmp.ne.s32.totalorder %s306, %s322
      %p324 = scmp.eq.s32.totalorder %s31, 0
      %p325 = por %p323, %p324
      %p326 = scmp.le.s32.totalorder 1, %s25
      %p327 = scmp.lt.s32.totalorder %s25, 3
      %p328 = pnand %p326, %p327
      %p329 = pneg %p328
      // Predicated region
      $region9: #{tpu_custom_call.1} parent=5 // pred_check
        _
      $region10: #{tpu_custom_call.1} parent=5 // pred_check_branch
        %331 = sbr.rel (%p328) target = $region12
      $region11: #{tpu_custom_call.1} parent=5 // pred_region
        %s332 = ssub.s32 %s25, 1
        // Predicated region
        $region13: #{tpu_custom_call.1} parent=11 // pred_check
          %p333 = pneg %p98
        $region14: #{tpu_custom_call.1} parent=11 // pred_check_branch
          %335 = sbr.rel (%p333) target = $region16
        $region15: #{tpu_custom_call.1} parent=11 // pred_region
          _
        $region16: #{tpu_custom_call.1} parent=11 // pred_fallthru
          _
        // Predicated region
        $region17: #{tpu_custom_call.1} parent=11 // pred_check
          %p336 = pneg %p119
        $region18: #{tpu_custom_call.1} parent=11 // pred_check_branch
          %338 = sbr.rel (%p336) target = $region20
        $region19: #{tpu_custom_call.1} parent=11 // pred_region
          _
        $region20: #{tpu_custom_call.1} parent=11 // pred_fallthru
          _
        // Predicated region
        $region21: #{tpu_custom_call.1} parent=11 // pred_check
          %p339 = pneg %p140
        $region22: #{tpu_custom_call.1} parent=11 // pred_check_branch
          %341 = sbr.rel (%p339) target = $region24
        $region23: #{tpu_custom_call.1} parent=11 // pred_region
          _
        $region24: #{tpu_custom_call.1} parent=11 // pred_fallthru
          _
        // Predicated region
        $region25: #{tpu_custom_call.1} parent=11 // pred_check
          %p342 = pneg %p161
        $region26: #{tpu_custom_call.1} parent=11 // pred_check_branch
          %344 = sbr.rel (%p342) target = $region28
        $region27: #{tpu_custom_call.1} parent=11 // pred_region
          _
        $region28: #{tpu_custom_call.1} parent=11 // pred_fallthru
          _
        // Predicated region
        $region29: #{tpu_custom_call.1} parent=11 // pred_check
          %p345 = pneg %p182
        $region30: #{tpu_custom_call.1} parent=11 // pred_check_branch
          %347 = sbr.rel (%p345) target = $region32
        $region31: #{tpu_custom_call.1} parent=11 // pred_region
          _
        $region32: #{tpu_custom_call.1} parent=11 // pred_fallthru
          _
        // Predicated region
        $region33: #{tpu_custom_call.1} parent=11 // pred_check
          %p348 = pneg %p203
        $region34: #{tpu_custom_call.1} parent=11 // pred_check_branch
          %350 = sbr.rel (%p348) target = $region36
        $region35: #{tpu_custom_call.1} parent=11 // pred_region
          _
        $region36: #{tpu_custom_call.1} parent=11 // pred_fallthru
          _
        // Predicated region
        $region37: #{tpu_custom_call.1} parent=11 // pred_check
          %p351 = pneg %p224
        $region38: #{tpu_custom_call.1} parent=11 // pred_check_branch
          %353 = sbr.rel (%p351) target = $region40
        $region39: #{tpu_custom_call.1} parent=11 // pred_region
          _
        $region40: #{tpu_custom_call.1} parent=11 // pred_fallthru
          _
        // Predicated region
        $region41: #{tpu_custom_call.1} parent=11 // pred_check
          %p354 = pneg %p245
        $region42: #{tpu_custom_call.1} parent=11 // pred_check_branch
          %356 = sbr.rel (%p354) target = $region44
        $region43: #{tpu_custom_call.1} parent=11 // pred_region
          _
        $region44: #{tpu_custom_call.1} parent=11 // pred_fallthru
          _
        // Predicated region
        $region45: #{tpu_custom_call.1} parent=11 // pred_check
          %p357 = pneg %p266
        $region46: #{tpu_custom_call.1} parent=11 // pred_check_branch
          %359 = sbr.rel (%p357) target = $region48
        $region47: #{tpu_custom_call.1} parent=11 // pred_region
          _
        $region48: #{tpu_custom_call.1} parent=11 // pred_fallthru
          _
      $region12: #{tpu_custom_call.1} parent=5 // pred_fallthru
        _
      %p360 = scmp.lt.s32.totalorder %s25, 2
      // Predicated region
      $region49: #{tpu_custom_call.1} parent=5 // pred_check
        %p361 = pneg %p360
      $region50: #{tpu_custom_call.1} parent=5 // pred_check_branch
        %363 = sbr.rel (%p361) target = $region52
      $region51: #{tpu_custom_call.1} parent=5 // pred_region
        // Predicated region
        $region53: #{tpu_custom_call.1} parent=51 // pred_check
          %p364 = pneg %p45
        $region54: #{tpu_custom_call.1} parent=51 // pred_check_branch
          %366 = sbr.rel (%p364) target = $region56
        $region55: #{tpu_custom_call.1} parent=51 // pred_region
          %p367 = scmp.lt.s32.totalorder %s25, 1
          %s368 = scalar_select %p367, %s25, 1
          %s369 = scalar_lea.vmem %s0, %s368
        $region56: #{tpu_custom_call.1} parent=51 // pred_fallthru
          _
        // Predicated region
        $region57: #{tpu_custom_call.1} parent=51 // pred_check
          %p370 = pneg %p71
        $region58: #{tpu_custom_call.1} parent=51 // pred_check_branch
          %372 = sbr.rel (%p370) target = $region60
        $region59: #{tpu_custom_call.1} parent=51 // pred_region
          %p373 = scmp.lt.s32.totalorder %s25, 1
          %s374 = scalar_select %p373, %s25, 1
          %s375 = smul.addr %s374, 8
          %s376 = scalar_lea.vmem %s1, %s375
        $region60: #{tpu_custom_call.1} parent=51 // pred_fallthru
          _
      $region52: #{tpu_custom_call.1} parent=5 // pred_fallthru
        _
      %p377 = scmp.le.s32.totalorder 1, %s25
      %p378 = scmp.lt.s32.totalorder %s25, 3
      %p379 = pnand %p377, %p378
      %p380 = pneg %p379
      // Predicated region
      $region61: #{tpu_custom_call.1} parent=5 // pred_check
        _
      $region62: #{tpu_custom_call.1} parent=5 // pred_check_branch
        %382 = sbr.rel (%p379) target = $region64
      $region63: #{tpu_custom_call.1} parent=5 // pred_region
        %s383 = ssub.s32 %s25, 1
        %p384 = scmp.lt.s32.totalorder %s30, 1
        %s385 = scalar_select %p384, %s30, 1
        %s386 = scalar_lea.vmem %s0, %s385
        %p387 = pneg %p51
        %p388 = pneg %p48
        %p389 = scmp.lt.s32.totalorder %s30, 1
        %s390 = scalar_select %p389, %s30, 1
        %s391 = smul.addr %s390, 8
        %s392 = scalar_lea.vmem %s1, %s391
        %p393 = pneg %p77
        %p394 = pneg %p74
        %p395 = pneg %p98
        %p396 = pneg %p95
        %p397 = pneg %p119
        %p398 = pneg %p116
        %p399 = pneg %p140
        %p400 = pneg %p137
        %p401 = pneg %p161
        %p402 = pneg %p158
        %p403 = pneg %p182
        %p404 = pneg %p179
        %p405 = pneg %p203
        %p406 = pneg %p200
        %p407 = pneg %p224
        %p408 = pneg %p221
        %p409 = pneg %p245
        %p410 = pneg %p242
        %p411 = pneg %p266
        %p412 = pneg %p263
        %p413 = pneg %p292
        %p414 = pneg %p289
        %s415 = sand.u32 %s279, 1
        %s416 = scalar_lea.sflag [#allocation4], %s415
        %s417 = sand.u32 %s279, 1
        %s418 = scalar_lea.vmem [#allocation3], %s417
        %p419 = pneg %p318
        %p420 = pneg %p315
        %s421 = sand.u32 %s305, 1
        %s422 = scalar_lea.sflag [#allocation6], %s421
        %s423 = sand.u32 %s305, 1
        %s424 = scalar_lea.vmem [#allocation5], %s423
        %p425 = scmp.lt.s32.totalorder %s30, 1
        %s426 = scalar_select %p425, %s30, 1
        %s427 = scalar_lea.vmem %s0, %s426
        %p428 = scmp.lt.s32.totalorder %s30, 1
        %s429 = scalar_select %p428, %s30, 1
        %s430 = smul.addr %s429, 8
        %s431 = scalar_lea.vmem %s1, %s430
        %v432 = vlaneseq
        %v433 = vand.u32 %v432, 127
        %vm434 = vcmp.lt.s32.totalorder %v433, 16
        %v435 = vld [vmem:[%s431] sm:$0xff]
        %v436 = vld [vmem:[%s427] sm:$0x1]
        %437 = vst [vmem:[#allocation2 + $0x10] sm:$0xff] %v435
        %v438 = vld [vmem:[%s2] sm:$0xff]
        %440 = vset.pattern.permute.xlu0 0
        %441 = vperm.xlu0 %440, %v438
        %v442 = vpop.permute.xlu0 %441
        %v445 = vperm.slane %v436, 0
        %v447 = vmul.f32 %v442, %v445
        %448 = vset.pattern.permute.xlu0 1
        %449 = vperm.xlu0 %448, %v438
        %v450 = vpop.permute.xlu0 %449
        %v452 = vadd.f32 %v447, %v450
        %vm453 = vcmp.gt.s32.totalorder %v433, 0
        %454 = vrot.lane.b32.xlu0 %v452, 1
        %v455 = vpop.permute.xlu0 %454
        %v456 = vsel %vm453, 1, 0
        %vm457 = vcmp.eq.s32.totalorder %v456, 1
        %v458 = vsel %vm457, %v455, %v452
        %vm459 = vcmp.ge.s32.totalorder %v433, 1
        %460 = vrot.lane.b32.xlu0 %v458, 1
        %v461 = vpop.permute.xlu0 %460
        %v462 = vsel %vm459, 1, 0
        %vm463 = vcmp.eq.s32.totalorder %v462, 1
        %v464 = vsel %vm463, %v461, 0.0
        %465 = vst [vmem:[#allocation2] sm:$0xff] %v464
        %466 = vst [vmem:[#allocation2 + $0x8] sm:$0xff] %v458
        %v467 = vld [vmem:[%s3] sm:$0xff]
        %v468 = vld [vmem:[%s3 + $0x8] sm:$0xff]
        %v469 = vld [vmem:[#allocation2] sm:$0xff]
        %v470 = vld [vmem:[#allocation2 + $0x8] sm:$0xff]
        %v471 = vld [vmem:[#allocation2 + $0x10] sm:$0xff]
        %v472 = vld [vmem:[%s4] sm:$0xff]
        %v473 = vld [vmem:[%s4 + $0x8] sm:$0xff]
        %475 = vset.pattern.permute.xlu0 0
        %476 = vperm.xlu0 %475, %v472
        %v477 = vpop.permute.xlu0 %476
        %480 = vset.pattern.permute.xlu0 0
        %481 = vperm.xlu0 %480, %v473
        %v482 = vpop.permute.xlu0 %481
        %vm484 = vcmask 195584
        %v486 = vsel %vm484, %v467, 0
        %v489 = vsel %vm484, %v468, 0
        %491 = vmatpush.msra.mxu0 0.0
        %492 = vmatpush.msra.mxu0 0.0
        %493 = vmatpush.msra.mxu0 0.0
        %494 = vmatpush.msra.mxu0 0.0
        %495 = vmatpush.msra.mxu0 0.0
        %496 = vmatpush.msra.mxu0 0.0
        %497 = vmatpush.msra.mxu0 0.0
        %498 = vmatpush.msra.mxu0 0.0
        %499 = vmatpush.msra.mxu0 0.0
        %500 = vmatpush.msra.mxu0 0.0
        %501 = vmatpush.msra.mxu0 0.0
        %502 = vmatpush.msra.mxu0 0.0
        %503 = vmatpush.msra.mxu0 0.0
        %504 = vmatpush.msra.mxu0 %v471
        %505 = vmatpush.msra.mxu0 %v470
        %506 = vmatpush.msra.mxu0 %v469
        %507 = vmatmul.f32.gmra.mxu0 %v486
        %v508 = vpop.f32.mrf.mxu0
        %v509 = vadd.f32 %v477, %v508
        %510 = vmatmul.f32.gmra.mxu0 %v489
        %v511 = vpop.f32.mrf.mxu0
        %v512 = vadd.f32 %v482, %v511
        %513 = vdwg.mxu0
        %v514 = vtanh.pop %v509
        %v515 = vxor.u32 %v512, 2147483648
        %v516 = vmul.f32 %v515, 1.442695
        %v517 = vpow.pop %v516
        %v518 = vadd.f32 %v517, 1.0
        %v519 = vrcp.pop %v518
        %v520 = vmul.f32 %v518, %v519
        %v521 = vsub.f32 1.0, %v520
        %v522 = vmul.f32 %v519, %v521
        %v523 = vadd.f32 %v519, %v522
        %vm524 = vweird.f32 %v518
        %vm525 = vweird.f32 %v519
        %vm526 = vmor %vm524, %vm525
        %v527 = vsel %vm526, %v519, %v523
        %v528 = vand.u32 2147483647, %v518
        %vm529 = vcmp.eq.f32.partialorder %v528, 8.507059e+37
        %v530 = vand.u32 %v518, 2147483648
        %v531 = vor.u32 1.1754944e-38, %v530
        %v532 = vsel %vm529, %v531, %v527
        %v533 = vmul.f32 1.0, %v532
        %v534 = vmul.f32 %v514, %v533
        %v535 = vld [vmem:[%s5] sm:$0xff]
        %v536 = vld [vmem:[%s5 + $0x8] sm:$0xff]
        %v537 = vld [vmem:[%s6] sm:$0xff]
        %v538 = vld [vmem:[%s6 + $0x8] sm:$0xff]
        %540 = vset.pattern.permute.xlu0 0
        %541 = vperm.xlu0 %540, %v537
        %v542 = vpop.permute.xlu0 %541
        %545 = vset.pattern.permute.xlu0 0
        %546 = vperm.xlu0 %545, %v538
        %v547 = vpop.permute.xlu0 %546
        %vm549 = vcmask 64512
        %v551 = vsel %vm549, %v535, 0
        %v554 = vsel %vm549, %v536, 0
        %556 = vmatpush.msra.mxu0 0.0
        %557 = vmatpush.msra.mxu0 0.0
        %558 = vmatpush.msra.mxu0 0.0
        %559 = vmatpush.msra.mxu0 0.0
        %560 = vmatpush.msra.mxu0 0.0
        %561 = vmatpush.msra.mxu0 0.0
        %562 = vmatpush.msra.mxu0 0.0
        %563 = vmatpush.msra.mxu0 0.0
        %564 = vmatpush.msra.mxu0 0.0
        %565 = vmatpush.msra.mxu0 0.0
        %566 = vmatpush.msra.mxu0 0.0
        %567 = vmatpush.msra.mxu0 0.0
        %568 = vmatpush.msra.mxu0 0.0
        %569 = vmatpush.msra.mxu0 0.0
        %570 = vmatpush.msra.mxu0 0.0
        %571 = vmatpush.msra.mxu0 %v534
        %572 = vmatmul.f32.gmra.mxu0 %v551
        %v573 = vpop.f32.mrf.mxu0
        %v574 = vadd.f32 %v542, %v573
        %575 = vmatmul.f32.gmra.mxu0 %v554
        %v576 = vpop.f32.mrf.mxu0
        %v577 = vadd.f32 %v547, %v576
        %578 = vdwg.mxu0
        %v579 = vadd.f32 %v458, %v574
        %v580 = vadd.f32 %v577, 0.0
        %vm581 = vcmp.ge.s32.totalorder %v433, 2
        %582 = vrot.lane.b32.xlu0 %v579, 2
        %v583 = vpop.permute.xlu0 %582
        %v584 = vsel %vm581, 1, 0
        %vm585 = vcmp.eq.s32.totalorder %v584, 1
        %v586 = vsel %vm585, %v583, 0.0
        %587 = vst [vmem:[#allocation2] sm:$0xff] %v586
        %588 = vst [vmem:[#allocation2 + $0x8] sm:$0xff] %v579
        %s589 = scalar_lea.vmem %s3, 16
        %v590 = vld [vmem:[%s589] sm:$0xff]
        %v591 = vld [vmem:[%s589 + $0x8] sm:$0xff]
        %v592 = vld [vmem:[#allocation2] sm:$0xff]
        %v593 = vld [vmem:[#allocation2 + $0x8] sm:$0xff]
        %v594 = vld [vmem:[#allocation2 + $0x10] sm:$0xff]
        %s595 = scalar_lea.vmem %s4, 16
        %v596 = vld [vmem:[%s595] sm:$0xff]
        %v597 = vld [vmem:[%s595 + $0x8] sm:$0xff]
        %599 = vset.pattern.permute.xlu0 0
        %600 = vperm.xlu0 %599, %v596
        %v601 = vpop.permute.xlu0 %600
        %604 = vset.pattern.permute.xlu0 0
        %605 = vperm.xlu0 %604, %v597
        %v606 = vpop.permute.xlu0 %605
        %v609 = vsel %vm484, %v590, 0
        %v612 = vsel %vm484, %v591, 0
        %614 = vmatpush.msra.mxu0 0.0
        %615 = vmatpush.msra.mxu0 0.0
        %616 = vmatpush.msra.mxu0 0.0
        %617 = vmatpush.msra.mxu0 0.0
        %618 = vmatpush.msra.mxu0 0.0
        %619 = vmatpush.msra.mxu0 0.0
        %620 = vmatpush.msra.mxu0 0.0
        %621 = vmatpush.msra.mxu0 0.0
        %622 = vmatpush.msra.mxu0 0.0
        %623 = vmatpush.msra.mxu0 0.0
        %624 = vmatpush.msra.mxu0 0.0
        %625 = vmatpush.msra.mxu0 0.0
        %626 = vmatpush.msra.mxu0 0.0
        %627 = vmatpush.msra.mxu0 %v594
        %628 = vmatpush.msra.mxu0 %v593
        %629 = vmatpush.msra.mxu0 %v592
        %630 = vmatmul.f32.gmra.mxu0 %v609
        %v631 = vpop.f32.mrf.mxu0
        %v632 = vadd.f32 %v601, %v631
        %633 = vmatmul.f32.gmra.mxu0 %v612
        %v634 = vpop.f32.mrf.mxu0
        %v635 = vadd.f32 %v606, %v634
        %636 = vdwg.mxu0
        %v637 = vtanh.pop %v632
        %v638 = vxor.u32 %v635, 2147483648
        %v639 = vmul.f32 %v638, 1.442695
        %v640 = vpow.pop %v639
        %v641 = vadd.f32 %v640, 1.0
        %v642 = vrcp.pop %v641
        %v643 = vmul.f32 %v641, %v642
        %v644 = vsub.f32 1.0, %v643
        %v645 = vmul.f32 %v642, %v644
        %v646 = vadd.f32 %v642, %v645
        %vm647 = vweird.f32 %v641
        %vm648 = vweird.f32 %v642
        %vm649 = vmor %vm647, %vm648
        %v650 = vsel %vm649, %v642, %v646
        %v651 = vand.u32 2147483647, %v641
        %vm652 = vcmp.eq.f32.partialorder %v651, 8.507059e+37
        %v653 = vand.u32 %v641, 2147483648
        %v654 = vor.u32 1.1754944e-38, %v653
        %v655 = vsel %vm652, %v654, %v650
        %v656 = vmul.f32 1.0, %v655
        %v657 = vmul.f32 %v637, %v656
        %s658 = scalar_lea.vmem %s5, 16
        %v659 = vld [vmem:[%s658] sm:$0xff]
        %v660 = vld [vmem:[%s658 + $0x8] sm:$0xff]
        %s661 = scalar_lea.vmem %s6, 16
        %v662 = vld [vmem:[%s661] sm:$0xff]
        %v663 = vld [vmem:[%s661 + $0x8] sm:$0xff]
        %665 = vset.pattern.permute.xlu0 0
        %666 = vperm.xlu0 %665, %v662
        %v667 = vpop.permute.xlu0 %666
        %670 = vset.pattern.permute.xlu0 0
        %671 = vperm.xlu0 %670, %v663
        %v672 = vpop.permute.xlu0 %671
        %v675 = vsel %vm549, %v659, 0
        %v678 = vsel %vm549, %v660, 0
        %680 = vmatpush.msra.mxu0 0.0
        %681 = vmatpush.msra.mxu0 0.0
        %682 = vmatpush.msra.mxu0 0.0
        %683 = vmatpush.msra.mxu0 0.0
        %684 = vmatpush.msra.mxu0 0.0
        %685 = vmatpush.msra.mxu0 0.0
        %686 = vmatpush.msra.mxu0 0.0
        %687 = vmatpush.msra.mxu0 0.0
        %688 = vmatpush.msra.mxu0 0.0
        %689 = vmatpush.msra.mxu0 0.0
        %690 = vmatpush.msra.mxu0 0.0
        %691 = vmatpush.msra.mxu0 0.0
        %692 = vmatpush.msra.mxu0 0.0
        %693 = vmatpush.msra.mxu0 0.0
        %694 = vmatpush.msra.mxu0 0.0
        %695 = vmatpush.msra.mxu0 %v657
        %696 = vmatmul.f32.gmra.mxu0 %v675
        %v697 = vpop.f32.mrf.mxu0
        %v698 = vadd.f32 %v667, %v697
        %699 = vmatmul.f32.gmra.mxu0 %v678
        %v700 = vpop.f32.mrf.mxu0
        %v701 = vadd.f32 %v672, %v700
        %702 = vdwg.mxu0
        %v703 = vadd.f32 %v579, %v698
        %v704 = vadd.f32 %v580, %v701
        %vm705 = vcmp.ge.s32.totalorder %v433, 4
        %706 = vrot.lane.b32.xlu0 %v703, 4
        %v707 = vpop.permute.xlu0 %706
        %v708 = vsel %vm705, 1, 0
        %vm709 = vcmp.eq.s32.totalorder %v708, 1
        %v710 = vsel %vm709, %v707, 0.0
        %711 = vst [vmem:[#allocation2] sm:$0xff] %v710
        %712 = vst [vmem:[#allocation2 + $0x8] sm:$0xff] %v703
        %s713 = scalar_lea.vmem %s3, 32
        %v714 = vld [vmem:[%s713] sm:$0xff]
        %v715 = vld [vmem:[%s713 + $0x8] sm:$0xff]
        %v716 = vld [vmem:[#allocation2] sm:$0xff]
        %v717 = vld [vmem:[#allocation2 + $0x8] sm:$0xff]
        %v718 = vld [vmem:[#allocation2 + $0x10] sm:$0xff]
        %s719 = scalar_lea.vmem %s4, 32
        %v720 = vld [vmem:[%s719] sm:$0xff]
        %v721 = vld [vmem:[%s719 + $0x8] sm:$0xff]
        %723 = vset.pattern.permute.xlu0 0
        %724 = vperm.xlu0 %723, %v720
        %v725 = vpop.permute.xlu0 %724
        %728 = vset.pattern.permute.xlu0 0
        %729 = vperm.xlu0 %728, %v721
        %v730 = vpop.permute.xlu0 %729
        %v733 = vsel %vm484, %v714, 0
        %v736 = vsel %vm484, %v715, 0
        %738 = vmatpush.msra.mxu0 0.0
        %739 = vmatpush.msra.mxu0 0.0
        %740 = vmatpush.msra.mxu0 0.0
        %741 = vmatpush.msra.mxu0 0.0
        %742 = vmatpush.msra.mxu0 0.0
        %743 = vmatpush.msra.mxu0 0.0
        %744 = vmatpush.msra.mxu0 0.0
        %745 = vmatpush.msra.mxu0 0.0
        %746 = vmatpush.msra.mxu0 0.0
        %747 = vmatpush.msra.mxu0 0.0
        %748 = vmatpush.msra.mxu0 0.0
        %749 = vmatpush.msra.mxu0 0.0
        %750 = vmatpush.msra.mxu0 0.0
        %751 = vmatpush.msra.mxu0 %v718
        %752 = vmatpush.msra.mxu0 %v717
        %753 = vmatpush.msra.mxu0 %v716
        %754 = vmatmul.f32.gmra.mxu0 %v733
        %v755 = vpop.f32.mrf.mxu0
        %v756 = vadd.f32 %v725, %v755
        %757 = vmatmul.f32.gmra.mxu0 %v736
        %v758 = vpop.f32.mrf.mxu0
        %v759 = vadd.f32 %v730, %v758
        %760 = vdwg.mxu0
        %v761 = vtanh.pop %v756
        %v762 = vxor.u32 %v759, 2147483648
        %v763 = vmul.f32 %v762, 1.442695
        %v764 = vpow.pop %v763
        %v765 = vadd.f32 %v764, 1.0
        %v766 = vrcp.pop %v765
        %v767 = vmul.f32 %v765, %v766
        %v768 = vsub.f32 1.0, %v767
        %v769 = vmul.f32 %v766, %v768
        %v770 = vadd.f32 %v766, %v769
        %vm771 = vweird.f32 %v765
        %vm772 = vweird.f32 %v766
        %vm773 = vmor %vm771, %vm772
        %v774 = vsel %vm773, %v766, %v770
        %v775 = vand.u32 2147483647, %v765
        %vm776 = vcmp.eq.f32.partialorder %v775, 8.507059e+37
        %v777 = vand.u32 %v765, 2147483648
        %v778 = vor.u32 1.1754944e-38, %v777
        %v779 = vsel %vm776, %v778, %v774
        %v780 = vmul.f32 1.0, %v779
        %v781 = vmul.f32 %v761, %v780
        %s782 = scalar_lea.vmem %s5, 32
        %v783 = vld [vmem:[%s782] sm:$0xff]
        %v784 = vld [vmem:[%s782 + $0x8] sm:$0xff]
        %s785 = scalar_lea.vmem %s6, 32
        %v786 = vld [vmem:[%s785] sm:$0xff]
        %v787 = vld [vmem:[%s785 + $0x8] sm:$0xff]
        %789 = vset.pattern.permute.xlu0 0
        %790 = vperm.xlu0 %789, %v786
        %v791 = vpop.permute.xlu0 %790
        %794 = vset.pattern.permute.xlu0 0
        %795 = vperm.xlu0 %794, %v787
        %v796 = vpop.permute.xlu0 %795
        %v799 = vsel %vm549, %v783, 0
        %v802 = vsel %vm549, %v784, 0
        %804 = vmatpush.msra.mxu0 0.0
        %805 = vmatpush.msra.mxu0 0.0
        %806 = vmatpush.msra.mxu0 0.0
        %807 = vmatpush.msra.mxu0 0.0
        %808 = vmatpush.msra.mxu0 0.0
        %809 = vmatpush.msra.mxu0 0.0
        %810 = vmatpush.msra.mxu0 0.0
        %811 = vmatpush.msra.mxu0 0.0
        %812 = vmatpush.msra.mxu0 0.0
        %813 = vmatpush.msra.mxu0 0.0
        %814 = vmatpush.msra.mxu0 0.0
        %815 = vmatpush.msra.mxu0 0.0
        %816 = vmatpush.msra.mxu0 0.0
        %817 = vmatpush.msra.mxu0 0.0
        %818 = vmatpush.msra.mxu0 0.0
        %819 = vmatpush.msra.mxu0 %v781
        %820 = vmatmul.f32.gmra.mxu0 %v799
        %v821 = vpop.f32.mrf.mxu0
        %v822 = vadd.f32 %v791, %v821
        %823 = vmatmul.f32.gmra.mxu0 %v802
        %v824 = vpop.f32.mrf.mxu0
        %v825 = vadd.f32 %v796, %v824
        %826 = vdwg.mxu0
        %v827 = vadd.f32 %v703, %v822
        %v828 = vadd.f32 %v704, %v825
        %vm829 = vcmp.ge.s32.totalorder %v433, 8
        %830 = vrot.lane.b32.xlu0 %v827, 8
        %v831 = vpop.permute.xlu0 %830
        %v832 = vsel %vm829, 1, 0
        %vm833 = vcmp.eq.s32.totalorder %v832, 1
        %v834 = vsel %vm833, %v831, 0.0
        %835 = vst [vmem:[#allocation2] sm:$0xff] %v834
        %836 = vst [vmem:[#allocation2 + $0x8] sm:$0xff] %v827
        %s837 = scalar_lea.vmem %s3, 48
        %v838 = vld [vmem:[%s837] sm:$0xff]
        %v839 = vld [vmem:[%s837 + $0x8] sm:$0xff]
        %v840 = vld [vmem:[#allocation2] sm:$0xff]
        %v841 = vld [vmem:[#allocation2 + $0x8] sm:$0xff]
        %v842 = vld [vmem:[#allocation2 + $0x10] sm:$0xff]
        %s843 = scalar_lea.vmem %s4, 48
        %v844 = vld [vmem:[%s843] sm:$0xff]
        %v845 = vld [vmem:[%s843 + $0x8] sm:$0xff]
        %847 = vset.pattern.permute.xlu0 0
        %848 = vperm.xlu0 %847, %v844
        %v849 = vpop.permute.xlu0 %848
        %852 = vset.pattern.permute.xlu0 0
        %853 = vperm.xlu0 %852, %v845
        %v854 = vpop.permute.xlu0 %853
        %v857 = vsel %vm484, %v838, 0
        %v860 = vsel %vm484, %v839, 0
        %862 = vmatpush.msra.mxu0 0.0
        %863 = vmatpush.msra.mxu0 0.0
        %864 = vmatpush.msra.mxu0 0.0
        %865 = vmatpush.msra.mxu0 0.0
        %866 = vmatpush.msra.mxu0 0.0
        %867 = vmatpush.msra.mxu0 0.0
        %868 = vmatpush.msra.mxu0 0.0
        %869 = vmatpush.msra.mxu0 0.0
        %870 = vmatpush.msra.mxu0 0.0
        %871 = vmatpush.msra.mxu0 0.0
        %872 = vmatpush.msra.mxu0 0.0
        %873 = vmatpush.msra.mxu0 0.0
        %874 = vmatpush.msra.mxu0 0.0
        %875 = vmatpush.msra.mxu0 %v842
        %876 = vmatpush.msra.mxu0 %v841
        %877 = vmatpush.msra.mxu0 %v840
        %878 = vmatmul.f32.gmra.mxu0 %v857
        %v879 = vpop.f32.mrf.mxu0
        %v880 = vadd.f32 %v849, %v879
        %881 = vmatmul.f32.gmra.mxu0 %v860
        %v882 = vpop.f32.mrf.mxu0
        %v883 = vadd.f32 %v854, %v882
        %884 = vdwg.mxu0
        %v885 = vtanh.pop %v880
        %v886 = vxor.u32 %v883, 2147483648
        %v887 = vmul.f32 %v886, 1.442695
        %v888 = vpow.pop %v887
        %v889 = vadd.f32 %v888, 1.0
        %v890 = vrcp.pop %v889
        %v891 = vmul.f32 %v889, %v890
        %v892 = vsub.f32 1.0, %v891
        %v893 = vmul.f32 %v890, %v892
        %v894 = vadd.f32 %v890, %v893
        %vm895 = vweird.f32 %v889
        %vm896 = vweird.f32 %v890
        %vm897 = vmor %vm895, %vm896
        %v898 = vsel %vm897, %v890, %v894
        %v899 = vand.u32 2147483647, %v889
        %vm900 = vcmp.eq.f32.partialorder %v899, 8.507059e+37
        %v901 = vand.u32 %v889, 2147483648
        %v902 = vor.u32 1.1754944e-38, %v901
        %v903 = vsel %vm900, %v902, %v898
        %v904 = vmul.f32 1.0, %v903
        %v905 = vmul.f32 %v885, %v904
        %s906 = scalar_lea.vmem %s5, 48
        %v907 = vld [vmem:[%s906] sm:$0xff]
        %v908 = vld [vmem:[%s906 + $0x8] sm:$0xff]
        %s909 = scalar_lea.vmem %s6, 48
        %v910 = vld [vmem:[%s909] sm:$0xff]
        %v911 = vld [vmem:[%s909 + $0x8] sm:$0xff]
        %913 = vset.pattern.permute.xlu0 0
        %914 = vperm.xlu0 %913, %v910
        %v915 = vpop.permute.xlu0 %914
        %917 = vset.pattern.permute.xlu0 0
        %918 = vperm.xlu0 %917, %v911
        %v919 = vpop.permute.xlu0 %918
        %v922 = vsel %vm549, %v907, 0
        %v925 = vsel %vm549, %v908, 0
        %927 = vmatpush.msra.mxu0 0.0
        %928 = vmatpush.msra.mxu0 0.0
        %929 = vmatpush.msra.mxu0 0.0
        %930 = vmatpush.msra.mxu0 0.0
        %931 = vmatpush.msra.mxu0 0.0
        %932 = vmatpush.msra.mxu0 0.0
        %933 = vmatpush.msra.mxu0 0.0
        %934 = vmatpush.msra.mxu0 0.0
        %935 = vmatpush.msra.mxu0 0.0
        %936 = vmatpush.msra.mxu0 0.0
        %937 = vmatpush.msra.mxu0 0.0
        %938 = vmatpush.msra.mxu0 0.0
        %939 = vmatpush.msra.mxu0 0.0
        %940 = vmatpush.msra.mxu0 0.0
        %941 = vmatpush.msra.mxu0 0.0
        %942 = vmatpush.msra.mxu0 %v905
        %943 = vmatmul.f32.gmra.mxu0 %v922
        %v944 = vpop.f32.mrf.mxu0
        %945 = vmatmul.f32.gmra.mxu0 %v925
        %v946 = vpop.f32.mrf.mxu0
        %v947 = vadd.f32 %v919, %v946
        %948 = vdwg.mxu0
        %v949 = vadd.f32 %v828, %v947
        %vm950 = vcmp.ge.f32.partialorder %v949, 0.0
        %v951 = vmul.f32 %v949, 0.1
        %v952 = vsel %vm950, %v949, %v951
        %v953 = vld [vmem:[%s9] sm:$0x3]
        %v954 = vld [vmem:[%s10] sm:$0x3]
        %956 = vset.pattern.permute.xlu0 0
        %957 = vperm.xlu0 %956, %v954
        %v958 = vpop.permute.xlu0 %957
        %v961 = vsel %vm549, %v953, 0
        %963 = vmatpush.msra.mxu0 0.0
        %964 = vmatpush.msra.mxu0 0.0
        %965 = vmatpush.msra.mxu0 0.0
        %966 = vmatpush.msra.mxu0 0.0
        %967 = vmatpush.msra.mxu0 0.0
        %968 = vmatpush.msra.mxu0 0.0
        %969 = vmatpush.msra.mxu0 0.0
        %970 = vmatpush.msra.mxu0 0.0
        %971 = vmatpush.msra.mxu0 0.0
        %972 = vmatpush.msra.mxu0 0.0
        %973 = vmatpush.msra.mxu0 0.0
        %974 = vmatpush.msra.mxu0 0.0
        %975 = vmatpush.msra.mxu0 0.0
        %976 = vmatpush.msra.mxu0 0.0
        %977 = vmatpush.msra.mxu0 0.0
        %978 = vmatpush.msra.mxu0 %v952
        %979 = vmatmul.f32.gmra.mxu0 %v961
        %v980 = vpop.f32.mrf.mxu0
        %v981 = vadd.f32 %v958, %v980
        %982 = vdwg.mxu0
        %v983 = vld [vmem:[%s7] sm:$0xff]
        %v984 = vld [vmem:[%s8] sm:$0xff]
        %986 = vset.pattern.permute.xlu0 0
        %987 = vperm.xlu0 %986, %v984
        %v988 = vpop.permute.xlu0 %987
        %v991 = vsel %vm549, %v983, 0
        %993 = vmatpush.msra.mxu0 0.0
        %994 = vmatpush.msra.mxu0 0.0
        %995 = vmatpush.msra.mxu0 0.0
        %996 = vmatpush.msra.mxu0 0.0
        %997 = vmatpush.msra.mxu0 0.0
        %998 = vmatpush.msra.mxu0 0.0
        %999 = vmatpush.msra.mxu0 0.0
        %1000 = vmatpush.msra.mxu0 0.0
        %1001 = vmatpush.msra.mxu0 0.0
        %1002 = vmatpush.msra.mxu0 0.0
        %1003 = vmatpush.msra.mxu0 0.0
        %1004 = vmatpush.msra.mxu0 0.0
        %1005 = vmatpush.msra.mxu0 0.0
        %1006 = vmatpush.msra.mxu0 0.0
        %1007 = vmatpush.msra.mxu0 0.0
        %1008 = vmatpush.msra.mxu0 %v952
        %1009 = vmatmul.f32.gmra.mxu0 %v991
        %v1010 = vpop.f32.mrf.mxu0
        %v1011 = vadd.f32 %v988, %v1010
        %1012 = vdwg.mxu0
        %v1013 = vsel %vm434, %v981, 0.0
        %v1014 = vadd.f32 %v1013, 0.0
        %v1015 = vmul.f32 %v1013, 1.442695
        %v1016 = vpow.pop %v1015
        %1018 = vst [vmem:[#allocation1] sm:$0xff] %v1016
        %s1019 = scalar_lea.vmem [#allocation1], 1
        %v1020 = vld [vmem:[%s1019] ss:$9 sm:$0xff]
        %v1022 = vmul.f32 %v436, %v1020
        %v1023 = vadd.f32 %v1022, %v981
        %v1024 = vsel %vm434, %v1023, 0.0
        %s1025 = scalar_lea.vmem %s2, 8
        %v1026 = vld [vmem:[%s1025] sm:$0xff]
        %1028 = vset.pattern.permute.xlu0 0
        %1029 = vperm.xlu0 %1028, %v1026
        %v1030 = vpop.permute.xlu0 %1029
        %v1032 = vperm.slane %v1024, 0
        %v1033 = vmul.f32 %v1030, %v1032
        %1034 = vset.pattern.permute.xlu0 1
        %1035 = vperm.xlu0 %1034, %v1026
        %v1036 = vpop.permute.xlu0 %1035
        %v1038 = vadd.f32 %v1033, %v1036
        %1039 = vrot.lane.b32.xlu0 %v1038, 1
        %v1040 = vpop.permute.xlu0 %1039
        %v1041 = vsel %vm457, %v1040, %v1038
        %v1042 = vadd.f32 %v1041, %v1011
        %1043 = vrot.lane.b32.xlu0 %v1042, 1
        %v1044 = vpop.permute.xlu0 %1043
        %v1045 = vsel %vm463, %v1044, 0.0
        %1046 = vst [vmem:[#allocation2] sm:$0xff] %v1045
        %1047 = vst [vmem:[#allocation2 + $0x8] sm:$0xff] %v1042
        %s1048 = scalar_lea.vmem %s3, 64
        %v1049 = vld [vmem:[%s1048] sm:$0xff]
        %v1050 = vld [vmem:[%s1048 + $0x8] sm:$0xff]
        %v1051 = vld [vmem:[#allocation2] sm:$0xff]
        %v1052 = vld [vmem:[#allocation2 + $0x8] sm:$0xff]
        %v1053 = vld [vmem:[#allocation2 + $0x10] sm:$0xff]
        %s1054 = scalar_lea.vmem %s4, 64
        %v1055 = vld [vmem:[%s1054] sm:$0xff]
        %v1056 = vld [vmem:[%s1054 + $0x8] sm:$0xff]
        %1058 = vset.pattern.permute.xlu0 0
        %1059 = vperm.xlu0 %1058, %v1055
        %v1060 = vpop.permute.xlu0 %1059
        %1063 = vset.pattern.permute.xlu0 0
        %1064 = vperm.xlu0 %1063, %v1056
        %v1065 = vpop.permute.xlu0 %1064
        %v1068 = vsel %vm484, %v1049, 0
        %v1071 = vsel %vm484, %v1050, 0
        %1073 = vmatpush.msra.mxu0 0.0
        %1074 = vmatpush.msra.mxu0 0.0
        %1075 = vmatpush.msra.mxu0 0.0
        %1076 = vmatpush.msra.mxu0 0.0
        %1077 = vmatpush.msra.mxu0 0.0
        %1078 = vmatpush.msra.mxu0 0.0
        %1079 = vmatpush.msra.mxu0 0.0
        %1080 = vmatpush.msra.mxu0 0.0
        %1081 = vmatpush.msra.mxu0 0.0
        %1082 = vmatpush.msra.mxu0 0.0
        %1083 = vmatpush.msra.mxu0 0.0
        %1084 = vmatpush.msra.mxu0 0.0
        %1085 = vmatpush.msra.mxu0 0.0
        %1086 = vmatpush.msra.mxu0 %v1053
        %1087 = vmatpush.msra.mxu0 %v1052
        %1088 = vmatpush.msra.mxu0 %v1051
        %1089 = vmatmul.f32.gmra.mxu0 %v1068
        %v1090 = vpop.f32.mrf.mxu0
        %v1091 = vadd.f32 %v1060, %v1090
        %1092 = vmatmul.f32.gmra.mxu0 %v1071
        %v1093 = vpop.f32.mrf.mxu0
        %v1094 = vadd.f32 %v1065, %v1093
        %1095 = vdwg.mxu0
        %v1096 = vtanh.pop %v1091
        %v1097 = vxor.u32 %v1094, 2147483648
        %v1098 = vmul.f32 %v1097, 1.442695
        %v1099 = vpow.pop %v1098
        %v1100 = vadd.f32 %v1099, 1.0
        %v1101 = vrcp.pop %v1100
        %v1102 = vmul.f32 %v1100, %v1101
        %v1103 = vsub.f32 1.0, %v1102
        %v1104 = vmul.f32 %v1101, %v1103
        %v1105 = vadd.f32 %v1101, %v1104
        %vm1106 = vweird.f32 %v1100
        %vm1107 = vweird.f32 %v1101
        %vm1108 = vmor %vm1106, %vm1107
        %v1109 = vsel %vm1108, %v1101, %v1105
        %v1110 = vand.u32 2147483647, %v1100
        %vm1111 = vcmp.eq.f32.partialorder %v1110, 8.507059e+37
        %v1112 = vand.u32 %v1100, 2147483648
        %v1113 = vor.u32 1.1754944e-38, %v1112
        %v1114 = vsel %vm1111, %v1113, %v1109
        %v1115 = vmul.f32 1.0, %v1114
        %v1116 = vmul.f32 %v1096, %v1115
        %s1117 = scalar_lea.vmem %s5, 64
        %v1118 = vld [vmem:[%s1117] sm:$0xff]
        %v1119 = vld [vmem:[%s1117 + $0x8] sm:$0xff]
        %s1120 = scalar_lea.vmem %s6, 64
        %v1121 = vld [vmem:[%s1120] sm:$0xff]
        %v1122 = vld [vmem:[%s1120 + $0x8] sm:$0xff]
        %1124 = vset.pattern.permute.xlu0 0
        %1125 = vperm.xlu0 %1124, %v1121
        %v1126 = vpop.permute.xlu0 %1125
        %1129 = vset.pattern.permute.xlu0 0
        %1130 = vperm.xlu0 %1129, %v1122
        %v1131 = vpop.permute.xlu0 %1130
        %v1134 = vsel %vm549, %v1118, 0
        %v1137 = vsel %vm549, %v1119, 0
        %1139 = vmatpush.msra.mxu0 0.0
        %1140 = vmatpush.msra.mxu0 0.0
        %1141 = vmatpush.msra.mxu0 0.0
        %1142 = vmatpush.msra.mxu0 0.0
        %1143 = vmatpush.msra.mxu0 0.0
        %1144 = vmatpush.msra.mxu0 0.0
        %1145 = vmatpush.msra.mxu0 0.0
        %1146 = vmatpush.msra.mxu0 0.0
        %1147 = vmatpush.msra.mxu0 0.0
        %1148 = vmatpush.msra.mxu0 0.0
        %1149 = vmatpush.msra.mxu0 0.0
        %1150 = vmatpush.msra.mxu0 0.0
        %1151 = vmatpush.msra.mxu0 0.0
        %1152 = vmatpush.msra.mxu0 0.0
        %1153 = vmatpush.msra.mxu0 0.0
        %1154 = vmatpush.msra.mxu0 %v1116
        %1155 = vmatmul.f32.gmra.mxu0 %v1134
        %v1156 = vpop.f32.mrf.mxu0
        %v1157 = vadd.f32 %v1126, %v1156
        %1158 = vmatmul.f32.gmra.mxu0 %v1137
        %v1159 = vpop.f32.mrf.mxu0
        %v1160 = vadd.f32 %v1131, %v1159
        %1161 = vdwg.mxu0
        %v1162 = vadd.f32 %v1042, %v1157
        %v1163 = vadd.f32 %v1160, 0.0
        %1164 = vrot.lane.b32.xlu0 %v1162, 2
        %v1165 = vpop.permute.xlu0 %1164
        %v1166 = vsel %vm585, %v1165, 0.0
        %1167 = vst [vmem:[#allocation2] sm:$0xff] %v1166
        %1168 = vst [vmem:[#allocation2 + $0x8] sm:$0xff] %v1162
        %s1169 = scalar_lea.vmem %s3, 80
        %v1170 = vld [vmem:[%s1169] sm:$0xff]
        %v1171 = vld [vmem:[%s1169 + $0x8] sm:$0xff]
        %v1172 = vld [vmem:[#allocation2] sm:$0xff]
        %v1173 = vld [vmem:[#allocation2 + $0x8] sm:$0xff]
        %v1174 = vld [vmem:[#allocation2 + $0x10] sm:$0xff]
        %s1175 = scalar_lea.vmem %s4, 80
        %v1176 = vld [vmem:[%s1175] sm:$0xff]
        %v1177 = vld [vmem:[%s1175 + $0x8] sm:$0xff]
        %1179 = vset.pattern.permute.xlu0 0
        %1180 = vperm.xlu0 %1179, %v1176
        %v1181 = vpop.permute.xlu0 %1180
        %1184 = vset.pattern.permute.xlu0 0
        %1185 = vperm.xlu0 %1184, %v1177
        %v1186 = vpop.permute.xlu0 %1185
        %v1189 = vsel %vm484, %v1170, 0
        %v1192 = vsel %vm484, %v1171, 0
        %1194 = vmatpush.msra.mxu0 0.0
        %1195 = vmatpush.msra.mxu0 0.0
        %1196 = vmatpush.msra.mxu0 0.0
        %1197 = vmatpush.msra.mxu0 0.0
        %1198 = vmatpush.msra.mxu0 0.0
        %1199 = vmatpush.msra.mxu0 0.0
        %1200 = vmatpush.msra.mxu0 0.0
        %1201 = vmatpush.msra.mxu0 0.0
        %1202 = vmatpush.msra.mxu0 0.0
        %1203 = vmatpush.msra.mxu0 0.0
        %1204 = vmatpush.msra.mxu0 0.0
        %1205 = vmatpush.msra.mxu0 0.0
        %1206 = vmatpush.msra.mxu0 0.0
        %1207 = vmatpush.msra.mxu0 %v1174
        %1208 = vmatpush.msra.mxu0 %v1173
        %1209 = vmatpush.msra.mxu0 %v1172
        %1210 = vmatmul.f32.gmra.mxu0 %v1189
        %v1211 = vpop.f32.mrf.mxu0
        %v1212 = vadd.f32 %v1181, %v1211
        %1213 = vmatmul.f32.gmra.mxu0 %v1192
        %v1214 = vpop.f32.mrf.mxu0
        %v1215 = vadd.f32 %v1186, %v1214
        %1216 = vdwg.mxu0
        %v1217 = vtanh.pop %v1212
        %v1218 = vxor.u32 %v1215, 2147483648
        %v1219 = vmul.f32 %v1218, 1.442695
        %v1220 = vpow.pop %v1219
        %v1221 = vadd.f32 %v1220, 1.0
        %v1222 = vrcp.pop %v1221
        %v1223 = vmul.f32 %v1221, %v1222
        %v1224 = vsub.f32 1.0, %v1223
        %v1225 = vmul.f32 %v1222, %v1224
        %v1226 = vadd.f32 %v1222, %v1225
        %vm1227 = vweird.f32 %v1221
        %vm1228 = vweird.f32 %v1222
        %vm1229 = vmor %vm1227, %vm1228
        %v1230 = vsel %vm1229, %v1222, %v1226
        %v1231 = vand.u32 2147483647, %v1221
        %vm1232 = vcmp.eq.f32.partialorder %v1231, 8.507059e+37
        %v1233 = vand.u32 %v1221, 2147483648
        %v1234 = vor.u32 1.1754944e-38, %v1233
        %v1235 = vsel %vm1232, %v1234, %v1230
        %v1236 = vmul.f32 1.0, %v1235
        %v1237 = vmul.f32 %v1217, %v1236
        %s1238 = scalar_lea.vmem %s5, 80
        %v1239 = vld [vmem:[%s1238] sm:$0xff]
        %v1240 = vld [vmem:[%s1238 + $0x8] sm:$0xff]
        %s1241 = scalar_lea.vmem %s6, 80
        %v1242 = vld [vmem:[%s1241] sm:$0xff]
        %v1243 = vld [vmem:[%s1241 + $0x8] sm:$0xff]
        %1245 = vset.pattern.permute.xlu0 0
        %1246 = vperm.xlu0 %1245, %v1242
        %v1247 = vpop.permute.xlu0 %1246
        %1250 = vset.pattern.permute.xlu0 0
        %1251 = vperm.xlu0 %1250, %v1243
        %v1252 = vpop.permute.xlu0 %1251
        %v1255 = vsel %vm549, %v1239, 0
        %v1258 = vsel %vm549, %v1240, 0
        %1260 = vmatpush.msra.mxu0 0.0
        %1261 = vmatpush.msra.mxu0 0.0
        %1262 = vmatpush.msra.mxu0 0.0
        %1263 = vmatpush.msra.mxu0 0.0
        %1264 = vmatpush.msra.mxu0 0.0
        %1265 = vmatpush.msra.mxu0 0.0
        %1266 = vmatpush.msra.mxu0 0.0
        %1267 = vmatpush.msra.mxu0 0.0
        %1268 = vmatpush.msra.mxu0 0.0
        %1269 = vmatpush.msra.mxu0 0.0
        %1270 = vmatpush.msra.mxu0 0.0
        %1271 = vmatpush.msra.mxu0 0.0
        %1272 = vmatpush.msra.mxu0 0.0
        %1273 = vmatpush.msra.mxu0 0.0
        %1274 = vmatpush.msra.mxu0 0.0
        %1275 = vmatpush.msra.mxu0 %v1237
        %1276 = vmatmul.f32.gmra.mxu0 %v1255
        %v1277 = vpop.f32.mrf.mxu0
        %v1278 = vadd.f32 %v1247, %v1277
        %1279 = vmatmul.f32.gmra.mxu0 %v1258
        %v1280 = vpop.f32.mrf.mxu0
        %v1281 = vadd.f32 %v1252, %v1280
        %1282 = vdwg.mxu0
        %v1283 = vadd.f32 %v1162, %v1278
        %v1284 = vadd.f32 %v1163, %v1281
        %1285 = vrot.lane.b32.xlu0 %v1283, 4
        %v1286 = vpop.permute.xlu0 %1285
        %v1287 = vsel %vm709, %v1286, 0.0
        %1288 = vst [vmem:[#allocation2] sm:$0xff] %v1287
        %1289 = vst [vmem:[#allocation2 + $0x8] sm:$0xff] %v1283
        %s1290 = scalar_lea.vmem %s3, 96
        %v1291 = vld [vmem:[%s1290] sm:$0xff]
        %v1292 = vld [vmem:[%s1290 + $0x8] sm:$0xff]
        %v1293 = vld [vmem:[#allocation2] sm:$0xff]
        %v1294 = vld [vmem:[#allocation2 + $0x8] sm:$0xff]
        %v1295 = vld [vmem:[#allocation2 + $0x10] sm:$0xff]
        %s1296 = scalar_lea.vmem %s4, 96
        %v1297 = vld [vmem:[%s1296] sm:$0xff]
        %v1298 = vld [vmem:[%s1296 + $0x8] sm:$0xff]
        %1300 = vset.pattern.permute.xlu0 0
        %1301 = vperm.xlu0 %1300, %v1297
        %v1302 = vpop.permute.xlu0 %1301
        %1305 = vset.pattern.permute.xlu0 0
        %1306 = vperm.xlu0 %1305, %v1298
        %v1307 = vpop.permute.xlu0 %1306
        %v1310 = vsel %vm484, %v1291, 0
        %v1313 = vsel %vm484, %v1292, 0
        %1315 = vmatpush.msra.mxu0 0.0
        %1316 = vmatpush.msra.mxu0 0.0
        %1317 = vmatpush.msra.mxu0 0.0
        %1318 = vmatpush.msra.mxu0 0.0
        %1319 = vmatpush.msra.mxu0 0.0
        %1320 = vmatpush.msra.mxu0 0.0
        %1321 = vmatpush.msra.mxu0 0.0
        %1322 = vmatpush.msra.mxu0 0.0
        %1323 = vmatpush.msra.mxu0 0.0
        %1324 = vmatpush.msra.mxu0 0.0
        %1325 = vmatpush.msra.mxu0 0.0
        %1326 = vmatpush.msra.mxu0 0.0
        %1327 = vmatpush.msra.mxu0 0.0
        %1328 = vmatpush.msra.mxu0 %v1295
        %1329 = vmatpush.msra.mxu0 %v1294
        %1330 = vmatpush.msra.mxu0 %v1293
        %1331 = vmatmul.f32.gmra.mxu0 %v1310
        %v1332 = vpop.f32.mrf.mxu0
        %v1333 = vadd.f32 %v1302, %v1332
        %1334 = vmatmul.f32.gmra.mxu0 %v1313
        %v1335 = vpop.f32.mrf.mxu0
        %v1336 = vadd.f32 %v1307, %v1335
        %1337 = vdwg.mxu0
        %v1338 = vtanh.pop %v1333
        %v1339 = vxor.u32 %v1336, 2147483648
        %v1340 = vmul.f32 %v1339, 1.442695
        %v1341 = vpow.pop %v1340
        %v1342 = vadd.f32 %v1341, 1.0
        %v1343 = vrcp.pop %v1342
        %v1344 = vmul.f32 %v1342, %v1343
        %v1345 = vsub.f32 1.0, %v1344
        %v1346 = vmul.f32 %v1343, %v1345
        %v1347 = vadd.f32 %v1343, %v1346
        %vm1348 = vweird.f32 %v1342
        %vm1349 = vweird.f32 %v1343
        %vm1350 = vmor %vm1348, %vm1349
        %v1351 = vsel %vm1350, %v1343, %v1347
        %v1352 = vand.u32 2147483647, %v1342
        %vm1353 = vcmp.eq.f32.partialorder %v1352, 8.507059e+37
        %v1354 = vand.u32 %v1342, 2147483648
        %v1355 = vor.u32 1.1754944e-38, %v1354
        %v1356 = vsel %vm1353, %v1355, %v1351
        %v1357 = vmul.f32 1.0, %v1356
        %v1358 = vmul.f32 %v1338, %v1357
        %s1359 = scalar_lea.vmem %s5, 96
        %v1360 = vld [vmem:[%s1359] sm:$0xff]
        %v1361 = vld [vmem:[%s1359 + $0x8] sm:$0xff]
        %s1362 = scalar_lea.vmem %s6, 96
        %v1363 = vld [vmem:[%s1362] sm:$0xff]
        %v1364 = vld [vmem:[%s1362 + $0x8] sm:$0xff]
        %1366 = vset.pattern.permute.xlu0 0
        %1367 = vperm.xlu0 %1366, %v1363
        %v1368 = vpop.permute.xlu0 %1367
        %1371 = vset.pattern.permute.xlu0 0
        %1372 = vperm.xlu0 %1371, %v1364
        %v1373 = vpop.permute.xlu0 %1372
        %v1376 = vsel %vm549, %v1360, 0
        %v1379 = vsel %vm549, %v1361, 0
        %1381 = vmatpush.msra.mxu0 0.0
        %1382 = vmatpush.msra.mxu0 0.0
        %1383 = vmatpush.msra.mxu0 0.0
        %1384 = vmatpush.msra.mxu0 0.0
        %1385 = vmatpush.msra.mxu0 0.0
        %1386 = vmatpush.msra.mxu0 0.0
        %1387 = vmatpush.msra.mxu0 0.0
        %1388 = vmatpush.msra.mxu0 0.0
        %1389 = vmatpush.msra.mxu0 0.0
        %1390 = vmatpush.msra.mxu0 0.0
        %1391 = vmatpush.msra.mxu0 0.0
        %1392 = vmatpush.msra.mxu0 0.0
        %1393 = vmatpush.msra.mxu0 0.0
        %1394 = vmatpush.msra.mxu0 0.0
        %1395 = vmatpush.msra.mxu0 0.0
        %1396 = vmatpush.msra.mxu0 %v1358
        %1397 = vmatmul.f32.gmra.mxu0 %v1376
        %v1398 = vpop.f32.mrf.mxu0
        %v1399 = vadd.f32 %v1368, %v1398
        %1400 = vmatmul.f32.gmra.mxu0 %v1379
        %v1401 = vpop.f32.mrf.mxu0
        %v1402 = vadd.f32 %v1373, %v1401
        %1403 = vdwg.mxu0
        %v1404 = vadd.f32 %v1283, %v1399
        %v1405 = vadd.f32 %v1284, %v1402
        %1406 = vrot.lane.b32.xlu0 %v1404, 8
        %v1407 = vpop.permute.xlu0 %1406
        %v1408 = vsel %vm833, %v1407, 0.0
        %1409 = vst [vmem:[#allocation2] sm:$0xff] %v1408
        %1410 = vst [vmem:[#allocation2 + $0x8] sm:$0xff] %v1404
        %s1411 = scalar_lea.vmem %s3, 112
        %v1412 = vld [vmem:[%s1411] sm:$0xff]
        %v1413 = vld [vmem:[%s1411 + $0x8] sm:$0xff]
        %v1414 = vld [vmem:[#allocation2] sm:$0xff]
        %v1415 = vld [vmem:[#allocation2 + $0x8] sm:$0xff]
        %v1416 = vld [vmem:[#allocation2 + $0x10] sm:$0xff]
        %s1417 = scalar_lea.vmem %s4, 112
        %v1418 = vld [vmem:[%s1417] sm:$0xff]
        %v1419 = vld [vmem:[%s1417 + $0x8] sm:$0xff]
        %1421 = vset.pattern.permute.xlu0 0
        %1422 = vperm.xlu0 %1421, %v1418
        %v1423 = vpop.permute.xlu0 %1422
        %1426 = vset.pattern.permute.xlu0 0
        %1427 = vperm.xlu0 %1426, %v1419
        %v1428 = vpop.permute.xlu0 %1427
        %v1431 = vsel %vm484, %v1412, 0
        %v1434 = vsel %vm484, %v1413, 0
        %1436 = vmatpush.msra.mxu0 0.0
        %1437 = vmatpush.msra.mxu0 0.0
        %1438 = vmatpush.msra.mxu0 0.0
        %1439 = vmatpush.msra.mxu0 0.0
        %1440 = vmatpush.msra.mxu0 0.0
        %1441 = vmatpush.msra.mxu0 0.0
        %1442 = vmatpush.msra.mxu0 0.0
        %1443 = vmatpush.msra.mxu0 0.0
        %1444 = vmatpush.msra.mxu0 0.0
        %1445 = vmatpush.msra.mxu0 0.0
        %1446 = vmatpush.msra.mxu0 0.0
        %1447 = vmatpush.msra.mxu0 0.0
        %1448 = vmatpush.msra.mxu0 0.0
        %1449 = vmatpush.msra.mxu0 %v1416
        %1450 = vmatpush.msra.mxu0 %v1415
        %1451 = vmatpush.msra.mxu0 %v1414
        %1452 = vmatmul.f32.gmra.mxu0 %v1431
        %v1453 = vpop.f32.mrf.mxu0
        %v1454 = vadd.f32 %v1423, %v1453
        %1455 = vmatmul.f32.gmra.mxu0 %v1434
        %v1456 = vpop.f32.mrf.mxu0
        %v1457 = vadd.f32 %v1428, %v1456
        %1458 = vdwg.mxu0
        %v1459 = vtanh.pop %v1454
        %v1460 = vxor.u32 %v1457, 2147483648
        %v1461 = vmul.f32 %v1460, 1.442695
        %v1462 = vpow.pop %v1461
        %v1463 = vadd.f32 %v1462, 1.0
        %v1464 = vrcp.pop %v1463
        %v1465 = vmul.f32 %v1463, %v1464
        %v1466 = vsub.f32 1.0, %v1465
        %v1467 = vmul.f32 %v1464, %v1466
        %v1468 = vadd.f32 %v1464, %v1467
        %vm1469 = vweird.f32 %v1463
        %vm1470 = vweird.f32 %v1464
        %vm1471 = vmor %vm1469, %vm1470
        %v1472 = vsel %vm1471, %v1464, %v1468
        %v1473 = vand.u32 2147483647, %v1463
        %vm1474 = vcmp.eq.f32.partialorder %v1473, 8.507059e+37
        %v1475 = vand.u32 %v1463, 2147483648
        %v1476 = vor.u32 1.1754944e-38, %v1475
        %v1477 = vsel %vm1474, %v1476, %v1472
        %v1478 = vmul.f32 1.0, %v1477
        %v1479 = vmul.f32 %v1459, %v1478
        %s1480 = scalar_lea.vmem %s5, 112
        %v1481 = vld [vmem:[%s1480] sm:$0xff]
        %v1482 = vld [vmem:[%s1480 + $0x8] sm:$0xff]
        %s1483 = scalar_lea.vmem %s6, 112
        %v1484 = vld [vmem:[%s1483] sm:$0xff]
        %v1485 = vld [vmem:[%s1483 + $0x8] sm:$0xff]
        %1487 = vset.pattern.permute.xlu0 0
        %1488 = vperm.xlu0 %1487, %v1484
        %v1489 = vpop.permute.xlu0 %1488
        %1491 = vset.pattern.permute.xlu0 0
        %1492 = vperm.xlu0 %1491, %v1485
        %v1493 = vpop.permute.xlu0 %1492
        %v1496 = vsel %vm549, %v1481, 0
        %v1499 = vsel %vm549, %v1482, 0
        %1501 = vmatpush.msra.mxu0 0.0
        %1502 = vmatpush.msra.mxu0 0.0
        %1503 = vmatpush.msra.mxu0 0.0
        %1504 = vmatpush.msra.mxu0 0.0
        %1505 = vmatpush.msra.mxu0 0.0
        %1506 = vmatpush.msra.mxu0 0.0
        %1507 = vmatpush.msra.mxu0 0.0
        %1508 = vmatpush.msra.mxu0 0.0
        %1509 = vmatpush.msra.mxu0 0.0
        %1510 = vmatpush.msra.mxu0 0.0
        %1511 = vmatpush.msra.mxu0 0.0
        %1512 = vmatpush.msra.mxu0 0.0
        %1513 = vmatpush.msra.mxu0 0.0
        %1514 = vmatpush.msra.mxu0 0.0
        %1515 = vmatpush.msra.mxu0 0.0
        %1516 = vmatpush.msra.mxu0 %v1479
        %1517 = vmatmul.f32.gmra.mxu0 %v1496
        %v1518 = vpop.f32.mrf.mxu0
        %1519 = vmatmul.f32.gmra.mxu0 %v1499
        %v1520 = vpop.f32.mrf.mxu0
        %v1521 = vadd.f32 %v1493, %v1520
        %1522 = vdwg.mxu0
        %v1523 = vadd.f32 %v1405, %v1521
        %vm1524 = vcmp.ge.f32.partialorder %v1523, 0.0
        %v1525 = vmul.f32 %v1523, 0.1
        %v1526 = vsel %vm1524, %v1523, %v1525
        %s1527 = scalar_lea.vmem %s9, 2
        %v1528 = vld [vmem:[%s1527] sm:$0x3]
        %s1529 = scalar_lea.vmem %s10, 2
        %v1530 = vld [vmem:[%s1529] sm:$0x3]
        %1532 = vset.pattern.permute.xlu0 0
        %1533 = vperm.xlu0 %1532, %v1530
        %v1534 = vpop.permute.xlu0 %1533
        %v1537 = vsel %vm549, %v1528, 0
        %1539 = vmatpush.msra.mxu0 0.0
        %1540 = vmatpush.msra.mxu0 0.0
        %1541 = vmatpush.msra.mxu0 0.0
        %1542 = vmatpush.msra.mxu0 0.0
        %1543 = vmatpush.msra.mxu0 0.0
        %1544 = vmatpush.msra.mxu0 0.0
        %1545 = vmatpush.msra.mxu0 0.0
        %1546 = vmatpush.msra.mxu0 0.0
        %1547 = vmatpush.msra.mxu0 0.0
        %1548 = vmatpush.msra.mxu0 0.0
        %1549 = vmatpush.msra.mxu0 0.0
        %1550 = vmatpush.msra.mxu0 0.0
        %1551 = vmatpush.msra.mxu0 0.0
        %1552 = vmatpush.msra.mxu0 0.0
        %1553 = vmatpush.msra.mxu0 0.0
        %1554 = vmatpush.msra.mxu0 %v1526
        %1555 = vmatmul.f32.gmra.mxu0 %v1537
        %v1556 = vpop.f32.mrf.mxu0
        %v1557 = vadd.f32 %v1534, %v1556
        %1558 = vdwg.mxu0
        %v1559 = vsel %vm434, %v1557, 0.0
        %v1560 = vadd.f32 %v1014, %v1559
        %v1561 = vmul.f32 %v1559, 1.442695
        %v1562 = vpow.pop %v1561
        %v1564 = vrot.slane %v1562, 1
        %v1566 = vmul.f32 %v1024, %v1564
        %v1567 = vadd.f32 %v1566, %v1557
        %v1568 = vsel %vm434, %v1567, 0.0
        %s1569 = scalar_lea.vmem %s2, 16
        %v1570 = vld [vmem:[%s1569] sm:$0xff]
        %1572 = vset.pattern.permute.xlu0 0
        %1573 = vperm.xlu0 %1572, %v1570
        %v1574 = vpop.permute.xlu0 %1573
        %v1576 = vperm.slane %v1568, 0
        %v1577 = vmul.f32 %v1574, %v1576
        %1578 = vset.pattern.permute.xlu0 1
        %1579 = vperm.xlu0 %1578, %v1570
        %v1580 = vpop.permute.xlu0 %1579
        %v1582 = vadd.f32 %v1577, %v1580
        %vm1583 = vcmp.lt.s32.totalorder %v433, 15
        %1584 = vrot.lane.b32.xlu0 %v1582, 127
        %v1585 = vpop.permute.xlu0 %1584
        %v1586 = vsel %vm1583, 1, 0
        %vm1587 = vcmp.eq.s32.totalorder %v1586, 1
        %v1588 = vsel %vm1587, %v1585, %v1582
        %v1589 = vadd.s32 %v433, 1
        %vm1590 = vcmp.lt.s32.totalorder %v1589, 16
        %1591 = vrot.lane.b32.xlu0 %v1588, 127
        %v1592 = vpop.permute.xlu0 %1591
        %v1593 = vsel %vm1590, 1, 0
        %vm1594 = vcmp.eq.s32.totalorder %v1593, 1
        %v1595 = vsel %vm1594, %v1592, 0.0
        %1596 = vst [vmem:[#allocation2] sm:$0xff] %v1588
        %1597 = vst [vmem:[#allocation2 + $0x8] sm:$0xff] %v1595
        %s1598 = scalar_lea.vmem %s3, 128
        %v1599 = vld [vmem:[%s1598] sm:$0xff]
        %v1600 = vld [vmem:[%s1598 + $0x8] sm:$0xff]
        %v1601 = vld [vmem:[#allocation2] sm:$0xff]
        %v1602 = vld [vmem:[#allocation2 + $0x8] sm:$0xff]
        %v1603 = vld [vmem:[#allocation2 + $0x10] sm:$0xff]
        %s1604 = scalar_lea.vmem %s4, 128
        %v1605 = vld [vmem:[%s1604] sm:$0xff]
        %v1606 = vld [vmem:[%s1604 + $0x8] sm:$0xff]
        %1608 = vset.pattern.permute.xlu0 0
        %1609 = vperm.xlu0 %1608, %v1605
        %v1610 = vpop.permute.xlu0 %1609
        %1613 = vset.pattern.permute.xlu0 0
        %1614 = vperm.xlu0 %1613, %v1606
        %v1615 = vpop.permute.xlu0 %1614
        %v1618 = vsel %vm484, %v1599, 0
        %v1621 = vsel %vm484, %v1600, 0
        %1623 = vmatpush.msra.mxu0 0.0
        %1624 = vmatpush.msra.mxu0 0.0
        %1625 = vmatpush.msra.mxu0 0.0
        %1626 = vmatpush.msra.mxu0 0.0
        %1627 = vmatpush.msra.mxu0 0.0
        %1628 = vmatpush.msra.mxu0 0.0
        %1629 = vmatpush.msra.mxu0 0.0
        %1630 = vmatpush.msra.mxu0 0.0
        %1631 = vmatpush.msra.mxu0 0.0
        %1632 = vmatpush.msra.mxu0 0.0
        %1633 = vmatpush.msra.mxu0 0.0
        %1634 = vmatpush.msra.mxu0 0.0
        %1635 = vmatpush.msra.mxu0 0.0
        %1636 = vmatpush.msra.mxu0 %v1603
        %1637 = vmatpush.msra.mxu0 %v1602
        %1638 = vmatpush.msra.mxu0 %v1601
        %1639 = vmatmul.f32.gmra.mxu0 %v1618
        %v1640 = vpop.f32.mrf.mxu0
        %v1641 = vadd.f32 %v1610, %v1640
        %1642 = vmatmul.f32.gmra.mxu0 %v1621
        %v1643 = vpop.f32.mrf.mxu0
        %v1644 = vadd.f32 %v1615, %v1643
        %1645 = vdwg.mxu0
        %v1646 = vtanh.pop %v1641
        %v1647 = vxor.u32 %v1644, 2147483648
        %v1648 = vmul.f32 %v1647, 1.442695
        %v1649 = vpow.pop %v1648
        %v1650 = vadd.f32 %v1649, 1.0
        %v1651 = vrcp.pop %v1650
        %v1652 = vmul.f32 %v1650, %v1651
        %v1653 = vsub.f32 1.0, %v1652
        %v1654 = vmul.f32 %v1651, %v1653
        %v1655 = vadd.f32 %v1651, %v1654
        %vm1656 = vweird.f32 %v1650
        %vm1657 = vweird.f32 %v1651
        %vm1658 = vmor %vm1656, %vm1657
        %v1659 = vsel %vm1658, %v1651, %v1655
        %v1660 = vand.u32 2147483647, %v1650
        %vm1661 = vcmp.eq.f32.partialorder %v1660, 8.507059e+37
        %v1662 = vand.u32 %v1650, 2147483648
        %v1663 = vor.u32 1.1754944e-38, %v1662
        %v1664 = vsel %vm1661, %v1663, %v1659
        %v1665 = vmul.f32 1.0, %v1664
        %v1666 = vmul.f32 %v1646, %v1665
        %s1667 = scalar_lea.vmem %s5, 128
        %v1668 = vld [vmem:[%s1667] sm:$0xff]
        %v1669 = vld [vmem:[%s1667 + $0x8] sm:$0xff]
        %s1670 = scalar_lea.vmem %s6, 128
        %v1671 = vld [vmem:[%s1670] sm:$0xff]
        %v1672 = vld [vmem:[%s1670 + $0x8] sm:$0xff]
        %1674 = vset.pattern.permute.xlu0 0
        %1675 = vperm.xlu0 %1674, %v1671
        %v1676 = vpop.permute.xlu0 %1675
        %1679 = vset.pattern.permute.xlu0 0
        %1680 = vperm.xlu0 %1679, %v1672
        %v1681 = vpop.permute.xlu0 %1680
        %v1684 = vsel %vm549, %v1668, 0
        %v1687 = vsel %vm549, %v1669, 0
        %1689 = vmatpush.msra.mxu0 0.0
        %1690 = vmatpush.msra.mxu0 0.0
        %1691 = vmatpush.msra.mxu0 0.0
        %1692 = vmatpush.msra.mxu0 0.0
        %1693 = vmatpush.msra.mxu0 0.0
        %1694 = vmatpush.msra.mxu0 0.0
        %1695 = vmatpush.msra.mxu0 0.0
        %1696 = vmatpush.msra.mxu0 0.0
        %1697 = vmatpush.msra.mxu0 0.0
        %1698 = vmatpush.msra.mxu0 0.0
        %1699 = vmatpush.msra.mxu0 0.0
        %1700 = vmatpush.msra.mxu0 0.0
        %1701 = vmatpush.msra.mxu0 0.0
        %1702 = vmatpush.msra.mxu0 0.0
        %1703 = vmatpush.msra.mxu0 0.0
        %1704 = vmatpush.msra.mxu0 %v1666
        %1705 = vmatmul.f32.gmra.mxu0 %v1684
        %v1706 = vpop.f32.mrf.mxu0
        %v1707 = vadd.f32 %v1676, %v1706
        %1708 = vmatmul.f32.gmra.mxu0 %v1687
        %v1709 = vpop.f32.mrf.mxu0
        %v1710 = vadd.f32 %v1681, %v1709
        %1711 = vdwg.mxu0
        %v1712 = vadd.f32 %v1588, %v1707
        %v1713 = vadd.f32 %v1710, 0.0
        %v1714 = vadd.s32 %v433, 2
        %vm1715 = vcmp.lt.s32.totalorder %v1714, 16
        %1716 = vrot.lane.b32.xlu0 %v1712, 126
        %v1717 = vpop.permute.xlu0 %1716
        %v1718 = vsel %vm1715, 1, 0
        %vm1719 = vcmp.eq.s32.totalorder %v1718, 1
        %v1720 = vsel %vm1719, %v1717, 0.0
        %1721 = vst [vmem:[#allocation2] sm:$0xff] %v1712
        %1722 = vst [vmem:[#allocation2 + $0x8] sm:$0xff] %v1720
        %s1723 = scalar_lea.vmem %s3, 144
        %v1724 = vld [vmem:[%s1723] sm:$0xff]
        %v1725 = vld [vmem:[%s1723 + $0x8] sm:$0xff]
        %v1726 = vld [vmem:[#allocation2] sm:$0xff]
        %v1727 = vld [vmem:[#allocation2 + $0x8] sm:$0xff]
        %v1728 = vld [vmem:[#allocation2 + $0x10] sm:$0xff]
        %s1729 = scalar_lea.vmem %s4, 144
        %v1730 = vld [vmem:[%s1729] sm:$0xff]
        %v1731 = vld [vmem:[%s1729 + $0x8] sm:$0xff]
        %1733 = vset.pattern.permute.xlu0 0
        %1734 = vperm.xlu0 %1733, %v1730
        %v1735 = vpop.permute.xlu0 %1734
        %1738 = vset.pattern.permute.xlu0 0
        %1739 = vperm.xlu0 %1738, %v1731
        %v1740 = vpop.permute.xlu0 %1739
        %v1743 = vsel %vm484, %v1724, 0
        %v1746 = vsel %vm484, %v1725, 0
        %1748 = vmatpush.msra.mxu0 0.0
        %1749 = vmatpush.msra.mxu0 0.0
        %1750 = vmatpush.msra.mxu0 0.0
        %1751 = vmatpush.msra.mxu0 0.0
        %1752 = vmatpush.msra.mxu0 0.0
        %1753 = vmatpush.msra.mxu0 0.0
        %1754 = vmatpush.msra.mxu0 0.0
        %1755 = vmatpush.msra.mxu0 0.0
        %1756 = vmatpush.msra.mxu0 0.0
        %1757 = vmatpush.msra.mxu0 0.0
        %1758 = vmatpush.msra.mxu0 0.0
        %1759 = vmatpush.msra.mxu0 0.0
        %1760 = vmatpush.msra.mxu0 0.0
        %1761 = vmatpush.msra.mxu0 %v1728
        %1762 = vmatpush.msra.mxu0 %v1727
        %1763 = vmatpush.msra.mxu0 %v1726
        %1764 = vmatmul.f32.gmra.mxu0 %v1743
        %v1765 = vpop.f32.mrf.mxu0
        %v1766 = vadd.f32 %v1735, %v1765
        %1767 = vmatmul.f32.gmra.mxu0 %v1746
        %v1768 = vpop.f32.mrf.mxu0
        %v1769 = vadd.f32 %v1740, %v1768
        %1770 = vdwg.mxu0
        %v1771 = vtanh.pop %v1766
        %v1772 = vxor.u32 %v1769, 2147483648
        %v1773 = vmul.f32 %v1772, 1.442695
        %v1774 = vpow.pop %v1773
        %v1775 = vadd.f32 %v1774, 1.0
        %v1776 = vrcp.pop %v1775
        %v1777 = vmul.f32 %v1775, %v1776
        %v1778 = vsub.f32 1.0, %v1777
        %v1779 = vmul.f32 %v1776, %v1778
        %v1780 = vadd.f32 %v1776, %v1779
        %vm1781 = vweird.f32 %v1775
        %vm1782 = vweird.f32 %v1776
        %vm1783 = vmor %vm1781, %vm1782
        %v1784 = vsel %vm1783, %v1776, %v1780
        %v1785 = vand.u32 2147483647, %v1775
        %vm1786 = vcmp.eq.f32.partialorder %v1785, 8.507059e+37
        %v1787 = vand.u32 %v1775, 2147483648
        %v1788 = vor.u32 1.1754944e-38, %v1787
        %v1789 = vsel %vm1786, %v1788, %v1784
        %v1790 = vmul.f32 1.0, %v1789
        %v1791 = vmul.f32 %v1771, %v1790
        %s1792 = scalar_lea.vmem %s5, 144
        %v1793 = vld [vmem:[%s1792] sm:$0xff]
        %v1794 = vld [vmem:[%s1792 + $0x8] sm:$0xff]
        %s1795 = scalar_lea.vmem %s6, 144
        %v1796 = vld [vmem:[%s1795] sm:$0xff]
        %v1797 = vld [vmem:[%s1795 + $0x8] sm:$0xff]
        %1799 = vset.pattern.permute.xlu0 0
        %1800 = vperm.xlu0 %1799, %v1796
        %v1801 = vpop.permute.xlu0 %1800
        %1804 = vset.pattern.permute.xlu0 0
        %1805 = vperm.xlu0 %1804, %v1797
        %v1806 = vpop.permute.xlu0 %1805
        %v1809 = vsel %vm549, %v1793, 0
        %v1812 = vsel %vm549, %v1794, 0
        %1814 = vmatpush.msra.mxu0 0.0
        %1815 = vmatpush.msra.mxu0 0.0
        %1816 = vmatpush.msra.mxu0 0.0
        %1817 = vmatpush.msra.mxu0 0.0
        %1818 = vmatpush.msra.mxu0 0.0
        %1819 = vmatpush.msra.mxu0 0.0
        %1820 = vmatpush.msra.mxu0 0.0
        %1821 = vmatpush.msra.mxu0 0.0
        %1822 = vmatpush.msra.mxu0 0.0
        %1823 = vmatpush.msra.mxu0 0.0
        %1824 = vmatpush.msra.mxu0 0.0
        %1825 = vmatpush.msra.mxu0 0.0
        %1826 = vmatpush.msra.mxu0 0.0
        %1827 = vmatpush.msra.mxu0 0.0
        %1828 = vmatpush.msra.mxu0 0.0
        %1829 = vmatpush.msra.mxu0 %v1791
        %1830 = vmatmul.f32.gmra.mxu0 %v1809
        %v1831 = vpop.f32.mrf.mxu0
        %v1832 = vadd.f32 %v1801, %v1831
        %1833 = vmatmul.f32.gmra.mxu0 %v1812
        %v1834 = vpop.f32.mrf.mxu0
        %v1835 = vadd.f32 %v1806, %v1834
        %1836 = vdwg.mxu0
        %v1837 = vadd.f32 %v1712, %v1832
        %v1838 = vadd.f32 %v1713, %v1835
        %v1839 = vadd.s32 %v433, 4
        %vm1840 = vcmp.lt.s32.totalorder %v1839, 16
        %1841 = vrot.lane.b32.xlu0 %v1837, 124
        %v1842 = vpop.permute.xlu0 %1841
        %v1843 = vsel %vm1840, 1, 0
        %vm1844 = vcmp.eq.s32.totalorder %v1843, 1
        %v1845 = vsel %vm1844, %v1842, 0.0
        %1846 = vst [vmem:[#allocation2] sm:$0xff] %v1837
        %1847 = vst [vmem:[#allocation2 + $0x8] sm:$0xff] %v1845
        %s1848 = scalar_lea.vmem %s3, 160
        %v1849 = vld [vmem:[%s1848] sm:$0xff]
        %v1850 = vld [vmem:[%s1848 + $0x8] sm:$0xff]
        %v1851 = vld [vmem:[#allocation2] sm:$0xff]
        %v1852 = vld [vmem:[#allocation2 + $0x8] sm:$0xff]
        %v1853 = vld [vmem:[#allocation2 + $0x10] sm:$0xff]
        %s1854 = scalar_lea.vmem %s4, 160
        %v1855 = vld [vmem:[%s1854] sm:$0xff]
        %v1856 = vld [vmem:[%s1854 + $0x8] sm:$0xff]
        %1858 = vset.pattern.permute.xlu0 0
        %1859 = vperm.xlu0 %1858, %v1855
        %v1860 = vpop.permute.xlu0 %1859
        %1863 = vset.pattern.permute.xlu0 0
        %1864 = vperm.xlu0 %1863, %v1856
        %v1865 = vpop.permute.xlu0 %1864
        %v1868 = vsel %vm484, %v1849, 0
        %v1871 = vsel %vm484, %v1850, 0
        %1873 = vmatpush.msra.mxu0 0.0
        %1874 = vmatpush.msra.mxu0 0.0
        %1875 = vmatpush.msra.mxu0 0.0
        %1876 = vmatpush.msra.mxu0 0.0
        %1877 = vmatpush.msra.mxu0 0.0
        %1878 = vmatpush.msra.mxu0 0.0
        %1879 = vmatpush.msra.mxu0 0.0
        %1880 = vmatpush.msra.mxu0 0.0
        %1881 = vmatpush.msra.mxu0 0.0
        %1882 = vmatpush.msra.mxu0 0.0
        %1883 = vmatpush.msra.mxu0 0.0
        %1884 = vmatpush.msra.mxu0 0.0
        %1885 = vmatpush.msra.mxu0 0.0
        %1886 = vmatpush.msra.mxu0 %v1853
        %1887 = vmatpush.msra.mxu0 %v1852
        %1888 = vmatpush.msra.mxu0 %v1851
        %1889 = vmatmul.f32.gmra.mxu0 %v1868
        %v1890 = vpop.f32.mrf.mxu0
        %v1891 = vadd.f32 %v1860, %v1890
        %1892 = vmatmul.f32.gmra.mxu0 %v1871
        %v1893 = vpop.f32.mrf.mxu0
        %v1894 = vadd.f32 %v1865, %v1893
        %1895 = vdwg.mxu0
        %v1896 = vtanh.pop %v1891
        %v1897 = vxor.u32 %v1894, 2147483648
        %v1898 = vmul.f32 %v1897, 1.442695
        %v1899 = vpow.pop %v1898
        %v1900 = vadd.f32 %v1899, 1.0
        %v1901 = vrcp.pop %v1900
        %v1902 = vmul.f32 %v1900, %v1901
        %v1903 = vsub.f32 1.0, %v1902
        %v1904 = vmul.f32 %v1901, %v1903
        %v1905 = vadd.f32 %v1901, %v1904
        %vm1906 = vweird.f32 %v1900
        %vm1907 = vweird.f32 %v1901
        %vm1908 = vmor %vm1906, %vm1907
        %v1909 = vsel %vm1908, %v1901, %v1905
        %v1910 = vand.u32 2147483647, %v1900
        %vm1911 = vcmp.eq.f32.partialorder %v1910, 8.507059e+37
        %v1912 = vand.u32 %v1900, 2147483648
        %v1913 = vor.u32 1.1754944e-38, %v1912
        %v1914 = vsel %vm1911, %v1913, %v1909
        %v1915 = vmul.f32 1.0, %v1914
        %v1916 = vmul.f32 %v1896, %v1915
        %s1917 = scalar_lea.vmem %s5, 160
        %v1918 = vld [vmem:[%s1917] sm:$0xff]
        %v1919 = vld [vmem:[%s1917 + $0x8] sm:$0xff]
        %s1920 = scalar_lea.vmem %s6, 160
        %v1921 = vld [vmem:[%s1920] sm:$0xff]
        %v1922 = vld [vmem:[%s1920 + $0x8] sm:$0xff]
        %1924 = vset.pattern.permute.xlu0 0
        %1925 = vperm.xlu0 %1924, %v1921
        %v1926 = vpop.permute.xlu0 %1925
        %1929 = vset.pattern.permute.xlu0 0
        %1930 = vperm.xlu0 %1929, %v1922
        %v1931 = vpop.permute.xlu0 %1930
        %v1934 = vsel %vm549, %v1918, 0
        %v1937 = vsel %vm549, %v1919, 0
        %1939 = vmatpush.msra.mxu0 0.0
        %1940 = vmatpush.msra.mxu0 0.0
        %1941 = vmatpush.msra.mxu0 0.0
        %1942 = vmatpush.msra.mxu0 0.0
        %1943 = vmatpush.msra.mxu0 0.0
        %1944 = vmatpush.msra.mxu0 0.0
        %1945 = vmatpush.msra.mxu0 0.0
        %1946 = vmatpush.msra.mxu0 0.0
        %1947 = vmatpush.msra.mxu0 0.0
        %1948 = vmatpush.msra.mxu0 0.0
        %1949 = vmatpush.msra.mxu0 0.0
        %1950 = vmatpush.msra.mxu0 0.0
        %1951 = vmatpush.msra.mxu0 0.0
        %1952 = vmatpush.msra.mxu0 0.0
        %1953 = vmatpush.msra.mxu0 0.0
        %1954 = vmatpush.msra.mxu0 %v1916
        %1955 = vmatmul.f32.gmra.mxu0 %v1934
        %v1956 = vpop.f32.mrf.mxu0
        %v1957 = vadd.f32 %v1926, %v1956
        %1958 = vmatmul.f32.gmra.mxu0 %v1937
        %v1959 = vpop.f32.mrf.mxu0
        %v1960 = vadd.f32 %v1931, %v1959
        %1961 = vdwg.mxu0
        %v1962 = vadd.f32 %v1837, %v1957
        %v1963 = vadd.f32 %v1838, %v1960
        %v1964 = vadd.s32 %v433, 8
        %vm1965 = vcmp.lt.s32.totalorder %v1964, 16
        %1966 = vrot.lane.b32.xlu0 %v1962, 120
        %v1967 = vpop.permute.xlu0 %1966
        %v1968 = vsel %vm1965, 1, 0
        %vm1969 = vcmp.eq.s32.totalorder %v1968, 1
        %v1970 = vsel %vm1969, %v1967, 0.0
        %1971 = vst [vmem:[#allocation2] sm:$0xff] %v1962
        %1972 = vst [vmem:[#allocation2 + $0x8] sm:$0xff] %v1970
        %s1973 = scalar_lea.vmem %s3, 176
        %v1974 = vld [vmem:[%s1973] sm:$0xff]
        %v1975 = vld [vmem:[%s1973 + $0x8] sm:$0xff]
        %v1976 = vld [vmem:[#allocation2] sm:$0xff]
        %v1977 = vld [vmem:[#allocation2 + $0x8] sm:$0xff]
        %v1978 = vld [vmem:[#allocation2 + $0x10] sm:$0xff]
        %s1979 = scalar_lea.vmem %s4, 176
        %v1980 = vld [vmem:[%s1979] sm:$0xff]
        %v1981 = vld [vmem:[%s1979 + $0x8] sm:$0xff]
        %1983 = vset.pattern.permute.xlu0 0
        %1984 = vperm.xlu0 %1983, %v1980
        %v1985 = vpop.permute.xlu0 %1984
        %1988 = vset.pattern.permute.xlu0 0
        %1989 = vperm.xlu0 %1988, %v1981
        %v1990 = vpop.permute.xlu0 %1989
        %v1993 = vsel %vm484, %v1974, 0
        %v1996 = vsel %vm484, %v1975, 0
        %1998 = vmatpush.msra.mxu0 0.0
        %1999 = vmatpush.msra.mxu0 0.0
        %2000 = vmatpush.msra.mxu0 0.0
        %2001 = vmatpush.msra.mxu0 0.0
        %2002 = vmatpush.msra.mxu0 0.0
        %2003 = vmatpush.msra.mxu0 0.0
        %2004 = vmatpush.msra.mxu0 0.0
        %2005 = vmatpush.msra.mxu0 0.0
        %2006 = vmatpush.msra.mxu0 0.0
        %2007 = vmatpush.msra.mxu0 0.0
        %2008 = vmatpush.msra.mxu0 0.0
        %2009 = vmatpush.msra.mxu0 0.0
        %2010 = vmatpush.msra.mxu0 0.0
        %2011 = vmatpush.msra.mxu0 %v1978
        %2012 = vmatpush.msra.mxu0 %v1977
        %2013 = vmatpush.msra.mxu0 %v1976
        %2014 = vmatmul.f32.gmra.mxu0 %v1993
        %v2015 = vpop.f32.mrf.mxu0
        %v2016 = vadd.f32 %v1985, %v2015
        %2017 = vmatmul.f32.gmra.mxu0 %v1996
        %v2018 = vpop.f32.mrf.mxu0
        %v2019 = vadd.f32 %v1990, %v2018
        %2020 = vdwg.mxu0
        %v2021 = vtanh.pop %v2016
        %v2022 = vxor.u32 %v2019, 2147483648
        %v2023 = vmul.f32 %v2022, 1.442695
        %v2024 = vpow.pop %v2023
        %v2025 = vadd.f32 %v2024, 1.0
        %v2026 = vrcp.pop %v2025
        %v2027 = vmul.f32 %v2025, %v2026
        %v2028 = vsub.f32 1.0, %v2027
        %v2029 = vmul.f32 %v2026, %v2028
        %v2030 = vadd.f32 %v2026, %v2029
        %vm2031 = vweird.f32 %v2025
        %vm2032 = vweird.f32 %v2026
        %vm2033 = vmor %vm2031, %vm2032
        %v2034 = vsel %vm2033, %v2026, %v2030
        %v2035 = vand.u32 2147483647, %v2025
        %vm2036 = vcmp.eq.f32.partialorder %v2035, 8.507059e+37
        %v2037 = vand.u32 %v2025, 2147483648
        %v2038 = vor.u32 1.1754944e-38, %v2037
        %v2039 = vsel %vm2036, %v2038, %v2034
        %v2040 = vmul.f32 1.0, %v2039
        %v2041 = vmul.f32 %v2021, %v2040
        %s2042 = scalar_lea.vmem %s5, 176
        %v2043 = vld [vmem:[%s2042] sm:$0xff]
        %v2044 = vld [vmem:[%s2042 + $0x8] sm:$0xff]
        %s2045 = scalar_lea.vmem %s6, 176
        %v2046 = vld [vmem:[%s2045] sm:$0xff]
        %v2047 = vld [vmem:[%s2045 + $0x8] sm:$0xff]
        %2049 = vset.pattern.permute.xlu0 0
        %2050 = vperm.xlu0 %2049, %v2046
        %v2051 = vpop.permute.xlu0 %2050
        %2053 = vset.pattern.permute.xlu0 0
        %2054 = vperm.xlu0 %2053, %v2047
        %v2055 = vpop.permute.xlu0 %2054
        %v2058 = vsel %vm549, %v2043, 0
        %v2061 = vsel %vm549, %v2044, 0
        %2063 = vmatpush.msra.mxu0 0.0
        %2064 = vmatpush.msra.mxu0 0.0
        %2065 = vmatpush.msra.mxu0 0.0
        %2066 = vmatpush.msra.mxu0 0.0
        %2067 = vmatpush.msra.mxu0 0.0
        %2068 = vmatpush.msra.mxu0 0.0
        %2069 = vmatpush.msra.mxu0 0.0
        %2070 = vmatpush.msra.mxu0 0.0
        %2071 = vmatpush.msra.mxu0 0.0
        %2072 = vmatpush.msra.mxu0 0.0
        %2073 = vmatpush.msra.mxu0 0.0
        %2074 = vmatpush.msra.mxu0 0.0
        %2075 = vmatpush.msra.mxu0 0.0
        %2076 = vmatpush.msra.mxu0 0.0
        %2077 = vmatpush.msra.mxu0 0.0
        %2078 = vmatpush.msra.mxu0 %v2041
        %2079 = vmatmul.f32.gmra.mxu0 %v2058
        %v2080 = vpop.f32.mrf.mxu0
        %2081 = vmatmul.f32.gmra.mxu0 %v2061
        %v2082 = vpop.f32.mrf.mxu0
        %v2083 = vadd.f32 %v2055, %v2082
        %2084 = vdwg.mxu0
        %v2085 = vadd.f32 %v1963, %v2083
        %vm2086 = vcmp.ge.f32.partialorder %v2085, 0.0
        %v2087 = vmul.f32 %v2085, 0.1
        %v2088 = vsel %vm2086, %v2085, %v2087
        %s2089 = scalar_lea.vmem %s9, 4
        %v2090 = vld [vmem:[%s2089] sm:$0x3]
        %s2091 = scalar_lea.vmem %s10, 4
        %v2092 = vld [vmem:[%s2091] sm:$0x3]
        %2094 = vset.pattern.permute.xlu0 0
        %2095 = vperm.xlu0 %2094, %v2092
        %v2096 = vpop.permute.xlu0 %2095
        %v2099 = vsel %vm549, %v2090, 0
        %2101 = vmatpush.msra.mxu0 0.0
        %2102 = vmatpush.msra.mxu0 0.0
        %2103 = vmatpush.msra.mxu0 0.0
        %2104 = vmatpush.msra.mxu0 0.0
        %2105 = vmatpush.msra.mxu0 0.0
        %2106 = vmatpush.msra.mxu0 0.0
        %2107 = vmatpush.msra.mxu0 0.0
        %2108 = vmatpush.msra.mxu0 0.0
        %2109 = vmatpush.msra.mxu0 0.0
        %2110 = vmatpush.msra.mxu0 0.0
        %2111 = vmatpush.msra.mxu0 0.0
        %2112 = vmatpush.msra.mxu0 0.0
        %2113 = vmatpush.msra.mxu0 0.0
        %2114 = vmatpush.msra.mxu0 0.0
        %2115 = vmatpush.msra.mxu0 0.0
        %2116 = vmatpush.msra.mxu0 %v2088
        %2117 = vmatmul.f32.gmra.mxu0 %v2099
        %v2118 = vpop.f32.mrf.mxu0
        %v2119 = vadd.f32 %v2096, %v2118
        %2120 = vdwg.mxu0
        %s2121 = scalar_lea.vmem %s7, 8
        %v2122 = vld [vmem:[%s2121] sm:$0xff]
        %s2123 = scalar_lea.vmem %s8, 8
        %v2124 = vld [vmem:[%s2123] sm:$0xff]
        %2126 = vset.pattern.permute.xlu0 0
        %2127 = vperm.xlu0 %2126, %v2124
        %v2128 = vpop.permute.xlu0 %2127
        %v2131 = vsel %vm549, %v2122, 0
        %2133 = vmatpush.msra.mxu0 0.0
        %2134 = vmatpush.msra.mxu0 0.0
        %2135 = vmatpush.msra.mxu0 0.0
        %2136 = vmatpush.msra.mxu0 0.0
        %2137 = vmatpush.msra.mxu0 0.0
        %2138 = vmatpush.msra.mxu0 0.0
        %2139 = vmatpush.msra.mxu0 0.0
        %2140 = vmatpush.msra.mxu0 0.0
        %2141 = vmatpush.msra.mxu0 0.0
        %2142 = vmatpush.msra.mxu0 0.0
        %2143 = vmatpush.msra.mxu0 0.0
        %2144 = vmatpush.msra.mxu0 0.0
        %2145 = vmatpush.msra.mxu0 0.0
        %2146 = vmatpush.msra.mxu0 0.0
        %2147 = vmatpush.msra.mxu0 0.0
        %2148 = vmatpush.msra.mxu0 %v2088
        %2149 = vmatmul.f32.gmra.mxu0 %v2131
        %v2150 = vpop.f32.mrf.mxu0
        %v2151 = vadd.f32 %v2128, %v2150
        %2152 = vdwg.mxu0
        %v2153 = vsel %vm434, %v2119, 0.0
        %v2154 = vadd.f32 %v1560, %v2153
        %v2155 = vmul.f32 %v2153, 1.442695
        %v2156 = vpow.pop %v2155
        %v2158 = vrot.slane %v2156, 1
        %v2160 = vmul.f32 %v1568, %v2158
        %v2161 = vadd.f32 %v2160, %v2119
        %v2162 = vsel %vm434, %v2161, 0.0
        %s2163 = scalar_lea.vmem %s2, 24
        %v2164 = vld [vmem:[%s2163] sm:$0xff]
        %2166 = vset.pattern.permute.xlu0 0
        %2167 = vperm.xlu0 %2166, %v2164
        %v2168 = vpop.permute.xlu0 %2167
        %v2170 = vperm.slane %v2162, 0
        %v2171 = vmul.f32 %v2168, %v2170
        %2172 = vset.pattern.permute.xlu0 1
        %2173 = vperm.xlu0 %2172, %v2164
        %v2174 = vpop.permute.xlu0 %2173
        %v2176 = vadd.f32 %v2171, %v2174
        %2177 = vrot.lane.b32.xlu0 %v2176, 127
        %v2178 = vpop.permute.xlu0 %2177
        %v2179 = vsel %vm1587, %v2178, %v2176
        %v2180 = vadd.f32 %v2179, %v2151
        %2181 = vrot.lane.b32.xlu0 %v2180, 127
        %v2182 = vpop.permute.xlu0 %2181
        %v2183 = vsel %vm1594, %v2182, 0.0
        %2184 = vst [vmem:[#allocation2] sm:$0xff] %v2180
        %2185 = vst [vmem:[#allocation2 + $0x8] sm:$0xff] %v2183
        %s2186 = scalar_lea.vmem %s3, 192
        %v2187 = vld [vmem:[%s2186] sm:$0xff]
        %v2188 = vld [vmem:[%s2186 + $0x8] sm:$0xff]
        %v2189 = vld [vmem:[#allocation2] sm:$0xff]
        %v2190 = vld [vmem:[#allocation2 + $0x8] sm:$0xff]
        %v2191 = vld [vmem:[#allocation2 + $0x10] sm:$0xff]
        %s2192 = scalar_lea.vmem %s4, 192
        %v2193 = vld [vmem:[%s2192] sm:$0xff]
        %v2194 = vld [vmem:[%s2192 + $0x8] sm:$0xff]
        %2196 = vset.pattern.permute.xlu0 0
        %2197 = vperm.xlu0 %2196, %v2193
        %v2198 = vpop.permute.xlu0 %2197
        %2201 = vset.pattern.permute.xlu0 0
        %2202 = vperm.xlu0 %2201, %v2194
        %v2203 = vpop.permute.xlu0 %2202
        %v2206 = vsel %vm484, %v2187, 0
        %v2209 = vsel %vm484, %v2188, 0
        %2211 = vmatpush.msra.mxu0 0.0
        %2212 = vmatpush.msra.mxu0 0.0
        %2213 = vmatpush.msra.mxu0 0.0
        %2214 = vmatpush.msra.mxu0 0.0
        %2215 = vmatpush.msra.mxu0 0.0
        %2216 = vmatpush.msra.mxu0 0.0
        %2217 = vmatpush.msra.mxu0 0.0
        %2218 = vmatpush.msra.mxu0 0.0
        %2219 = vmatpush.msra.mxu0 0.0
        %2220 = vmatpush.msra.mxu0 0.0
        %2221 = vmatpush.msra.mxu0 0.0
        %2222 = vmatpush.msra.mxu0 0.0
        %2223 = vmatpush.msra.mxu0 0.0
        %2224 = vmatpush.msra.mxu0 %v2191
        %2225 = vmatpush.msra.mxu0 %v2190
        %2226 = vmatpush.msra.mxu0 %v2189
        %2227 = vmatmul.f32.gmra.mxu0 %v2206
        %v2228 = vpop.f32.mrf.mxu0
        %v2229 = vadd.f32 %v2198, %v2228
        %2230 = vmatmul.f32.gmra.mxu0 %v2209
        %v2231 = vpop.f32.mrf.mxu0
        %v2232 = vadd.f32 %v2203, %v2231
        %2233 = vdwg.mxu0
        %v2234 = vtanh.pop %v2229
        %v2235 = vxor.u32 %v2232, 2147483648
        %v2236 = vmul.f32 %v2235, 1.442695
        %v2237 = vpow.pop %v2236
        %v2238 = vadd.f32 %v2237, 1.0
        %v2239 = vrcp.pop %v2238
        %v2240 = vmul.f32 %v2238, %v2239
        %v2241 = vsub.f32 1.0, %v2240
        %v2242 = vmul.f32 %v2239, %v2241
        %v2243 = vadd.f32 %v2239, %v2242
        %vm2244 = vweird.f32 %v2238
        %vm2245 = vweird.f32 %v2239
        %vm2246 = vmor %vm2244, %vm2245
        %v2247 = vsel %vm2246, %v2239, %v2243
        %v2248 = vand.u32 2147483647, %v2238
        %vm2249 = vcmp.eq.f32.partialorder %v2248, 8.507059e+37
        %v2250 = vand.u32 %v2238, 2147483648
        %v2251 = vor.u32 1.1754944e-38, %v2250
        %v2252 = vsel %vm2249, %v2251, %v2247
        %v2253 = vmul.f32 1.0, %v2252
        %v2254 = vmul.f32 %v2234, %v2253
        %s2255 = scalar_lea.vmem %s5, 192
        %v2256 = vld [vmem:[%s2255] sm:$0xff]
        %v2257 = vld [vmem:[%s2255 + $0x8] sm:$0xff]
        %s2258 = scalar_lea.vmem %s6, 192
        %v2259 = vld [vmem:[%s2258] sm:$0xff]
        %v2260 = vld [vmem:[%s2258 + $0x8] sm:$0xff]
        %2262 = vset.pattern.permute.xlu0 0
        %2263 = vperm.xlu0 %2262, %v2259
        %v2264 = vpop.permute.xlu0 %2263
        %2267 = vset.pattern.permute.xlu0 0
        %2268 = vperm.xlu0 %2267, %v2260
        %v2269 = vpop.permute.xlu0 %2268
        %v2272 = vsel %vm549, %v2256, 0
        %v2275 = vsel %vm549, %v2257, 0
        %2277 = vmatpush.msra.mxu0 0.0
        %2278 = vmatpush.msra.mxu0 0.0
        %2279 = vmatpush.msra.mxu0 0.0
        %2280 = vmatpush.msra.mxu0 0.0
        %2281 = vmatpush.msra.mxu0 0.0
        %2282 = vmatpush.msra.mxu0 0.0
        %2283 = vmatpush.msra.mxu0 0.0
        %2284 = vmatpush.msra.mxu0 0.0
        %2285 = vmatpush.msra.mxu0 0.0
        %2286 = vmatpush.msra.mxu0 0.0
        %2287 = vmatpush.msra.mxu0 0.0
        %2288 = vmatpush.msra.mxu0 0.0
        %2289 = vmatpush.msra.mxu0 0.0
        %2290 = vmatpush.msra.mxu0 0.0
        %2291 = vmatpush.msra.mxu0 0.0
        %2292 = vmatpush.msra.mxu0 %v2254
        %2293 = vmatmul.f32.gmra.mxu0 %v2272
        %v2294 = vpop.f32.mrf.mxu0
        %v2295 = vadd.f32 %v2264, %v2294
        %2296 = vmatmul.f32.gmra.mxu0 %v2275
        %v2297 = vpop.f32.mrf.mxu0
        %v2298 = vadd.f32 %v2269, %v2297
        %2299 = vdwg.mxu0
        %v2300 = vadd.f32 %v2180, %v2295
        %v2301 = vadd.f32 %v2298, 0.0
        %2302 = vrot.lane.b32.xlu0 %v2300, 126
        %v2303 = vpop.permute.xlu0 %2302
        %v2304 = vsel %vm1719, %v2303, 0.0
        %2305 = vst [vmem:[#allocation2] sm:$0xff] %v2300
        %2306 = vst [vmem:[#allocation2 + $0x8] sm:$0xff] %v2304
        %s2307 = scalar_lea.vmem %s3, 208
        %v2308 = vld [vmem:[%s2307] sm:$0xff]
        %v2309 = vld [vmem:[%s2307 + $0x8] sm:$0xff]
        %v2310 = vld [vmem:[#allocation2] sm:$0xff]
        %v2311 = vld [vmem:[#allocation2 + $0x8] sm:$0xff]
        %v2312 = vld [vmem:[#allocation2 + $0x10] sm:$0xff]
        %s2313 = scalar_lea.vmem %s4, 208
        %v2314 = vld [vmem:[%s2313] sm:$0xff]
        %v2315 = vld [vmem:[%s2313 + $0x8] sm:$0xff]
        %2317 = vset.pattern.permute.xlu0 0
        %2318 = vperm.xlu0 %2317, %v2314
        %v2319 = vpop.permute.xlu0 %2318
        %2322 = vset.pattern.permute.xlu0 0
        %2323 = vperm.xlu0 %2322, %v2315
        %v2324 = vpop.permute.xlu0 %2323
        %v2327 = vsel %vm484, %v2308, 0
        %v2330 = vsel %vm484, %v2309, 0
        %2332 = vmatpush.msra.mxu0 0.0
        %2333 = vmatpush.msra.mxu0 0.0
        %2334 = vmatpush.msra.mxu0 0.0
        %2335 = vmatpush.msra.mxu0 0.0
        %2336 = vmatpush.msra.mxu0 0.0
        %2337 = vmatpush.msra.mxu0 0.0
        %2338 = vmatpush.msra.mxu0 0.0
        %2339 = vmatpush.msra.mxu0 0.0
        %2340 = vmatpush.msra.mxu0 0.0
        %2341 = vmatpush.msra.mxu0 0.0
        %2342 = vmatpush.msra.mxu0 0.0
        %2343 = vmatpush.msra.mxu0 0.0
        %2344 = vmatpush.msra.mxu0 0.0
        %2345 = vmatpush.msra.mxu0 %v2312
        %2346 = vmatpush.msra.mxu0 %v2311
        %2347 = vmatpush.msra.mxu0 %v2310
        %2348 = vmatmul.f32.gmra.mxu0 %v2327
        %v2349 = vpop.f32.mrf.mxu0
        %v2350 = vadd.f32 %v2319, %v2349
        %2351 = vmatmul.f32.gmra.mxu0 %v2330
        %v2352 = vpop.f32.mrf.mxu0
        %v2353 = vadd.f32 %v2324, %v2352
        %2354 = vdwg.mxu0
        %v2355 = vtanh.pop %v2350
        %v2356 = vxor.u32 %v2353, 2147483648
        %v2357 = vmul.f32 %v2356, 1.442695
        %v2358 = vpow.pop %v2357
        %v2359 = vadd.f32 %v2358, 1.0
        %v2360 = vrcp.pop %v2359
        %v2361 = vmul.f32 %v2359, %v2360
        %v2362 = vsub.f32 1.0, %v2361
        %v2363 = vmul.f32 %v2360, %v2362
        %v2364 = vadd.f32 %v2360, %v2363
        %vm2365 = vweird.f32 %v2359
        %vm2366 = vweird.f32 %v2360
        %vm2367 = vmor %vm2365, %vm2366
        %v2368 = vsel %vm2367, %v2360, %v2364
        %v2369 = vand.u32 2147483647, %v2359
        %vm2370 = vcmp.eq.f32.partialorder %v2369, 8.507059e+37
        %v2371 = vand.u32 %v2359, 2147483648
        %v2372 = vor.u32 1.1754944e-38, %v2371
        %v2373 = vsel %vm2370, %v2372, %v2368
        %v2374 = vmul.f32 1.0, %v2373
        %v2375 = vmul.f32 %v2355, %v2374
        %s2376 = scalar_lea.vmem %s5, 208
        %v2377 = vld [vmem:[%s2376] sm:$0xff]
        %v2378 = vld [vmem:[%s2376 + $0x8] sm:$0xff]
        %s2379 = scalar_lea.vmem %s6, 208
        %v2380 = vld [vmem:[%s2379] sm:$0xff]
        %v2381 = vld [vmem:[%s2379 + $0x8] sm:$0xff]
        %2383 = vset.pattern.permute.xlu0 0
        %2384 = vperm.xlu0 %2383, %v2380
        %v2385 = vpop.permute.xlu0 %2384
        %2388 = vset.pattern.permute.xlu0 0
        %2389 = vperm.xlu0 %2388, %v2381
        %v2390 = vpop.permute.xlu0 %2389
        %v2393 = vsel %vm549, %v2377, 0
        %v2396 = vsel %vm549, %v2378, 0
        %2398 = vmatpush.msra.mxu0 0.0
        %2399 = vmatpush.msra.mxu0 0.0
        %2400 = vmatpush.msra.mxu0 0.0
        %2401 = vmatpush.msra.mxu0 0.0
        %2402 = vmatpush.msra.mxu0 0.0
        %2403 = vmatpush.msra.mxu0 0.0
        %2404 = vmatpush.msra.mxu0 0.0
        %2405 = vmatpush.msra.mxu0 0.0
        %2406 = vmatpush.msra.mxu0 0.0
        %2407 = vmatpush.msra.mxu0 0.0
        %2408 = vmatpush.msra.mxu0 0.0
        %2409 = vmatpush.msra.mxu0 0.0
        %2410 = vmatpush.msra.mxu0 0.0
        %2411 = vmatpush.msra.mxu0 0.0
        %2412 = vmatpush.msra.mxu0 0.0
        %2413 = vmatpush.msra.mxu0 %v2375
        %2414 = vmatmul.f32.gmra.mxu0 %v2393
        %v2415 = vpop.f32.mrf.mxu0
        %v2416 = vadd.f32 %v2385, %v2415
        %2417 = vmatmul.f32.gmra.mxu0 %v2396
        %v2418 = vpop.f32.mrf.mxu0
        %v2419 = vadd.f32 %v2390, %v2418
        %2420 = vdwg.mxu0
        %v2421 = vadd.f32 %v2300, %v2416
        %v2422 = vadd.f32 %v2301, %v2419
        %2423 = vrot.lane.b32.xlu0 %v2421, 124
        %v2424 = vpop.permute.xlu0 %2423
        %v2425 = vsel %vm1844, %v2424, 0.0
        %2426 = vst [vmem:[#allocation2] sm:$0xff] %v2421
        %2427 = vst [vmem:[#allocation2 + $0x8] sm:$0xff] %v2425
        %s2428 = scalar_lea.vmem %s3, 224
        %v2429 = vld [vmem:[%s2428] sm:$0xff]
        %v2430 = vld [vmem:[%s2428 + $0x8] sm:$0xff]
        %v2431 = vld [vmem:[#allocation2] sm:$0xff]
        %v2432 = vld [vmem:[#allocation2 + $0x8] sm:$0xff]
        %v2433 = vld [vmem:[#allocation2 + $0x10] sm:$0xff]
        %s2434 = scalar_lea.vmem %s4, 224
        %v2435 = vld [vmem:[%s2434] sm:$0xff]
        %v2436 = vld [vmem:[%s2434 + $0x8] sm:$0xff]
        %2438 = vset.pattern.permute.xlu0 0
        %2439 = vperm.xlu0 %2438, %v2435
        %v2440 = vpop.permute.xlu0 %2439
        %2443 = vset.pattern.permute.xlu0 0
        %2444 = vperm.xlu0 %2443, %v2436
        %v2445 = vpop.permute.xlu0 %2444
        %v2448 = vsel %vm484, %v2429, 0
        %v2451 = vsel %vm484, %v2430, 0
        %2453 = vmatpush.msra.mxu0 0.0
        %2454 = vmatpush.msra.mxu0 0.0
        %2455 = vmatpush.msra.mxu0 0.0
        %2456 = vmatpush.msra.mxu0 0.0
        %2457 = vmatpush.msra.mxu0 0.0
        %2458 = vmatpush.msra.mxu0 0.0
        %2459 = vmatpush.msra.mxu0 0.0
        %2460 = vmatpush.msra.mxu0 0.0
        %2461 = vmatpush.msra.mxu0 0.0
        %2462 = vmatpush.msra.mxu0 0.0
        %2463 = vmatpush.msra.mxu0 0.0
        %2464 = vmatpush.msra.mxu0 0.0
        %2465 = vmatpush.msra.mxu0 0.0
        %2466 = vmatpush.msra.mxu0 %v2433
        %2467 = vmatpush.msra.mxu0 %v2432
        %2468 = vmatpush.msra.mxu0 %v2431
        %2469 = vmatmul.f32.gmra.mxu0 %v2448
        %v2470 = vpop.f32.mrf.mxu0
        %v2471 = vadd.f32 %v2440, %v2470
        %2472 = vmatmul.f32.gmra.mxu0 %v2451
        %v2473 = vpop.f32.mrf.mxu0
        %v2474 = vadd.f32 %v2445, %v2473
        %2475 = vdwg.mxu0
        %v2476 = vtanh.pop %v2471
        %v2477 = vxor.u32 %v2474, 2147483648
        %v2478 = vmul.f32 %v2477, 1.442695
        %v2479 = vpow.pop %v2478
        %v2480 = vadd.f32 %v2479, 1.0
        %v2481 = vrcp.pop %v2480
        %v2482 = vmul.f32 %v2480, %v2481
        %v2483 = vsub.f32 1.0, %v2482
        %v2484 = vmul.f32 %v2481, %v2483
        %v2485 = vadd.f32 %v2481, %v2484
        %vm2486 = vweird.f32 %v2480
        %vm2487 = vweird.f32 %v2481
        %vm2488 = vmor %vm2486, %vm2487
        %v2489 = vsel %vm2488, %v2481, %v2485
        %v2490 = vand.u32 2147483647, %v2480
        %vm2491 = vcmp.eq.f32.partialorder %v2490, 8.507059e+37
        %v2492 = vand.u32 %v2480, 2147483648
        %v2493 = vor.u32 1.1754944e-38, %v2492
        %v2494 = vsel %vm2491, %v2493, %v2489
        %v2495 = vmul.f32 1.0, %v2494
        %v2496 = vmul.f32 %v2476, %v2495
        %s2497 = scalar_lea.vmem %s5, 224
        %v2498 = vld [vmem:[%s2497] sm:$0xff]
        %v2499 = vld [vmem:[%s2497 + $0x8] sm:$0xff]
        %s2500 = scalar_lea.vmem %s6, 224
        %v2501 = vld [vmem:[%s2500] sm:$0xff]
        %v2502 = vld [vmem:[%s2500 + $0x8] sm:$0xff]
        %2504 = vset.pattern.permute.xlu0 0
        %2505 = vperm.xlu0 %2504, %v2501
        %v2506 = vpop.permute.xlu0 %2505
        %2509 = vset.pattern.permute.xlu0 0
        %2510 = vperm.xlu0 %2509, %v2502
        %v2511 = vpop.permute.xlu0 %2510
        %v2514 = vsel %vm549, %v2498, 0
        %v2517 = vsel %vm549, %v2499, 0
        %2519 = vmatpush.msra.mxu0 0.0
        %2520 = vmatpush.msra.mxu0 0.0
        %2521 = vmatpush.msra.mxu0 0.0
        %2522 = vmatpush.msra.mxu0 0.0
        %2523 = vmatpush.msra.mxu0 0.0
        %2524 = vmatpush.msra.mxu0 0.0
        %2525 = vmatpush.msra.mxu0 0.0
        %2526 = vmatpush.msra.mxu0 0.0
        %2527 = vmatpush.msra.mxu0 0.0
        %2528 = vmatpush.msra.mxu0 0.0
        %2529 = vmatpush.msra.mxu0 0.0
        %2530 = vmatpush.msra.mxu0 0.0
        %2531 = vmatpush.msra.mxu0 0.0
        %2532 = vmatpush.msra.mxu0 0.0
        %2533 = vmatpush.msra.mxu0 0.0
        %2534 = vmatpush.msra.mxu0 %v2496
        %2535 = vmatmul.f32.gmra.mxu0 %v2514
        %v2536 = vpop.f32.mrf.mxu0
        %v2537 = vadd.f32 %v2506, %v2536
        %2538 = vmatmul.f32.gmra.mxu0 %v2517
        %v2539 = vpop.f32.mrf.mxu0
        %v2540 = vadd.f32 %v2511, %v2539
        %2541 = vdwg.mxu0
        %v2542 = vadd.f32 %v2421, %v2537
        %v2543 = vadd.f32 %v2422, %v2540
        %2544 = vrot.lane.b32.xlu0 %v2542, 120
        %v2545 = vpop.permute.xlu0 %2544
        %v2546 = vsel %vm1969, %v2545, 0.0
        %2547 = vst [vmem:[#allocation2] sm:$0xff] %v2542
        %2548 = vst [vmem:[#allocation2 + $0x8] sm:$0xff] %v2546
        %s2549 = scalar_lea.vmem %s3, 240
        %v2550 = vld [vmem:[%s2549] sm:$0xff]
        %v2551 = vld [vmem:[%s2549 + $0x8] sm:$0xff]
        %v2552 = vld [vmem:[#allocation2] sm:$0xff]
        %v2553 = vld [vmem:[#allocation2 + $0x8] sm:$0xff]
        %v2554 = vld [vmem:[#allocation2 + $0x10] sm:$0xff]
        %s2555 = scalar_lea.vmem %s4, 240
        %v2556 = vld [vmem:[%s2555] sm:$0xff]
        %v2557 = vld [vmem:[%s2555 + $0x8] sm:$0xff]
        %2559 = vset.pattern.permute.xlu0 0
        %2560 = vperm.xlu0 %2559, %v2556
        %v2561 = vpop.permute.xlu0 %2560
        %2564 = vset.pattern.permute.xlu0 0
        %2565 = vperm.xlu0 %2564, %v2557
        %v2566 = vpop.permute.xlu0 %2565
        %v2569 = vsel %vm484, %v2550, 0
        %v2572 = vsel %vm484, %v2551, 0
        %2574 = vmatpush.msra.mxu0 0.0
        %2575 = vmatpush.msra.mxu0 0.0
        %2576 = vmatpush.msra.mxu0 0.0
        %2577 = vmatpush.msra.mxu0 0.0
        %2578 = vmatpush.msra.mxu0 0.0
        %2579 = vmatpush.msra.mxu0 0.0
        %2580 = vmatpush.msra.mxu0 0.0
        %2581 = vmatpush.msra.mxu0 0.0
        %2582 = vmatpush.msra.mxu0 0.0
        %2583 = vmatpush.msra.mxu0 0.0
        %2584 = vmatpush.msra.mxu0 0.0
        %2585 = vmatpush.msra.mxu0 0.0
        %2586 = vmatpush.msra.mxu0 0.0
        %2587 = vmatpush.msra.mxu0 %v2554
        %2588 = vmatpush.msra.mxu0 %v2553
        %2589 = vmatpush.msra.mxu0 %v2552
        %2590 = vmatmul.f32.gmra.mxu0 %v2569
        %v2591 = vpop.f32.mrf.mxu0
        %v2592 = vadd.f32 %v2561, %v2591
        %2593 = vmatmul.f32.gmra.mxu0 %v2572
        %v2594 = vpop.f32.mrf.mxu0
        %v2595 = vadd.f32 %v2566, %v2594
        %2596 = vdwg.mxu0
        %v2597 = vtanh.pop %v2592
        %v2598 = vxor.u32 %v2595, 2147483648
        %v2599 = vmul.f32 %v2598, 1.442695
        %v2600 = vpow.pop %v2599
        %v2601 = vadd.f32 %v2600, 1.0
        %v2602 = vrcp.pop %v2601
        %v2603 = vmul.f32 %v2601, %v2602
        %v2604 = vsub.f32 1.0, %v2603
        %v2605 = vmul.f32 %v2602, %v2604
        %v2606 = vadd.f32 %v2602, %v2605
        %vm2607 = vweird.f32 %v2601
        %vm2608 = vweird.f32 %v2602
        %vm2609 = vmor %vm2607, %vm2608
        %v2610 = vsel %vm2609, %v2602, %v2606
        %v2611 = vand.u32 2147483647, %v2601
        %vm2612 = vcmp.eq.f32.partialorder %v2611, 8.507059e+37
        %v2613 = vand.u32 %v2601, 2147483648
        %v2614 = vor.u32 1.1754944e-38, %v2613
        %v2615 = vsel %vm2612, %v2614, %v2610
        %v2616 = vmul.f32 1.0, %v2615
        %v2617 = vmul.f32 %v2597, %v2616
        %s2618 = scalar_lea.vmem %s5, 240
        %v2619 = vld [vmem:[%s2618] sm:$0xff]
        %v2620 = vld [vmem:[%s2618 + $0x8] sm:$0xff]
        %s2621 = scalar_lea.vmem %s6, 240
        %v2622 = vld [vmem:[%s2621] sm:$0xff]
        %v2623 = vld [vmem:[%s2621 + $0x8] sm:$0xff]
        %2625 = vset.pattern.permute.xlu0 0
        %2626 = vperm.xlu0 %2625, %v2622
        %v2627 = vpop.permute.xlu0 %2626
        %2629 = vset.pattern.permute.xlu0 0
        %2630 = vperm.xlu0 %2629, %v2623
        %v2631 = vpop.permute.xlu0 %2630
        %v2634 = vsel %vm549, %v2619, 0
        %v2637 = vsel %vm549, %v2620, 0
        %2639 = vmatpush.msra.mxu0 0.0
        %2640 = vmatpush.msra.mxu0 0.0
        %2641 = vmatpush.msra.mxu0 0.0
        %2642 = vmatpush.msra.mxu0 0.0
        %2643 = vmatpush.msra.mxu0 0.0
        %2644 = vmatpush.msra.mxu0 0.0
        %2645 = vmatpush.msra.mxu0 0.0
        %2646 = vmatpush.msra.mxu0 0.0
        %2647 = vmatpush.msra.mxu0 0.0
        %2648 = vmatpush.msra.mxu0 0.0
        %2649 = vmatpush.msra.mxu0 0.0
        %2650 = vmatpush.msra.mxu0 0.0
        %2651 = vmatpush.msra.mxu0 0.0
        %2652 = vmatpush.msra.mxu0 0.0
        %2653 = vmatpush.msra.mxu0 0.0
        %2654 = vmatpush.msra.mxu0 %v2617
        %2655 = vmatmul.f32.gmra.mxu0 %v2634
        %v2656 = vpop.f32.mrf.mxu0
        %2657 = vmatmul.f32.gmra.mxu0 %v2637
        %v2658 = vpop.f32.mrf.mxu0
        %v2659 = vadd.f32 %v2631, %v2658
        %2660 = vdwg.mxu0
        %v2661 = vadd.f32 %v2543, %v2659
        %vm2662 = vcmp.ge.f32.partialorder %v2661, 0.0
        %v2663 = vmul.f32 %v2661, 0.1
        %v2664 = vsel %vm2662, %v2661, %v2663
        %s2665 = scalar_lea.vmem %s9, 6
        %v2666 = vld [vmem:[%s2665] sm:$0x3]
        %s2667 = scalar_lea.vmem %s10, 6
        %v2668 = vld [vmem:[%s2667] sm:$0x3]
        %2670 = vset.pattern.permute.xlu0 0
        %2671 = vperm.xlu0 %2670, %v2668
        %v2672 = vpop.permute.xlu0 %2671
        %v2675 = vsel %vm549, %v2666, 0
        %2677 = vmatpush.msra.mxu0 0.0
        %2678 = vmatpush.msra.mxu0 0.0
        %2679 = vmatpush.msra.mxu0 0.0
        %2680 = vmatpush.msra.mxu0 0.0
        %2681 = vmatpush.msra.mxu0 0.0
        %2682 = vmatpush.msra.mxu0 0.0
        %2683 = vmatpush.msra.mxu0 0.0
        %2684 = vmatpush.msra.mxu0 0.0
        %2685 = vmatpush.msra.mxu0 0.0
        %2686 = vmatpush.msra.mxu0 0.0
        %2687 = vmatpush.msra.mxu0 0.0
        %2688 = vmatpush.msra.mxu0 0.0
        %2689 = vmatpush.msra.mxu0 0.0
        %2690 = vmatpush.msra.mxu0 0.0
        %2691 = vmatpush.msra.mxu0 0.0
        %2692 = vmatpush.msra.mxu0 %v2664
        %2693 = vmatmul.f32.gmra.mxu0 %v2675
        %v2694 = vpop.f32.mrf.mxu0
        %v2695 = vadd.f32 %v2672, %v2694
        %2696 = vdwg.mxu0
        %v2697 = vsel %vm434, %v2695, 0.0
        %v2698 = vadd.f32 %v2154, %v2697
        %v2699 = vmul.f32 %v2697, 1.442695
        %v2700 = vpow.pop %v2699
        %v2702 = vrot.slane %v2700, 1
        %v2704 = vmul.f32 %v2162, %v2702
        %v2705 = vadd.f32 %v2704, %v2695
        %v2706 = vsel %vm434, %v2705, 0.0
        %2707 = vst [vmem:[%s418 - $0x1] sm:$0x2] %v2698
        %2708 = vst [vmem:[%s424] sm:$0x1] %v2706
        %s2709 = sand.u32 %s279, 1
        %s2710 = scalar_lea.sflag [#allocation4], %s2709
        %s2711 = sand.u32 %s279, 1
        %s2712 = scalar_lea.vmem [#allocation3], %s2711
        %s2713 = sand.u32 %s305, 1
        %s2714 = scalar_lea.sflag [#allocation6], %s2713
        %s2715 = sand.u32 %s305, 1
        %s2716 = scalar_lea.vmem [#allocation5], %s2715
        // Predicated region
        $region65: #{tpu_custom_call.1} parent=63 // pred_check
          %p2717 = pneg %p289
        $region66: #{tpu_custom_call.1} parent=63 // pred_check_branch
          %2719 = sbr.rel (%p2717) target = $region68
        $region67: #{tpu_custom_call.1} parent=63 // pred_region
          %2721 = vsyncadd %s2710, 0
          %s2722 = scalar_lea.hbm %s11, %s30
          %s2724 = sshll.u32 %s2712, 4
          %s2725 = int_to_ptr.vmem [resolvable:$true] %s2724
          %s2726 = sshll.u32 %s2722, 4
          %s2727 = int_to_ptr.hbm [resolvable:$true] %s2726
          %2729 = dma.vmem_to_hbm [thread:$0]  %s2725, 16, %s2727, %s2710
        $region68: #{tpu_custom_call.1} parent=63 // pred_fallthru
          _
        // Predicated region
        $region69: #{tpu_custom_call.1} parent=63 // pred_check
          %p2730 = pneg %p315
        $region70: #{tpu_custom_call.1} parent=63 // pred_check_branch
          %2732 = sbr.rel (%p2730) target = $region72
        $region71: #{tpu_custom_call.1} parent=63 // pred_region
          %2734 = vsyncadd %s2714, 0
          %s2735 = scalar_lea.hbm %s12, %s30
          %s2737 = sshll.u32 %s2716, 4
          %s2738 = int_to_ptr.vmem [resolvable:$true] %s2737
          %s2739 = sshll.u32 %s2735, 4
          %s2740 = int_to_ptr.hbm [resolvable:$true] %s2739
          %2742 = dma.vmem_to_hbm [thread:$0]  %s2738, 16, %s2740, %s2714
        $region72: #{tpu_custom_call.1} parent=63 // pred_fallthru
          _
      $region64: #{tpu_custom_call.1} parent=5 // pred_fallthru
        _
      %p2743 = scmp.le.s32.totalorder 2, %s25
      // Predicated region
      $region73: #{tpu_custom_call.1} parent=5 // pred_check
        %p2744 = pneg %p2743
      $region74: #{tpu_custom_call.1} parent=5 // pred_check_branch
        %2746 = sbr.rel (%p2744) target = $region76
      $region75: #{tpu_custom_call.1} parent=5 // pred_region
        %s2747 = ssub.s32 %s25, 2
        // Predicated region
        $region77: #{tpu_custom_call.1} parent=75 // pred_check
          %p2748 = pneg %p295
        $region78: #{tpu_custom_call.1} parent=75 // pred_check_branch
          %2750 = sbr.rel (%p2748) target = $region80
        $region79: #{tpu_custom_call.1} parent=75 // pred_region
          %s2751 = sand.u32 %s280, 1
          %s2752 = scalar_lea.sflag [#allocation4], %s2751
          %s2753 = sand.u32 %s280, 1
          %s2754 = scalar_lea.vmem [#allocation3], %s2753
          %2756 = dma.done %s2752, 16
        $region80: #{tpu_custom_call.1} parent=75 // pred_fallthru
          _
        // Predicated region
        $region81: #{tpu_custom_call.1} parent=75 // pred_check
          %p2757 = pneg %p321
        $region82: #{tpu_custom_call.1} parent=75 // pred_check_branch
          %2759 = sbr.rel (%p2757) target = $region84
        $region83: #{tpu_custom_call.1} parent=75 // pred_region
          %s2760 = sand.u32 %s306, 1
          %s2761 = scalar_lea.sflag [#allocation6], %s2760
          %s2762 = sand.u32 %s306, 1
          %s2763 = scalar_lea.vmem [#allocation5], %s2762
          %2765 = dma.done %s2761, 16
        $region84: #{tpu_custom_call.1} parent=75 // pred_fallthru
          _
      $region76: #{tpu_custom_call.1} parent=5 // pred_fallthru
        _
    $region6: #{tpu_custom_call.1} parent=1 // loop_footer
      %s29 = sadd.s32 1, %s25
    $region7: #{tpu_custom_call.1} parent=1 // loop_footer_branch
      %24 = sbr.rel target = $region3
    $region8: #{tpu_custom_call.1} parent=1 // loop_exit
      _
    %2766 = vsyncpa [#allocation4], 1
    %s2767 = scalar_lea.sflag [#allocation4], 1
    %2768 = vsyncpa %s2767, 1
    %2769 = vsyncpa [#allocation6], 1
    %s2770 = scalar_lea.sflag [#allocation6], 1
    %2771 = vsyncpa %s2770, 1

</llo_original>
